<compile_context>
chip_gen: v7x
topology: tpu7x:2x2x1
jax: 0.10.0
libtpu: 0.0.40
codegen_flags: <defaults>
</compile_context>

<pallas_src>
import functools
import math

import jax
import jax.numpy as jnp
from jax.experimental import pallas as pl
from jax.experimental.pallas import tpu as pltpu


# ------------------------------ tiling helpers ------------------------------

def _pick_tile(total, preferred, align):
    """Largest tile <= preferred that divides `total` and is a multiple of
    `align`; falls back to the full dimension (always a legal block size)."""
    if total <= preferred:
        return total
    t = (preferred // align) * align
    while t >= align:
        if total % t == 0:
            return t
        t -= align
    return total


def _cparams(sem):
    return pltpu.CompilerParams(
        dimension_semantics=sem,
        vmem_limit_bytes=64 * 1024 * 1024,   # explicit budget (fits v7x 64 MiB)
    )


# --------------------------- tiled matmul (wo etc.) --------------------------

def _matmul_kernel(x_ref, w_ref, o_ref, acc_ref):
    @pl.when(pl.program_id(2) == 0)
    def _():
        acc_ref[...] = jnp.zeros(acc_ref.shape, acc_ref.dtype)

    acc_ref[...] += jnp.dot(x_ref[...].astype(jnp.bfloat16), w_ref[...],
                            preferred_element_type=jnp.float32)

    @pl.when(pl.program_id(2) == pl.num_programs(2) - 1)
    def _():
        o_ref[...] = acc_ref[...]


def pallas_matmul(x, w):
    """y = x @ w.  x: (M, K) f32, w: (K, N) bf16, output f32."""
    M, K = x.shape
    K2, N = w.shape
    assert K == K2
    tm = _pick_tile(M, 256, 8)
    tn = _pick_tile(N, 256, 128)
    tk = _pick_tile(K, 512, 128)
    cost = pl.CostEstimate(
        flops=2 * M * K * N, transcendentals=0,
        bytes_accessed=M * K * x.dtype.itemsize + K * N * w.dtype.itemsize + M * N * 4)
    return pl.pallas_call(
        _matmul_kernel,
        out_shape=jax.ShapeDtypeStruct((M, N), jnp.float32),
        grid=(M // tm, N // tn, K // tk),
        in_specs=[pl.BlockSpec((tm, tk), lambda i, j, k: (i, k)),
                  pl.BlockSpec((tk, tn), lambda i, j, k: (k, j))],
        out_specs=pl.BlockSpec((tm, tn), lambda i, j, k: (i, j)),
        scratch_shapes=[pltpu.VMEM((tm, tn), jnp.float32)],
        compiler_params=_cparams(("parallel", "parallel", "arbitrary")),
        cost_estimate=cost,
    )(x, w)


# ---------------------- fused RMSNorm + projection matmul --------------------

def _rms_matmul_kernel(x_ref, nw_ref, w_ref, o_ref, *, eps):
    x = x_ref[...]                                        # (tm, D) f32
    ms = jnp.mean(x * x, axis=-1, keepdims=True)          # RMS stats in f32
    xn = (x * jax.lax.rsqrt(ms + eps)) * nw_ref[...]
    o_ref[...] = jnp.dot(xn.astype(jnp.bfloat16), w_ref[...],
                         preferred_element_type=jnp.float32)


def pallas_rmsnorm_matmul(x, norm_w, w, eps):
    """y = (rmsnorm(x) * norm_w) @ w, norm fused onto the resident VMEM tile."""
    M, D = x.shape
    D2, N = w.shape
    assert D == D2
    tm = _pick_tile(M, 256, 8)
    tn = _pick_tile(N, 256, 128)
    cost = pl.CostEstimate(
        flops=2 * M * D * N, transcendentals=M,
        bytes_accessed=M * D * 4 + D * N * w.dtype.itemsize + M * N * 4)
    return pl.pallas_call(
        functools.partial(_rms_matmul_kernel, eps=eps),
        out_shape=jax.ShapeDtypeStruct((M, N), jnp.float32),
        grid=(M // tm, N // tn),
        in_specs=[pl.BlockSpec((tm, D), lambda i, j: (i, 0)),
                  pl.BlockSpec((1, D), lambda i, j: (0, 0)),
                  pl.BlockSpec((D, tn), lambda i, j: (0, j))],
        out_specs=pl.BlockSpec((tm, tn), lambda i, j: (i, j)),
        compiler_params=_cparams(("parallel", "parallel")),
        cost_estimate=cost,
    )(x, norm_w.reshape(1, D), w)


# -------------- fully fused FFN: RMSNorm + w1/w3 + SwiGLU + w2 ---------------

def _ffn_kernel(x_ref, nw_ref, w1_ref, w3_ref, w2_ref, o_ref, xn_sc, acc_sc,
                *, eps):
    k = pl.program_id(1)

    @pl.when(k == 0)
    def _():
        x = x_ref[...]
        ms = jnp.mean(x * x, axis=-1, keepdims=True)
        xn = (x * jax.lax.rsqrt(ms + eps)) * nw_ref[...]
        xn_sc[...] = xn.astype(jnp.bfloat16)              # reused across k
        acc_sc[...] = jnp.zeros(acc_sc.shape, acc_sc.dtype)

    xn = xn_sc[...]
    a = jnp.dot(xn, w1_ref[...], preferred_element_type=jnp.float32)
    b = jnp.dot(xn, w3_ref[...], preferred_element_type=jnp.float32)
    g = (a * jax.nn.sigmoid(a)) * b                       # SwiGLU in f32
    acc_sc[...] += jnp.dot(g.astype(jnp.bfloat16), w2_ref[...],
                           preferred_element_type=jnp.float32)

    @pl.when(k == pl.num_programs(1) - 1)
    def _():
        o_ref[...] = acc_sc[...]


def pallas_ffn(x, norm_w, w1, w3, w2, eps):
    """Whole SwiGLU MLP (with its pre-norm) in a single pallas_call."""
    M, D = x.shape
    hidden = w1.shape[1]
    tm = _pick_tile(M, 256, 8)
    tk = _pick_tile(hidden, 512, 128)
    cost = pl.CostEstimate(
        flops=6 * M * D * hidden, transcendentals=M * hidden,
        bytes_accessed=M * D * 4 + 3 * D * hidden * 2 + M * D * 4)
    return pl.pallas_call(
        functools.partial(_ffn_kernel, eps=eps),
        out_shape=jax.ShapeDtypeStruct((M, D), jnp.float32),
        grid=(M // tm, hidden // tk),
        in_specs=[pl.BlockSpec((tm, D), lambda i, k: (i, 0)),
                  pl.BlockSpec((1, D), lambda i, k: (0, 0)),
                  pl.BlockSpec((D, tk), lambda i, k: (0, k)),
                  pl.BlockSpec((D, tk), lambda i, k: (0, k)),
                  pl.BlockSpec((tk, D), lambda i, k: (k, 0))],
        out_specs=pl.BlockSpec((tm, D), lambda i, k: (i, 0)),
        scratch_shapes=[pltpu.VMEM((tm, D), jnp.bfloat16),
                        pltpu.VMEM((tm, D), jnp.float32)],
        compiler_params=_cparams(("parallel", "arbitrary")),
        cost_estimate=cost,
    )(x, norm_w.reshape(1, D), w1, w3, w2)


# ------------------ flash-style causal attention (online softmax) ------------

def _flash_attn_kernel(q_ref, k_ref, v_ref, o_ref, m_sc, l_sc, acc_sc,
                       *, n_heads, head_dim, scale, tq, tkv):
    qi = pl.program_id(1)
    kvi = pl.program_id(2)

    @pl.when(kvi == 0)
    def _():
        m_sc[...] = jnp.full(m_sc.shape, -1e30, m_sc.dtype)
        l_sc[...] = jnp.zeros(l_sc.shape, l_sc.dtype)
        acc_sc[...] = jnp.zeros(acc_sc.shape, acc_sc.dtype)

    q_start = qi * tq
    kv_start = kvi * tkv

    # Skip KV blocks entirely above the causal diagonal.
    @pl.when(kv_start <= q_start + tq - 1)
    def _():
        q = q_ref[0] * scale                       # (tq, H*hd) f32, pre-scaled
        k = k_ref[0]
        v = v_ref[0]
        row = q_start + jax.lax.broadcasted_iota(jnp.int32, (tq, tkv), 0)
        col = kv_start + jax.lax.broadcasted_iota(jnp.int32, (tq, tkv), 1)
        causal = col <= row
        neg = jnp.float32(-1e30)
        for h in range(n_heads):                   # static unroll over heads
            sl = slice(h * head_dim, (h + 1) * head_dim)
            s = jnp.dot(q[:, sl].astype(jnp.bfloat16),
                        k[:, sl].astype(jnp.bfloat16).T,
                        preferred_element_type=jnp.float32)     # (tq, tkv)
            s = jnp.where(causal, s, neg)
            m_prev = m_sc[h]                                     # (tq, 1)
            m_new = jnp.maximum(m_prev, jnp.max(s, axis=-1, keepdims=True))
            alpha = jnp.exp(m_prev - m_new)
            p = jnp.exp(s - m_new)                               # f32
            l_sc[h] = alpha * l_sc[h] + jnp.sum(p, axis=-1, keepdims=True)
            acc_sc[:, sl] = alpha * acc_sc[:, sl] + jnp.dot(
                p.astype(jnp.bfloat16), v[:, sl].astype(jnp.bfloat16),
                preferred_element_type=jnp.float32)
            m_sc[h] = m_new

    @pl.when(kvi == pl.num_programs(2) - 1)
    def _():
        for h in range(n_heads):
            sl = slice(h * head_dim, (h + 1) * head_dim)
            inv = pl.reciprocal(l_sc[h], approx=True)            # EUP slot
            o_ref[0, :, sl] = (acc_sc[:, sl] * inv).astype(o_ref.dtype)


def pallas_attention(q, k, v, n_heads):
    """Causal attention; q, k, v: (B, S, D) with heads folded in the last dim.
    Output is a lane-dense (B, S, D) f32 slab (feeds wo directly, no transposes)."""
    B, S, D = q.shape
    head_dim = D // n_heads
    scale = 1.0 / math.sqrt(head_dim)
    tq = _pick_tile(S, 128, 8)
    tkv = _pick_tile(S, 128, 8)
    spec_q = pl.BlockSpec((1, tq, D), lambda b, i, j: (b, i, 0))
    spec_kv = pl.BlockSpec((1, tkv, D), lambda b, i, j: (b, j, 0))
    cost = pl.CostEstimate(
        flops=4 * B * n_heads * S * S * head_dim,
        transcendentals=B * n_heads * S * S,
        bytes_accessed=4 * B * S * D * 4)
    kern = functools.partial(_flash_attn_kernel, n_heads=n_heads,
                             head_dim=head_dim, scale=scale, tq=tq, tkv=tkv)
    return pl.pallas_call(
        kern,
        out_shape=jax.ShapeDtypeStruct((B, S, D), jnp.float32),
        grid=(B, S // tq, S // tkv),
        in_specs=[spec_q, spec_kv, spec_kv],
        out_specs=spec_q,
        scratch_shapes=[pltpu.VMEM((n_heads, tq, 1), jnp.float32),
                        pltpu.VMEM((n_heads, tq, 1), jnp.float32),
                        pltpu.VMEM((tq, D), jnp.float32)],
        compiler_params=_cparams(("parallel", "parallel", "arbitrary")),
        cost_estimate=cost,
    )(q, k, v)


# ------------------------------- model glue ---------------------------------

CFG = dict(
    vocab_size=256,
    dim=64,
    n_layers=2,
    n_heads=4,          # n_kv_heads == n_heads (no GQA)
    max_seq_len=16,
    norm_eps=1e-5,
    rope_theta=500000.0,
    multiple_of=32,
)


def ffn_hidden_dim(dim, multiple_of):
    hidden = 4 * dim
    hidden = int(2 * hidden / 3)
    return multiple_of * ((hidden + multiple_of - 1) // multiple_of)


def precompute_rope(head_dim, max_len, theta):
    freqs = 1.0 / (theta ** (jnp.arange(0, head_dim, 2, dtype=jnp.float32) / head_dim))
    t = jnp.arange(max_len, dtype=jnp.float32)
    angles = jnp.outer(t, freqs)                       # (max_len, head_dim//2)
    return jnp.cos(angles), jnp.sin(angles)


def apply_rope(x, cos, sin):
    # x: (B, S, H, hd); pairs (x[..,2i], x[..,2i+1]) rotated by e^{i*angle},
    # same semantics as the torch view_as_complex path.
    # TODO(synk): fold RoPE into the QKV kernel (pltpu.roll on resident tiles)
    # to remove these extra elementwise HBM passes.
    xr = x[..., 0::2]
    xi = x[..., 1::2]
    c = cos[None, :, None, :]
    s = sin[None, :, None, :]
    out_r = xr * c - xi * s
    out_i = xr * s + xi * c
    return jnp.stack([out_r, out_i], axis=-1).reshape(x.shape)


def init_params(key, cfg):
    D = cfg["dim"]
    V = cfg["vocab_size"]
    hd = D // cfg["n_heads"]
    hidden = ffn_hidden_dim(D, cfg["multiple_of"])

    def normal(k, shape, scale=0.02, dtype=jnp.bfloat16):
        return (scale * jax.random.normal(k, shape, dtype=jnp.float32)).astype(dtype)

    keys = jax.random.split(key, 2 + 7 * cfg["n_layers"])
    params = {
        "tok_emb": normal(keys[0], (V, D), dtype=jnp.float32),
        "output": normal(keys[1], (D, V)),             # bf16 MXU weight
        "final_norm": jnp.ones((D,), jnp.float32),
    }
    layers = []
    for li in range(cfg["n_layers"]):
        k = keys[2 + 7 * li: 2 + 7 * (li + 1)]
        wq = normal(k[0], (D, D))
        wk = normal(k[1], (D, D))
        wv = normal(k[2], (D, D))
        layers.append({
            "attn_norm": jnp.ones((D,), jnp.float32),
            "ffn_norm": jnp.ones((D,), jnp.float32),
            "wqkv": jnp.concatenate([wq, wk, wv], axis=1),   # fused (D, 3D)
            "wo": normal(k[3], (D, D)),
            "w1": normal(k[4], (D, hidden)),
            "w3": normal(k[5], (D, hidden)),
            "w2": normal(k[6], (hidden, D)),
        })
    params["layers"] = layers
    cos, sin = precompute_rope(hd, cfg["max_seq_len"] * 2, cfg["rope_theta"])
    params["rope_cos"], params["rope_sin"] = cos, sin
    return params


def transformer_forward(params, tokens, cfg):
    """forward_inference semantics with start_pos=0; returns logits (B,S,V) f32."""
    B, S = tokens.shape
    D = cfg["dim"]
    H = cfg["n_heads"]
    hd = D // H
    eps = cfg["norm_eps"]
    M = B * S

    # token embedding lookup (XLA gather); residual stream stays f32
    h = jnp.take(params["tok_emb"], tokens, axis=0)        # (B, S, D)
    cos = params["rope_cos"][:S]
    sin = params["rope_sin"][:S]

    for layer in params["layers"]:
        # ---- attention block: fused RMSNorm + QKV projection ----
        qkv = pallas_rmsnorm_matmul(h.reshape(M, D), layer["attn_norm"],
                                    layer["wqkv"], eps)    # (M, 3D)
        q = apply_rope(qkv[:, :D].reshape(B, S, H, hd), cos, sin).reshape(B, S, D)
        k = apply_rope(qkv[:, D:2 * D].reshape(B, S, H, hd), cos, sin).reshape(B, S, D)
        v = qkv[:, 2 * D:].reshape(B, S, D)
        o = pallas_attention(q, k, v, H)                   # (B, S, D) lane-dense
        h = h + pallas_matmul(o.reshape(M, D), layer["wo"]).reshape(B, S, D)

        # ---- feed-forward: fused RMSNorm + SwiGLU + w2 ----
        ff = pallas_ffn(h.reshape(M, D), layer["ffn_norm"],
                        layer["w1"], layer["w3"], layer["w2"], eps)
        h = h + ff.reshape(B, S, D)

    # final norm + LM head fused; output f32 (matches .float())
    logits = pallas_rmsnorm_matmul(h.reshape(M, D), params["final_norm"],
                                   params["output"], eps)
    return logits.reshape(B, S, cfg["vocab_size"])

# TODO(synk): forward_loss (cross-entropy with ignore_index) and the kv-cache
# decode path (start_pos > 0) are not implemented; only forward_inference
# with start_pos=0.


if __name__ == "__main__":
    key = jax.random.PRNGKey(0)
    k_param, k_tok = jax.random.split(key)
    params = init_params(k_param, CFG)

    B, S = 2, 8
    tokens = jax.random.randint(k_tok, (B, S), 0, CFG["vocab_size"], dtype=jnp.int32)

    fwd = jax.jit(lambda p, t: transformer_forward(p, t, CFG))
    logits = fwd(params, tokens)
    jax.block_until_ready(logits)
    assert logits.shape == (B, S, CFG["vocab_size"]) and logits.dtype == jnp.float32
    print("KERNEL_OK")
</pallas_src>

<mosaic_0001>
module attributes {stable_mosaic.version = 11 : i64} {
  func.func @_rms_matmul_kernel(%arg0: i32, %arg1: i32, %arg2: memref<16x64xf32, #tpu.memory_space<vmem>>, %arg3: memref<1x64xf32, #tpu.memory_space<vmem>>, %arg4: memref<64x192xbf16, #tpu.memory_space<vmem>>, %arg5: memref<16x192xf32, #tpu.memory_space<vmem>>) attributes {dimension_semantics = [#tpu.dimension_semantics<parallel>, #tpu.dimension_semantics<parallel>], iteration_bounds = array<i64: 1, 1>, scalar_prefetch = 0 : i64, scratch_operands = 0 : i64, tpu.core_type = #tpu.core_type<tc>, window_params = [{transform_indices = @transform_0, window_bounds = array<i64: 16, 64>}, {pipeline_mode = #tpu.pipeline_mode<synchronous>, transform_indices = @transform_1, window_bounds = array<i64: 1, 64>}, {transform_indices = @transform_2, window_bounds = array<i64: 64, 192>}, {transform_indices = @transform_3, window_bounds = array<i64: 16, 192>}]} {
    %c0 = arith.constant 0 : index
    %c0_0 = arith.constant 0 : index
    %0 = vector.load %arg2[%c0, %c0_0] : memref<16x64xf32, #tpu.memory_space<vmem>>, vector<16x64xf32>
    %1 = arith.mulf %0, %0 : vector<16x64xf32>
    %cst = arith.constant dense<0.000000e+00> : vector<16xf32>
    %2 = vector.multi_reduction <add>, %1, %cst [1] : vector<16x64xf32> to vector<16xf32>
    %3 = vector.shape_cast %2 : vector<16xf32> to vector<16x1xf32>
    %cst_1 = arith.constant 6.400000e+01 : f32
    %4 = vector.broadcast %cst_1 : f32 to vector<16x1xf32>
    %5 = arith.divf %3, %4 : vector<16x1xf32>
    %cst_2 = arith.constant 9.99999974E-6 : f32
    %6 = vector.broadcast %cst_2 : f32 to vector<16x1xf32>
    %7 = arith.addf %5, %6 : vector<16x1xf32>
    %8 = math.rsqrt %7 : vector<16x1xf32>
    %9 = vector.broadcast %8 : vector<16x1xf32> to vector<16x64xf32>
    %10 = arith.mulf %0, %9 : vector<16x64xf32>
    %c0_3 = arith.constant 0 : index
    %c0_4 = arith.constant 0 : index
    %11 = vector.load %arg3[%c0_3, %c0_4] : memref<1x64xf32, #tpu.memory_space<vmem>>, vector<1x64xf32>
    %12 = vector.broadcast %11 : vector<1x64xf32> to vector<16x64xf32>
    %13 = arith.mulf %10, %12 : vector<16x64xf32>
    %14 = arith.truncf %13 : vector<16x64xf32> to vector<16x64xbf16>
    %c0_5 = arith.constant 0 : index
    %c0_6 = arith.constant 0 : index
    %15 = vector.load %arg4[%c0_5, %c0_6] : memref<64x192xbf16, #tpu.memory_space<vmem>>, vector<64x192xbf16>
    %cst_7 = arith.constant dense<0.000000e+00> : vector<16x192xf32>
    %16 = tpu.matmul %14, %15, %cst_7 {dimension_numbers = #tpu.dot_dimension_numbers<[1], [0], [0], [1], [0, 0, 1, 1], [], []>} : vector<16x64xbf16>, vector<64x192xbf16>, vector<16x192xf32> -> vector<16x192xf32>
    %c0_8 = arith.constant 0 : index
    %c0_9 = arith.constant 0 : index
    %17 = vector.load %arg5[%c0_8, %c0_9] : memref<16x192xf32, #tpu.memory_space<vmem>>, vector<16x192xf32>
    tpu.vector_store %arg5[%c0_8, %c0_9], %16 {strides = array<i32>} : memref<16x192xf32, #tpu.memory_space<vmem>>, vector<16x192xf32>,
    return
  }
  func.func @transform_0(%arg0: i32, %arg1: i32) -> (i32, i32) {
    %c0_i32 = arith.constant 0 : i32
    %c0_i32_0 = arith.constant 0 : i32
    return %arg0, %c0_i32 : i32, i32
  }
  func.func @transform_1(%arg0: i32, %arg1: i32) -> (i32, i32) {
    %c0_i32 = arith.constant 0 : i32
    %c0_i32_0 = arith.constant 0 : i32
    %c0_i32_1 = arith.constant 0 : i32
    return %c0_i32, %c0_i32_0 : i32, i32
  }
  func.func @transform_2(%arg0: i32, %arg1: i32) -> (i32, i32) {
    %c0_i32 = arith.constant 0 : i32
    %c0_i32_0 = arith.constant 0 : i32
    return %c0_i32, %arg1 : i32, i32
  }
  func.func @transform_3(%arg0: i32, %arg1: i32) -> (i32, i32) {
    %c0_i32 = arith.constant 0 : i32
    return %arg0, %arg1 : i32, i32
  }
}

module attributes {stable_mosaic.version = 11 : i64} {
  func.func @_matmul_kernel(%arg0: i32, %arg1: i32, %arg2: i32, %arg3: memref<16x64xf32, #tpu.memory_space<vmem>>, %arg4: memref<64x64xbf16, #tpu.memory_space<vmem>>, %arg5: memref<16x64xf32, #tpu.memory_space<vmem>>, %arg6: memref<16x64xf32, #tpu.memory_space<vmem>>) attributes {dimension_semantics = [#tpu.dimension_semantics<parallel>, #tpu.dimension_semantics<parallel>, #tpu.dimension_semantics<arbitrary>], iteration_bounds = array<i64: 1, 1, 1>, scalar_prefetch = 0 : i64, scratch_operands = 1 : i64, tpu.core_type = #tpu.core_type<tc>, window_params = [{transform_indices = @transform_0, window_bounds = array<i64: 16, 64>}, {transform_indices = @transform_1, window_bounds = array<i64: 64, 64>}, {transform_indices = @transform_2, window_bounds = array<i64: 16, 64>}]} {
    %c0_i32 = arith.constant 0 : i32
    %0 = arith.cmpi eq, %arg2, %c0_i32 : i32
    %1 = arith.extui %0 : i1 to i32
    %c0_i32_0 = arith.constant 0 : i32
    %2 = arith.cmpi ne, %1, %c0_i32_0 : i32
    scf.if %2 {
      %cst_10 = arith.constant 0.000000e+00 : f32
      %13 = vector.broadcast %cst_10 : f32 to vector<16x64xf32>
      %c0_11 = arith.constant 0 : index
      %c0_12 = arith.constant 0 : index
      %14 = vector.load %arg6[%c0_11, %c0_12] : memref<16x64xf32, #tpu.memory_space<vmem>>, vector<16x64xf32>
      tpu.vector_store %arg6[%c0_11, %c0_12], %13 {strides = array<i32>} : memref<16x64xf32, #tpu.memory_space<vmem>>, vector<16x64xf32>,
    } else {
    }
    %c0 = arith.constant 0 : index
    %c0_1 = arith.constant 0 : index
    %3 = vector.load %arg6[%c0, %c0_1] : memref<16x64xf32, #tpu.memory_space<vmem>>, vector<16x64xf32>
    %c0_2 = arith.constant 0 : index
    %c0_3 = arith.constant 0 : index
    %4 = vector.load %arg3[%c0_2, %c0_3] : memref<16x64xf32, #tpu.memory_space<vmem>>, vector<16x64xf32>
    %5 = arith.truncf %4 : vector<16x64xf32> to vector<16x64xbf16>
    %c0_4 = arith.constant 0 : index
    %c0_5 = arith.constant 0 : index
    %6 = vector.load %arg4[%c0_4, %c0_5] : memref<64x64xbf16, #tpu.memory_space<vmem>>, vector<64x64xbf16>
    %cst = arith.constant dense<0.000000e+00> : vector<16x64xf32>
    %7 = tpu.matmul %5, %6, %cst {dimension_numbers = #tpu.dot_dimension_numbers<[1], [0], [0], [1], [0, 0, 1, 1], [], []>} : vector<16x64xbf16>, vector<64x64xbf16>, vector<16x64xf32> -> vector<16x64xf32>
    %8 = arith.addf %3, %7 : vector<16x64xf32>
    %c0_6 = arith.constant 0 : index
    %c0_7 = arith.constant 0 : index
    %9 = vector.load %arg6[%c0_6, %c0_7] : memref<16x64xf32, #tpu.memory_space<vmem>>, vector<16x64xf32>
    tpu.vector_store %arg6[%c0_6, %c0_7], %8 {strides = array<i32>} : memref<16x64xf32, #tpu.memory_space<vmem>>, vector<16x64xf32>,
    %c0_i32_8 = arith.constant 0 : i32
    %10 = arith.cmpi eq, %arg2, %c0_i32_8 : i32
    %11 = arith.extui %10 : i1 to i32
    %c0_i32_9 = arith.constant 0 : i32
    %12 = arith.cmpi ne, %11, %c0_i32_9 : i32
    scf.if %12 {
      %c0_10 = arith.constant 0 : index
      %c0_11 = arith.constant 0 : index
      %13 = vector.load %arg6[%c0_10, %c0_11] : memref<16x64xf32, #tpu.memory_space<vmem>>, vector<16x64xf32>
      %c0_12 = arith.constant 0 : index
      %c0_13 = arith.constant 0 : index
      %14 = vector.load %arg5[%c0_12, %c0_13] : memref<16x64xf32, #tpu.memory_space<vmem>>, vector<16x64xf32>
      tpu.vector_store %arg5[%c0_12, %c0_13], %13 {strides = array<i32>} : memref<16x64xf32, #tpu.memory_space<vmem>>, vector<16x64xf32>,
    } else {
    }
    return
  }
  func.func @transform_0(%arg0: i32, %arg1: i32, %arg2: i32) -> (i32, i32) {
    %c0_i32 = arith.constant 0 : i32
    return %arg0, %arg2 : i32, i32
  }
  func.func @transform_1(%arg0: i32, %arg1: i32, %arg2: i32) -> (i32, i32) {
    %c0_i32 = arith.constant 0 : i32
    return %arg2, %arg1 : i32, i32
  }
  func.func @transform_2(%arg0: i32, %arg1: i32, %arg2: i32) -> (i32, i32) {
    %c0_i32 = arith.constant 0 : i32
    return %arg0, %arg1 : i32, i32
  }
}

module attributes {stable_mosaic.version = 11 : i64} {
  func.func @_flash_attn_kernel(%arg0: i32, %arg1: i32, %arg2: i32, %arg3: memref<1x8x64xf32, #tpu.memory_space<vmem>>, %arg4: memref<1x8x64xf32, #tpu.memory_space<vmem>>, %arg5: memref<1x8x64xf32, #tpu.memory_space<vmem>>, %arg6: memref<1x8x64xf32, #tpu.memory_space<vmem>>, %arg7: memref<4x8x1xf32, #tpu.memory_space<vmem>>, %arg8: memref<4x8x1xf32, #tpu.memory_space<vmem>>, %arg9: memref<8x64xf32, #tpu.memory_space<vmem>>) attributes {dimension_semantics = [#tpu.dimension_semantics<parallel>, #tpu.dimension_semantics<parallel>, #tpu.dimension_semantics<arbitrary>], iteration_bounds = array<i64: 2, 1, 1>, scalar_prefetch = 0 : i64, scratch_operands = 3 : i64, tpu.core_type = #tpu.core_type<tc>, window_params = [{transform_indices = @transform_0, window_bounds = array<i64: 1, 8, 64>}, {transform_indices = @transform_1, window_bounds = array<i64: 1, 8, 64>}, {transform_indices = @transform_2, window_bounds = array<i64: 1, 8, 64>}, {transform_indices = @transform_3, window_bounds = array<i64: 1, 8, 64>}]} {
    %c0_i32 = arith.constant 0 : i32
    %0 = arith.cmpi eq, %arg2, %c0_i32 : i32
    %1 = arith.extui %0 : i1 to i32
    %c0_i32_0 = arith.constant 0 : i32
    %2 = arith.cmpi ne, %1, %c0_i32_0 : i32
    scf.if %2 {
      %cst = arith.constant -1.000000e+30 : f32
      %13 = vector.broadcast %cst : f32 to vector<4x8x1xf32>
      %c0 = arith.constant 0 : index
      %c0_6 = arith.constant 0 : index
      %c0_7 = arith.constant 0 : index
      %14 = vector.load %arg7[%c0, %c0_6, %c0_7] : memref<4x8x1xf32, #tpu.memory_space<vmem>>, vector<4x8x1xf32>
      tpu.vector_store %arg7[%c0, %c0_6, %c0_7], %13 {strides = array<i32>} : memref<4x8x1xf32, #tpu.memory_space<vmem>>, vector<4x8x1xf32>,
      %cst_8 = arith.constant 0.000000e+00 : f32
      %15 = vector.broadcast %cst_8 : f32 to vector<4x8x1xf32>
      %c0_9 = arith.constant 0 : index
      %c0_10 = arith.constant 0 : index
      %c0_11 = arith.constant 0 : index
      %16 = vector.load %arg8[%c0_9, %c0_10, %c0_11] : memref<4x8x1xf32, #tpu.memory_space<vmem>>, vector<4x8x1xf32>
      tpu.vector_store %arg8[%c0_9, %c0_10, %c0_11], %15 {strides = array<i32>} : memref<4x8x1xf32, #tpu.memory_space<vmem>>, vector<4x8x1xf32>,
      %cst_12 = arith.constant 0.000000e+00 : f32
      %17 = vector.broadcast %cst_12 : f32 to vector<8x64xf32>
      %c0_13 = arith.constant 0 : index
      %c0_14 = arith.constant 0 : index
      %18 = vector.load %arg9[%c0_13, %c0_14] : memref<8x64xf32, #tpu.memory_space<vmem>>, vector<8x64xf32>
      tpu.vector_store %arg9[%c0_13, %c0_14], %17 {strides = array<i32>} : memref<8x64xf32, #tpu.memory_space<vmem>>, vector<8x64xf32>,
    } else {
    }
    %c8_i32 = arith.constant 8 : i32
    %3 = arith.muli %arg1, %c8_i32 : i32
    %c8_i32_1 = arith.constant 8 : i32
    %4 = arith.muli %arg2, %c8_i32_1 : i32
    %c8_i32_2 = arith.constant 8 : i32
    %5 = arith.addi %3, %c8_i32_2 : i32
    %c1_i32 = arith.constant 1 : i32
    %6 = arith.subi %5, %c1_i32 : i32
    %7 = arith.cmpi sle, %4, %6 : i32
    %8 = arith.extui %7 : i1 to i32
    %c0_i32_3 = arith.constant 0 : i32
    %9 = arith.cmpi ne, %8, %c0_i32_3 : i32
    scf.if %9 {
      %c0 = arith.constant 0 : index
      %c0_6 = arith.constant 0 : index
      %c0_7 = arith.constant 0 : index
      %13 = vector.load %arg3[%c0, %c0_6, %c0_7] : memref<1x8x64xf32, #tpu.memory_space<vmem>>, vector<1x8x64xf32>
      %14 = vector.shape_cast %13 : vector<1x8x64xf32> to vector<8x64xf32>
      %cst = arith.constant 2.500000e-01 : f32
      %15 = vector.broadcast %cst : f32 to vector<8x64xf32>
      %16 = arith.mulf %14, %15 : vector<8x64xf32>
      %c0_8 = arith.constant 0 : index
      %c0_9 = arith.constant 0 : index
      %c0_10 = arith.constant 0 : index
      %17 = vector.load %arg4[%c0_8, %c0_9, %c0_10] : memref<1x8x64xf32, #tpu.memory_space<vmem>>, vector<1x8x64xf32>
      %18 = vector.shape_cast %17 : vector<1x8x64xf32> to vector<8x64xf32>
      %c0_11 = arith.constant 0 : index
      %c0_12 = arith.constant 0 : index
      %c0_13 = arith.constant 0 : index
      %19 = vector.load %arg5[%c0_11, %c0_12, %c0_13] : memref<1x8x64xf32, #tpu.memory_space<vmem>>, vector<1x8x64xf32>
      %20 = vector.shape_cast %19 : vector<1x8x64xf32> to vector<8x64xf32>
      %21 = tpu.iota {dimensions = array<i32: 0>} : vector<8x8xi32>
      %22 = vector.broadcast %3 : i32 to vector<8x8xi32>
      %23 = arith.addi %22, %21 : vector<8x8xi32>
      %24 = tpu.iota {dimensions = array<i32: 1>} : vector<8x8xi32>
      %25 = vector.broadcast %4 : i32 to vector<8x8xi32>
      %26 = arith.addi %25, %24 : vector<8x8xi32>
      %27 = arith.cmpi sle, %26, %23 : vector<8x8xi32>
      %28 = vector.extract_strided_slice %16 {offsets = [0, 0], sizes = [8, 16], strides = [1, 1]} : vector<8x64xf32> to vector<8x16xf32>
      %29 = arith.truncf %28 : vector<8x16xf32> to vector<8x16xbf16>
      %30 = vector.extract_strided_slice %18 {offsets = [0, 0], sizes = [8, 16], strides = [1, 1]} : vector<8x64xf32> to vector<8x16xf32>
      %31 = arith.truncf %30 : vector<8x16xf32> to vector<8x16xbf16>
      %32 = tpu.transpose %31, [1, 0] : vector<8x16xbf16> -> vector<16x8xbf16>
      %cst_14 = arith.constant dense<0.000000e+00> : vector<8x8xf32>
      %33 = tpu.matmul %29, %32, %cst_14 {dimension_numbers = #tpu.dot_dimension_numbers<[1], [0], [0], [1], [0, 0, 1, 1], [], []>} : vector<8x16xbf16>, vector<16x8xbf16>, vector<8x8xf32> -> vector<8x8xf32>
      %cst_15 = arith.constant -1.000000e+30 : f32
      %34 = vector.broadcast %cst_15 : f32 to vector<8x8xf32>
      %35 = arith.select %27, %33, %34 : vector<8x8xi1>, vector<8x8xf32>
      %c0_16 = arith.constant 0 : index
      %c0_17 = arith.constant 0 : index
      %c0_18 = arith.constant 0 : index
      %36 = vector.load %arg7[%c0_16, %c0_17, %c0_18] : memref<4x8x1xf32, #tpu.memory_space<vmem>>, vector<1x8x1xf32>
      %37 = vector.shape_cast %36 : vector<1x8x1xf32> to vector<8x1xf32>
      %cst_19 = arith.constant dense<0xFF800000> : vector<8xf32>
      %38 = vector.multi_reduction <maximumf>, %35, %cst_19 [1] : vector<8x8xf32> to vector<8xf32>
      %39 = vector.shape_cast %38 : vector<8xf32> to vector<8x1xf32>
      %40 = arith.maximumf %37, %39 : vector<8x1xf32>
      %41 = arith.subf %37, %40 : vector<8x1xf32>
      %42 = math.exp %41 : vector<8x1xf32>
      %43 = vector.broadcast %40 : vector<8x1xf32> to vector<8x8xf32>
      %44 = arith.subf %35, %43 : vector<8x8xf32>
      %45 = math.exp %44 : vector<8x8xf32>
      %c0_20 = arith.constant 0 : index
      %c0_21 = arith.constant 0 : index
      %c0_22 = arith.constant 0 : index
      %46 = vector.load %arg8[%c0_20, %c0_21, %c0_22] : memref<4x8x1xf32, #tpu.memory_space<vmem>>, vector<1x8x1xf32>
      %47 = vector.shape_cast %46 : vector<1x8x1xf32> to vector<8x1xf32>
      %48 = arith.mulf %42, %47 : vector<8x1xf32>
      %cst_23 = arith.constant dense<0.000000e+00> : vector<8xf32>
      %49 = vector.multi_reduction <add>, %45, %cst_23 [1] : vector<8x8xf32> to vector<8xf32>
      %50 = vector.shape_cast %49 : vector<8xf32> to vector<8x1xf32>
      %51 = arith.addf %48, %50 : vector<8x1xf32>
      %c0_24 = arith.constant 0 : index
      %c0_25 = arith.constant 0 : index
      %c0_26 = arith.constant 0 : index
      %52 = vector.load %arg8[%c0_24, %c0_25, %c0_26] : memref<4x8x1xf32, #tpu.memory_space<vmem>>, vector<1x8x1xf32>
      %53 = vector.shape_cast %52 : vector<1x8x1xf32> to vector<8x1xf32>
      %54 = vector.shape_cast %51 : vector<8x1xf32> to vector<1x8x1xf32>
      tpu.vector_store %arg8[%c0_24, %c0_25, %c0_26], %54 {strides = array<i32>} : memref<4x8x1xf32, #tpu.memory_space<vmem>>, vector<1x8x1xf32>,
      %c0_27 = arith.constant 0 : index
      %c0_28 = arith.constant 0 : index
      %55 = vector.load %arg9[%c0_27, %c0_28] : memref<8x64xf32, #tpu.memory_space<vmem>>, vector<8x16xf32>
      %56 = vector.broadcast %42 : vector<8x1xf32> to vector<8x16xf32>
      %57 = arith.mulf %56, %55 : vector<8x16xf32>
      %58 = arith.truncf %45 : vector<8x8xf32> to vector<8x8xbf16>
      %59 = vector.extract_strided_slice %20 {offsets = [0, 0], sizes = [8, 16], strides = [1, 1]} : vector<8x64xf32> to vector<8x16xf32>
      %60 = arith.truncf %59 : vector<8x16xf32> to vector<8x16xbf16>
      %cst_29 = arith.constant dense<0.000000e+00> : vector<8x16xf32>
      %61 = tpu.matmul %58, %60, %cst_29 {dimension_numbers = #tpu.dot_dimension_numbers<[1], [0], [0], [1], [0, 0, 1, 1], [], []>} : vector<8x8xbf16>, vector<8x16xbf16>, vector<8x16xf32> -> vector<8x16xf32>
      %62 = arith.addf %57, %61 : vector<8x16xf32>
      %c0_30 = arith.constant 0 : index
      %c0_31 = arith.constant 0 : index
      %63 = vector.load %arg9[%c0_30, %c0_31] : memref<8x64xf32, #tpu.memory_space<vmem>>, vector<8x16xf32>
      tpu.vector_store %arg9[%c0_30, %c0_31], %62 {strides = array<i32>} : memref<8x64xf32, #tpu.memory_space<vmem>>, vector<8x16xf32>,
      %c0_32 = arith.constant 0 : index
      %c0_33 = arith.constant 0 : index
      %c0_34 = arith.constant 0 : index
      %64 = vector.load %arg7[%c0_32, %c0_33, %c0_34] : memref<4x8x1xf32, #tpu.memory_space<vmem>>, vector<1x8x1xf32>
      %65 = vector.shape_cast %64 : vector<1x8x1xf32> to vector<8x1xf32>
      %66 = vector.shape_cast %40 : vector<8x1xf32> to vector<1x8x1xf32>
      tpu.vector_store %arg7[%c0_32, %c0_33, %c0_34], %66 {strides = array<i32>} : memref<4x8x1xf32, #tpu.memory_space<vmem>>, vector<1x8x1xf32>,
      %67 = vector.extract_strided_slice %16 {offsets = [0, 16], sizes = [8, 16], strides = [1, 1]} : vector<8x64xf32> to vector<8x16xf32>
      %68 = arith.truncf %67 : vector<8x16xf32> to vector<8x16xbf16>
      %69 = vector.extract_strided_slice %18 {offsets = [0, 16], sizes = [8, 16], strides = [1, 1]} : vector<8x64xf32> to vector<8x16xf32>
      %70 = arith.truncf %69 : vector<8x16xf32> to vector<8x16xbf16>
      %71 = tpu.transpose %70, [1, 0] : vector<8x16xbf16> -> vector<16x8xbf16>
      %cst_35 = arith.constant dense<0.000000e+00> : vector<8x8xf32>
      %72 = tpu.matmul %68, %71, %cst_35 {dimension_numbers = #tpu.dot_dimension_numbers<[1], [0], [0], [1], [0, 0, 1, 1], [], []>} : vector<8x16xbf16>, vector<16x8xbf16>, vector<8x8xf32> -> vector<8x8xf32>
      %cst_36 = arith.constant -1.000000e+30 : f32
      %73 = vector.broadcast %cst_36 : f32 to vector<8x8xf32>
      %74 = arith.select %27, %72, %73 : vector<8x8xi1>, vector<8x8xf32>
      %c1 = arith.constant 1 : index
      %c0_37 = arith.constant 0 : index
      %c0_38 = arith.constant 0 : index
      %75 = vector.load %arg7[%c1, %c0_37, %c0_38] : memref<4x8x1xf32, #tpu.memory_space<vmem>>, vector<1x8x1xf32>
      %76 = vector.shape_cast %75 : vector<1x8x1xf32> to vector<8x1xf32>
      %cst_39 = arith.constant dense<0xFF800000> : vector<8xf32>
      %77 = vector.multi_reduction <maximumf>, %74, %cst_39 [1] : vector<8x8xf32> to vector<8xf32>
      %78 = vector.shape_cast %77 : vector<8xf32> to vector<8x1xf32>
      %79 = arith.maximumf %76, %78 : vector<8x1xf32>
      %80 = arith.subf %76, %79 : vector<8x1xf32>
      %81 = math.exp %80 : vector<8x1xf32>
      %82 = vector.broadcast %79 : vector<8x1xf32> to vector<8x8xf32>
      %83 = arith.subf %74, %82 : vector<8x8xf32>
      %84 = math.exp %83 : vector<8x8xf32>
      %c1_40 = arith.constant 1 : index
      %c0_41 = arith.constant 0 : index
      %c0_42 = arith.constant 0 : index
      %85 = vector.load %arg8[%c1_40, %c0_41, %c0_42] : memref<4x8x1xf32, #tpu.memory_space<vmem>>, vector<1x8x1xf32>
      %86 = vector.shape_cast %85 : vector<1x8x1xf32> to vector<8x1xf32>
      %87 = arith.mulf %81, %86 : vector<8x1xf32>
      %cst_43 = arith.constant dense<0.000000e+00> : vector<8xf32>
      %88 = vector.multi_reduction <add>, %84, %cst_43 [1] : vector<8x8xf32> to vector<8xf32>
      %89 = vector.shape_cast %88 : vector<8xf32> to vector<8x1xf32>
      %90 = arith.addf %87, %89 : vector<8x1xf32>
      %c1_44 = arith.constant 1 : index
      %c0_45 = arith.constant 0 : index
      %c0_46 = arith.constant 0 : index
      %91 = vector.load %arg8[%c1_44, %c0_45, %c0_46] : memref<4x8x1xf32, #tpu.memory_space<vmem>>, vector<1x8x1xf32>
      %92 = vector.shape_cast %91 : vector<1x8x1xf32> to vector<8x1xf32>
      %93 = vector.shape_cast %90 : vector<8x1xf32> to vector<1x8x1xf32>
      tpu.vector_store %arg8[%c1_44, %c0_45, %c0_46], %93 {strides = array<i32>} : memref<4x8x1xf32, #tpu.memory_space<vmem>>, vector<1x8x1xf32>,
      %c0_47 = arith.constant 0 : index
      %c16 = arith.constant 16 : index
      %94 = vector.load %arg9[%c0_47, %c16] : memref<8x64xf32, #tpu.memory_space<vmem>>, vector<8x16xf32>
      %95 = vector.broadcast %81 : vector<8x1xf32> to vector<8x16xf32>
      %96 = arith.mulf %95, %94 : vector<8x16xf32>
      %97 = arith.truncf %84 : vector<8x8xf32> to vector<8x8xbf16>
      %98 = vector.extract_strided_slice %20 {offsets = [0, 16], sizes = [8, 16], strides = [1, 1]} : vector<8x64xf32> to vector<8x16xf32>
      %99 = arith.truncf %98 : vector<8x16xf32> to vector<8x16xbf16>
      %cst_48 = arith.constant dense<0.000000e+00> : vector<8x16xf32>
      %100 = tpu.matmul %97, %99, %cst_48 {dimension_numbers = #tpu.dot_dimension_numbers<[1], [0], [0], [1], [0, 0, 1, 1], [], []>} : vector<8x8xbf16>, vector<8x16xbf16>, vector<8x16xf32> -> vector<8x16xf32>
      %101 = arith.addf %96, %100 : vector<8x16xf32>
      %c0_49 = arith.constant 0 : index
      %c16_50 = arith.constant 16 : index
      %102 = vector.load %arg9[%c0_49, %c16_50] : memref<8x64xf32, #tpu.memory_space<vmem>>, vector<8x16xf32>
      tpu.vector_store %arg9[%c0_49, %c16_50], %101 {strides = array<i32>} : memref<8x64xf32, #tpu.memory_space<vmem>>, vector<8x16xf32>,
      %c1_51 = arith.constant 1 : index
      %c0_52 = arith.constant 0 : index
      %c0_53 = arith.constant 0 : index
      %103 = vector.load %arg7[%c1_51, %c0_52, %c0_53] : memref<4x8x1xf32, #tpu.memory_space<vmem>>, vector<1x8x1xf32>
      %104 = vector.shape_cast %103 : vector<1x8x1xf32> to vector<8x1xf32>
      %105 = vector.shape_cast %79 : vector<8x1xf32> to vector<1x8x1xf32>
      tpu.vector_store %arg7[%c1_51, %c0_52, %c0_53], %105 {strides = array<i32>} : memref<4x8x1xf32, #tpu.memory_space<vmem>>, vector<1x8x1xf32>,
      %106 = vector.extract_strided_slice %16 {offsets = [0, 32], sizes = [8, 16], strides = [1, 1]} : vector<8x64xf32> to vector<8x16xf32>
      %107 = arith.truncf %106 : vector<8x16xf32> to vector<8x16xbf16>
      %108 = vector.extract_strided_slice %18 {offsets = [0, 32], sizes = [8, 16], strides = [1, 1]} : vector<8x64xf32> to vector<8x16xf32>
      %109 = arith.truncf %108 : vector<8x16xf32> to vector<8x16xbf16>
      %110 = tpu.transpose %109, [1, 0] : vector<8x16xbf16> -> vector<16x8xbf16>
      %cst_54 = arith.constant dense<0.000000e+00> : vector<8x8xf32>
      %111 = tpu.matmul %107, %110, %cst_54 {dimension_numbers = #tpu.dot_dimension_numbers<[1], [0], [0], [1], [0, 0, 1, 1], [], []>} : vector<8x16xbf16>, vector<16x8xbf16>, vector<8x8xf32> -> vector<8x8xf32>
      %cst_55 = arith.constant -1.000000e+30 : f32
      %112 = vector.broadcast %cst_55 : f32 to vector<8x8xf32>
      %113 = arith.select %27, %111, %112 : vector<8x8xi1>, vector<8x8xf32>
      %c2 = arith.constant 2 : index
      %c0_56 = arith.constant 0 : index
      %c0_57 = arith.constant 0 : index
      %114 = vector.load %arg7[%c2, %c0_56, %c0_57] : memref<4x8x1xf32, #tpu.memory_space<vmem>>, vector<1x8x1xf32>
      %115 = vector.shape_cast %114 : vector<1x8x1xf32> to vector<8x1xf32>
      %cst_58 = arith.constant dense<0xFF800000> : vector<8xf32>
      %116 = vector.multi_reduction <maximumf>, %113, %cst_58 [1] : vector<8x8xf32> to vector<8xf32>
      %117 = vector.shape_cast %116 : vector<8xf32> to vector<8x1xf32>
      %118 = arith.maximumf %115, %117 : vector<8x1xf32>
      %119 = arith.subf %115, %118 : vector<8x1xf32>
      %120 = math.exp %119 : vector<8x1xf32>
      %121 = vector.broadcast %118 : vector<8x1xf32> to vector<8x8xf32>
      %122 = arith.subf %113, %121 : vector<8x8xf32>
      %123 = math.exp %122 : vector<8x8xf32>
      %c2_59 = arith.constant 2 : index
      %c0_60 = arith.constant 0 : index
      %c0_61 = arith.constant 0 : index
      %124 = vector.load %arg8[%c2_59, %c0_60, %c0_61] : memref<4x8x1xf32, #tpu.memory_space<vmem>>, vector<1x8x1xf32>
      %125 = vector.shape_cast %124 : vector<1x8x1xf32> to vector<8x1xf32>
      %126 = arith.mulf %120, %125 : vector<8x1xf32>
      %cst_62 = arith.constant dense<0.000000e+00> : vector<8xf32>
      %127 = vector.multi_reduction <add>, %123, %cst_62 [1] : vector<8x8xf32> to vector<8xf32>
      %128 = vector.shape_cast %127 : vector<8xf32> to vector<8x1xf32>
      %129 = arith.addf %126, %128 : vector<8x1xf32>
      %c2_63 = arith.constant 2 : index
      %c0_64 = arith.constant 0 : index
      %c0_65 = arith.constant 0 : index
      %130 = vector.load %arg8[%c2_63, %c0_64, %c0_65] : memref<4x8x1xf32, #tpu.memory_space<vmem>>, vector<1x8x1xf32>
      %131 = vector.shape_cast %130 : vector<1x8x1xf32> to vector<8x1xf32>
      %132 = vector.shape_cast %129 : vector<8x1xf32> to vector<1x8x1xf32>
      tpu.vector_store %arg8[%c2_63, %c0_64, %c0_65], %132 {strides = array<i32>} : memref<4x8x1xf32, #tpu.memory_space<vmem>>, vector<1x8x1xf32>,
      %c0_66 = arith.constant 0 : index
      %c32 = arith.constant 32 : index
      %133 = vector.load %arg9[%c0_66, %c32] : memref<8x64xf32, #tpu.memory_space<vmem>>, vector<8x16xf32>
      %134 = vector.broadcast %120 : vector<8x1xf32> to vector<8x16xf32>
      %135 = arith.mulf %134, %133 : vector<8x16xf32>
      %136 = arith.truncf %123 : vector<8x8xf32> to vector<8x8xbf16>
      %137 = vector.extract_strided_slice %20 {offsets = [0, 32], sizes = [8, 16], strides = [1, 1]} : vector<8x64xf32> to vector<8x16xf32>
      %138 = arith.truncf %137 : vector<8x16xf32> to vector<8x16xbf16>
      %cst_67 = arith.constant dense<0.000000e+00> : vector<8x16xf32>
      %139 = tpu.matmul %136, %138, %cst_67 {dimension_numbers = #tpu.dot_dimension_numbers<[1], [0], [0], [1], [0, 0, 1, 1], [], []>} : vector<8x8xbf16>, vector<8x16xbf16>, vector<8x16xf32> -> vector<8x16xf32>
      %140 = arith.addf %135, %139 : vector<8x16xf32>
      %c0_68 = arith.constant 0 : index
      %c32_69 = arith.constant 32 : index
      %141 = vector.load %arg9[%c0_68, %c32_69] : memref<8x64xf32, #tpu.memory_space<vmem>>, vector<8x16xf32>
      tpu.vector_store %arg9[%c0_68, %c32_69], %140 {strides = array<i32>} : memref<8x64xf32, #tpu.memory_space<vmem>>, vector<8x16xf32>,
      %c2_70 = arith.constant 2 : index
      %c0_71 = arith.constant 0 : index
      %c0_72 = arith.constant 0 : index
      %142 = vector.load %arg7[%c2_70, %c0_71, %c0_72] : memref<4x8x1xf32, #tpu.memory_space<vmem>>, vector<1x8x1xf32>
      %143 = vector.shape_cast %142 : vector<1x8x1xf32> to vector<8x1xf32>
      %144 = vector.shape_cast %118 : vector<8x1xf32> to vector<1x8x1xf32>
      tpu.vector_store %arg7[%c2_70, %c0_71, %c0_72], %144 {strides = array<i32>} : memref<4x8x1xf32, #tpu.memory_space<vmem>>, vector<1x8x1xf32>,
      %145 = vector.extract_strided_slice %16 {offsets = [0, 48], sizes = [8, 16], strides = [1, 1]} : vector<8x64xf32> to vector<8x16xf32>
      %146 = arith.truncf %145 : vector<8x16xf32> to vector<8x16xbf16>
      %147 = vector.extract_strided_slice %18 {offsets = [0, 48], sizes = [8, 16], strides = [1, 1]} : vector<8x64xf32> to vector<8x16xf32>
      %148 = arith.truncf %147 : vector<8x16xf32> to vector<8x16xbf16>
      %149 = tpu.transpose %148, [1, 0] : vector<8x16xbf16> -> vector<16x8xbf16>
      %cst_73 = arith.constant dense<0.000000e+00> : vector<8x8xf32>
      %150 = tpu.matmul %146, %149, %cst_73 {dimension_numbers = #tpu.dot_dimension_numbers<[1], [0], [0], [1], [0, 0, 1, 1], [], []>} : vector<8x16xbf16>, vector<16x8xbf16>, vector<8x8xf32> -> vector<8x8xf32>
      %cst_74 = arith.constant -1.000000e+30 : f32
      %151 = vector.broadcast %cst_74 : f32 to vector<8x8xf32>
      %152 = arith.select %27, %150, %151 : vector<8x8xi1>, vector<8x8xf32>
      %c3 = arith.constant 3 : index
      %c0_75 = arith.constant 0 : index
      %c0_76 = arith.constant 0 : index
      %153 = vector.load %arg7[%c3, %c0_75, %c0_76] : memref<4x8x1xf32, #tpu.memory_space<vmem>>, vector<1x8x1xf32>
      %154 = vector.shape_cast %153 : vector<1x8x1xf32> to vector<8x1xf32>
      %cst_77 = arith.constant dense<0xFF800000> : vector<8xf32>
      %155 = vector.multi_reduction <maximumf>, %152, %cst_77 [1] : vector<8x8xf32> to vector<8xf32>
      %156 = vector.shape_cast %155 : vector<8xf32> to vector<8x1xf32>
      %157 = arith.maximumf %154, %156 : vector<8x1xf32>
      %158 = arith.subf %154, %157 : vector<8x1xf32>
      %159 = math.exp %158 : vector<8x1xf32>
      %160 = vector.broadcast %157 : vector<8x1xf32> to vector<8x8xf32>
      %161 = arith.subf %152, %160 : vector<8x8xf32>
      %162 = math.exp %161 : vector<8x8xf32>
      %c3_78 = arith.constant 3 : index
      %c0_79 = arith.constant 0 : index
      %c0_80 = arith.constant 0 : index
      %163 = vector.load %arg8[%c3_78, %c0_79, %c0_80] : memref<4x8x1xf32, #tpu.memory_space<vmem>>, vector<1x8x1xf32>
      %164 = vector.shape_cast %163 : vector<1x8x1xf32> to vector<8x1xf32>
      %165 = arith.mulf %159, %164 : vector<8x1xf32>
      %cst_81 = arith.constant dense<0.000000e+00> : vector<8xf32>
      %166 = vector.multi_reduction <add>, %162, %cst_81 [1] : vector<8x8xf32> to vector<8xf32>
      %167 = vector.shape_cast %166 : vector<8xf32> to vector<8x1xf32>
      %168 = arith.addf %165, %167 : vector<8x1xf32>
      %c3_82 = arith.constant 3 : index
      %c0_83 = arith.constant 0 : index
      %c0_84 = arith.constant 0 : index
      %169 = vector.load %arg8[%c3_82, %c0_83, %c0_84] : memref<4x8x1xf32, #tpu.memory_space<vmem>>, vector<1x8x1xf32>
      %170 = vector.shape_cast %169 : vector<1x8x1xf32> to vector<8x1xf32>
      %171 = vector.shape_cast %168 : vector<8x1xf32> to vector<1x8x1xf32>
      tpu.vector_store %arg8[%c3_82, %c0_83, %c0_84], %171 {strides = array<i32>} : memref<4x8x1xf32, #tpu.memory_space<vmem>>, vector<1x8x1xf32>,
      %c0_85 = arith.constant 0 : index
      %c48 = arith.constant 48 : index
      %172 = vector.load %arg9[%c0_85, %c48] : memref<8x64xf32, #tpu.memory_space<vmem>>, vector<8x16xf32>
      %173 = vector.broadcast %159 : vector<8x1xf32> to vector<8x16xf32>
      %174 = arith.mulf %173, %172 : vector<8x16xf32>
      %175 = arith.truncf %162 : vector<8x8xf32> to vector<8x8xbf16>
      %176 = vector.extract_strided_slice %20 {offsets = [0, 48], sizes = [8, 16], strides = [1, 1]} : vector<8x64xf32> to vector<8x16xf32>
      %177 = arith.truncf %176 : vector<8x16xf32> to vector<8x16xbf16>
      %cst_86 = arith.constant dense<0.000000e+00> : vector<8x16xf32>
      %178 = tpu.matmul %175, %177, %cst_86 {dimension_numbers = #tpu.dot_dimension_numbers<[1], [0], [0], [1], [0, 0, 1, 1], [], []>} : vector<8x8xbf16>, vector<8x16xbf16>, vector<8x16xf32> -> vector<8x16xf32>
      %179 = arith.addf %174, %178 : vector<8x16xf32>
      %c0_87 = arith.constant 0 : index
      %c48_88 = arith.constant 48 : index
      %180 = vector.load %arg9[%c0_87, %c48_88] : memref<8x64xf32, #tpu.memory_space<vmem>>, vector<8x16xf32>
      tpu.vector_store %arg9[%c0_87, %c48_88], %179 {strides = array<i32>} : memref<8x64xf32, #tpu.memory_space<vmem>>, vector<8x16xf32>,
      %c3_89 = arith.constant 3 : index
      %c0_90 = arith.constant 0 : index
      %c0_91 = arith.constant 0 : index
      %181 = vector.load %arg7[%c3_89, %c0_90, %c0_91] : memref<4x8x1xf32, #tpu.memory_space<vmem>>, vector<1x8x1xf32>
      %182 = vector.shape_cast %181 : vector<1x8x1xf32> to vector<8x1xf32>
      %183 = vector.shape_cast %157 : vector<8x1xf32> to vector<1x8x1xf32>
      tpu.vector_store %arg7[%c3_89, %c0_90, %c0_91], %183 {strides = array<i32>} : memref<4x8x1xf32, #tpu.memory_space<vmem>>, vector<1x8x1xf32>,
    } else {
    }
    %c0_i32_4 = arith.constant 0 : i32
    %10 = arith.cmpi eq, %arg2, %c0_i32_4 : i32
    %11 = arith.extui %10 : i1 to i32
    %c0_i32_5 = arith.constant 0 : i32
    %12 = arith.cmpi ne, %11, %c0_i32_5 : i32
    scf.if %12 {
      %c0 = arith.constant 0 : index
      %c0_6 = arith.constant 0 : index
      %c0_7 = arith.constant 0 : index
      %13 = vector.load %arg8[%c0, %c0_6, %c0_7] : memref<4x8x1xf32, #tpu.memory_space<vmem>>, vector<1x8x1xf32>
      %14 = vector.shape_cast %13 : vector<1x8x1xf32> to vector<8x1xf32>
      %15 = tpu.reciprocal %14 {approx = true} : vector<8x1xf32> -> vector<8x1xf32>
      %c0_8 = arith.constant 0 : index
      %c0_9 = arith.constant 0 : index
      %16 = vector.load %arg9[%c0_8, %c0_9] : memref<8x64xf32, #tpu.memory_space<vmem>>, vector<8x16xf32>
      %17 = vector.broadcast %15 : vector<8x1xf32> to vector<8x16xf32>
      %18 = arith.mulf %16, %17 : vector<8x16xf32>
      %c0_10 = arith.constant 0 : index
      %c0_11 = arith.constant 0 : index
      %c0_12 = arith.constant 0 : index
      %19 = vector.load %arg6[%c0_10, %c0_11, %c0_12] : memref<1x8x64xf32, #tpu.memory_space<vmem>>, vector<1x8x16xf32>
      %20 = vector.shape_cast %19 : vector<1x8x16xf32> to vector<8x16xf32>
      %21 = vector.shape_cast %18 : vector<8x16xf32> to vector<1x8x16xf32>
      tpu.vector_store %arg6[%c0_10, %c0_11, %c0_12], %21 {strides = array<i32>} : memref<1x8x64xf32, #tpu.memory_space<vmem>>, vector<1x8x16xf32>,
      %c1 = arith.constant 1 : index
      %c0_13 = arith.constant 0 : index
      %c0_14 = arith.constant 0 : index
      %22 = vector.load %arg8[%c1, %c0_13, %c0_14] : memref<4x8x1xf32, #tpu.memory_space<vmem>>, vector<1x8x1xf32>
      %23 = vector.shape_cast %22 : vector<1x8x1xf32> to vector<8x1xf32>
      %24 = tpu.reciprocal %23 {approx = true} : vector<8x1xf32> -> vector<8x1xf32>
      %c0_15 = arith.constant 0 : index
      %c16 = arith.constant 16 : index
      %25 = vector.load %arg9[%c0_15, %c16] : memref<8x64xf32, #tpu.memory_space<vmem>>, vector<8x16xf32>
      %26 = vector.broadcast %24 : vector<8x1xf32> to vector<8x16xf32>
      %27 = arith.mulf %25, %26 : vector<8x16xf32>
      %c0_16 = arith.constant 0 : index
      %c0_17 = arith.constant 0 : index
      %c16_18 = arith.constant 16 : index
      %28 = vector.load %arg6[%c0_16, %c0_17, %c16_18] : memref<1x8x64xf32, #tpu.memory_space<vmem>>, vector<1x8x16xf32>
      %29 = vector.shape_cast %28 : vector<1x8x16xf32> to vector<8x16xf32>
      %30 = vector.shape_cast %27 : vector<8x16xf32> to vector<1x8x16xf32>
      tpu.vector_store %arg6[%c0_16, %c0_17, %c16_18], %30 {strides = array<i32>} : memref<1x8x64xf32, #tpu.memory_space<vmem>>, vector<1x8x16xf32>,
      %c2 = arith.constant 2 : index
      %c0_19 = arith.constant 0 : index
      %c0_20 = arith.constant 0 : index
      %31 = vector.load %arg8[%c2, %c0_19, %c0_20] : memref<4x8x1xf32, #tpu.memory_space<vmem>>, vector<1x8x1xf32>
      %32 = vector.shape_cast %31 : vector<1x8x1xf32> to vector<8x1xf32>
      %33 = tpu.reciprocal %32 {approx = true} : vector<8x1xf32> -> vector<8x1xf32>
      %c0_21 = arith.constant 0 : index
      %c32 = arith.constant 32 : index
      %34 = vector.load %arg9[%c0_21, %c32] : memref<8x64xf32, #tpu.memory_space<vmem>>, vector<8x16xf32>
      %35 = vector.broadcast %33 : vector<8x1xf32> to vector<8x16xf32>
      %36 = arith.mulf %34, %35 : vector<8x16xf32>
      %c0_22 = arith.constant 0 : index
      %c0_23 = arith.constant 0 : index
      %c32_24 = arith.constant 32 : index
      %37 = vector.load %arg6[%c0_22, %c0_23, %c32_24] : memref<1x8x64xf32, #tpu.memory_space<vmem>>, vector<1x8x16xf32>
      %38 = vector.shape_cast %37 : vector<1x8x16xf32> to vector<8x16xf32>
      %39 = vector.shape_cast %36 : vector<8x16xf32> to vector<1x8x16xf32>
      tpu.vector_store %arg6[%c0_22, %c0_23, %c32_24], %39 {strides = array<i32>} : memref<1x8x64xf32, #tpu.memory_space<vmem>>, vector<1x8x16xf32>,
      %c3 = arith.constant 3 : index
      %c0_25 = arith.constant 0 : index
      %c0_26 = arith.constant 0 : index
      %40 = vector.load %arg8[%c3, %c0_25, %c0_26] : memref<4x8x1xf32, #tpu.memory_space<vmem>>, vector<1x8x1xf32>
      %41 = vector.shape_cast %40 : vector<1x8x1xf32> to vector<8x1xf32>
      %42 = tpu.reciprocal %41 {approx = true} : vector<8x1xf32> -> vector<8x1xf32>
      %c0_27 = arith.constant 0 : index
      %c48 = arith.constant 48 : index
      %43 = vector.load %arg9[%c0_27, %c48] : memref<8x64xf32, #tpu.memory_space<vmem>>, vector<8x16xf32>
      %44 = vector.broadcast %42 : vector<8x1xf32> to vector<8x16xf32>
      %45 = arith.mulf %43, %44 : vector<8x16xf32>
      %c0_28 = arith.constant 0 : index
      %c0_29 = arith.constant 0 : index
      %c48_30 = arith.constant 48 : index
      %46 = vector.load %arg6[%c0_28, %c0_29, %c48_30] : memref<1x8x64xf32, #tpu.memory_space<vmem>>, vector<1x8x16xf32>
      %47 = vector.shape_cast %46 : vector<1x8x16xf32> to vector<8x16xf32>
      %48 = vector.shape_cast %45 : vector<8x16xf32> to vector<1x8x16xf32>
      tpu.vector_store %arg6[%c0_28, %c0_29, %c48_30], %48 {strides = array<i32>} : memref<1x8x64xf32, #tpu.memory_space<vmem>>, vector<1x8x16xf32>,
    } else {
    }
    return
  }
  func.func @transform_0(%arg0: i32, %arg1: i32, %arg2: i32) -> (i32, i32, i32) {
    %c0_i32 = arith.constant 0 : i32
    %c0_i32_0 = arith.constant 0 : i32
    return %arg0, %arg1, %c0_i32 : i32, i32, i32
  }
  func.func @transform_1(%arg0: i32, %arg1: i32, %arg2: i32) -> (i32, i32, i32) {
    %c0_i32 = arith.constant 0 : i32
    %c0_i32_0 = arith.constant 0 : i32
    return %arg0, %arg2, %c0_i32 : i32, i32, i32
  }
  func.func @transform_2(%arg0: i32, %arg1: i32, %arg2: i32) -> (i32, i32, i32) {
    %c0_i32 = arith.constant 0 : i32
    %c0_i32_0 = arith.constant 0 : i32
    return %arg0, %arg2, %c0_i32 : i32, i32, i32
  }
  func.func @transform_3(%arg0: i32, %arg1: i32, %arg2: i32) -> (i32, i32, i32) {
    %c0_i32 = arith.constant 0 : i32
    %c0_i32_0 = arith.constant 0 : i32
    return %arg0, %arg1, %c0_i32 : i32, i32, i32
  }
}

module attributes {stable_mosaic.version = 11 : i64} {
  func.func @_ffn_kernel(%arg0: i32, %arg1: i32, %arg2: memref<16x64xf32, #tpu.memory_space<vmem>>, %arg3: memref<1x64xf32, #tpu.memory_space<vmem>>, %arg4: memref<64x192xbf16, #tpu.memory_space<vmem>>, %arg5: memref<64x192xbf16, #tpu.memory_space<vmem>>, %arg6: memref<192x64xbf16, #tpu.memory_space<vmem>>, %arg7: memref<16x64xf32, #tpu.memory_space<vmem>>, %arg8: memref<16x64xbf16, #tpu.memory_space<vmem>>, %arg9: memref<16x64xf32, #tpu.memory_space<vmem>>) attributes {dimension_semantics = [#tpu.dimension_semantics<parallel>, #tpu.dimension_semantics<arbitrary>], iteration_bounds = array<i64: 1, 1>, scalar_prefetch = 0 : i64, scratch_operands = 2 : i64, tpu.core_type = #tpu.core_type<tc>, window_params = [{transform_indices = @transform_0, window_bounds = array<i64: 16, 64>}, {pipeline_mode = #tpu.pipeline_mode<synchronous>, transform_indices = @transform_1, window_bounds = array<i64: 1, 64>}, {transform_indices = @transform_2, window_bounds = array<i64: 64, 192>}, {transform_indices = @transform_3, window_bounds = array<i64: 64, 192>}, {transform_indices = @transform_4, window_bounds = array<i64: 192, 64>}, {transform_indices = @transform_5, window_bounds = array<i64: 16, 64>}]} {
    %c0_i32 = arith.constant 0 : i32
    %0 = arith.cmpi eq, %arg1, %c0_i32 : i32
    %1 = arith.extui %0 : i1 to i32
    %c0_i32_0 = arith.constant 0 : i32
    %2 = arith.cmpi ne, %1, %c0_i32_0 : i32
    scf.if %2 {
      %c0_17 = arith.constant 0 : index
      %c0_18 = arith.constant 0 : index
      %24 = vector.load %arg2[%c0_17, %c0_18] : memref<16x64xf32, #tpu.memory_space<vmem>>, vector<16x64xf32>
      %25 = arith.mulf %24, %24 : vector<16x64xf32>
      %cst_19 = arith.constant dense<0.000000e+00> : vector<16xf32>
      %26 = vector.multi_reduction <add>, %25, %cst_19 [1] : vector<16x64xf32> to vector<16xf32>
      %27 = vector.shape_cast %26 : vector<16xf32> to vector<16x1xf32>
      %cst_20 = arith.constant 6.400000e+01 : f32
      %28 = vector.broadcast %cst_20 : f32 to vector<16x1xf32>
      %29 = arith.divf %27, %28 : vector<16x1xf32>
      %cst_21 = arith.constant 9.99999974E-6 : f32
      %30 = vector.broadcast %cst_21 : f32 to vector<16x1xf32>
      %31 = arith.addf %29, %30 : vector<16x1xf32>
      %32 = math.rsqrt %31 : vector<16x1xf32>
      %33 = vector.broadcast %32 : vector<16x1xf32> to vector<16x64xf32>
      %34 = arith.mulf %24, %33 : vector<16x64xf32>
      %c0_22 = arith.constant 0 : index
      %c0_23 = arith.constant 0 : index
      %35 = vector.load %arg3[%c0_22, %c0_23] : memref<1x64xf32, #tpu.memory_space<vmem>>, vector<1x64xf32>
      %36 = vector.broadcast %35 : vector<1x64xf32> to vector<16x64xf32>
      %37 = arith.mulf %34, %36 : vector<16x64xf32>
      %38 = arith.truncf %37 : vector<16x64xf32> to vector<16x64xbf16>
      %c0_24 = arith.constant 0 : index
      %c0_25 = arith.constant 0 : index
      %39 = vector.load %arg8[%c0_24, %c0_25] : memref<16x64xbf16, #tpu.memory_space<vmem>>, vector<16x64xbf16>
      tpu.vector_store %arg8[%c0_24, %c0_25], %38 {strides = array<i32>} : memref<16x64xbf16, #tpu.memory_space<vmem>>, vector<16x64xbf16>,
      %cst_26 = arith.constant 0.000000e+00 : f32
      %40 = vector.broadcast %cst_26 : f32 to vector<16x64xf32>
      %c0_27 = arith.constant 0 : index
      %c0_28 = arith.constant 0 : index
      %41 = vector.load %arg9[%c0_27, %c0_28] : memref<16x64xf32, #tpu.memory_space<vmem>>, vector<16x64xf32>
      tpu.vector_store %arg9[%c0_27, %c0_28], %40 {strides = array<i32>} : memref<16x64xf32, #tpu.memory_space<vmem>>, vector<16x64xf32>,
    } else {
    }
    %c0 = arith.constant 0 : index
    %c0_1 = arith.constant 0 : index
    %3 = vector.load %arg8[%c0, %c0_1] : memref<16x64xbf16, #tpu.memory_space<vmem>>, vector<16x64xbf16>
    %c0_2 = arith.constant 0 : index
    %c0_3 = arith.constant 0 : index
    %4 = vector.load %arg4[%c0_2, %c0_3] : memref<64x192xbf16, #tpu.memory_space<vmem>>, vector<64x192xbf16>
    %cst = arith.constant dense<0.000000e+00> : vector<16x192xf32>
    %5 = tpu.matmul %3, %4, %cst {dimension_numbers = #tpu.dot_dimension_numbers<[1], [0], [0], [1], [0, 0, 1, 1], [], []>} : vector<16x64xbf16>, vector<64x192xbf16>, vector<16x192xf32> -> vector<16x192xf32>
    %c0_4 = arith.constant 0 : index
    %c0_5 = arith.constant 0 : index
    %6 = vector.load %arg5[%c0_4, %c0_5] : memref<64x192xbf16, #tpu.memory_space<vmem>>, vector<64x192xbf16>
    %cst_6 = arith.constant dense<0.000000e+00> : vector<16x192xf32>
    %7 = tpu.matmul %3, %6, %cst_6 {dimension_numbers = #tpu.dot_dimension_numbers<[1], [0], [0], [1], [0, 0, 1, 1], [], []>} : vector<16x64xbf16>, vector<64x192xbf16>, vector<16x192xf32> -> vector<16x192xf32>
    %8 = arith.negf %5 : vector<16x192xf32>
    %9 = math.exp %8 : vector<16x192xf32>
    %cst_7 = arith.constant 1.000000e+00 : f32
    %10 = vector.broadcast %cst_7 : f32 to vector<16x192xf32>
    %11 = arith.addf %10, %9 : vector<16x192xf32>
    %12 = arith.divf %10, %11 : vector<16x192xf32>
    %13 = arith.mulf %5, %12 : vector<16x192xf32>
    %14 = arith.mulf %13, %7 : vector<16x192xf32>
    %c0_8 = arith.constant 0 : index
    %c0_9 = arith.constant 0 : index
    %15 = vector.load %arg9[%c0_8, %c0_9] : memref<16x64xf32, #tpu.memory_space<vmem>>, vector<16x64xf32>
    %16 = arith.truncf %14 : vector<16x192xf32> to vector<16x192xbf16>
    %c0_10 = arith.constant 0 : index
    %c0_11 = arith.constant 0 : index
    %17 = vector.load %arg6[%c0_10, %c0_11] : memref<192x64xbf16, #tpu.memory_space<vmem>>, vector<192x64xbf16>
    %cst_12 = arith.constant dense<0.000000e+00> : vector<16x64xf32>
    %18 = tpu.matmul %16, %17, %cst_12 {dimension_numbers = #tpu.dot_dimension_numbers<[1], [0], [0], [1], [0, 0, 1, 1], [], []>} : vector<16x192xbf16>, vector<192x64xbf16>, vector<16x64xf32> -> vector<16x64xf32>
    %19 = arith.addf %15, %18 : vector<16x64xf32>
    %c0_13 = arith.constant 0 : index
    %c0_14 = arith.constant 0 : index
    %20 = vector.load %arg9[%c0_13, %c0_14] : memref<16x64xf32, #tpu.memory_space<vmem>>, vector<16x64xf32>
    tpu.vector_store %arg9[%c0_13, %c0_14], %19 {strides = array<i32>} : memref<16x64xf32, #tpu.memory_space<vmem>>, vector<16x64xf32>,
    %c0_i32_15 = arith.constant 0 : i32
    %21 = arith.cmpi eq, %arg1, %c0_i32_15 : i32
    %22 = arith.extui %21 : i1 to i32
    %c0_i32_16 = arith.constant 0 : i32
    %23 = arith.cmpi ne, %22, %c0_i32_16 : i32
    scf.if %23 {
      %c0_17 = arith.constant 0 : index
      %c0_18 = arith.constant 0 : index
      %24 = vector.load %arg9[%c0_17, %c0_18] : memref<16x64xf32, #tpu.memory_space<vmem>>, vector<16x64xf32>
      %c0_19 = arith.constant 0 : index
      %c0_20 = arith.constant 0 : index
      %25 = vector.load %arg7[%c0_19, %c0_20] : memref<16x64xf32, #tpu.memory_space<vmem>>, vector<16x64xf32>
      tpu.vector_store %arg7[%c0_19, %c0_20], %24 {strides = array<i32>} : memref<16x64xf32, #tpu.memory_space<vmem>>, vector<16x64xf32>,
    } else {
    }
    return
  }
  func.func @transform_0(%arg0: i32, %arg1: i32) -> (i32, i32) {
    %c0_i32 = arith.constant 0 : i32
    %c0_i32_0 = arith.constant 0 : i32
    return %arg0, %c0_i32 : i32, i32
  }
  func.func @transform_1(%arg0: i32, %arg1: i32) -> (i32, i32) {
    %c0_i32 = arith.constant 0 : i32
    %c0_i32_0 = arith.constant 0 : i32
    %c0_i32_1 = arith.constant 0 : i32
    return %c0_i32, %c0_i32_0 : i32, i32
  }
  func.func @transform_2(%arg0: i32, %arg1: i32) -> (i32, i32) {
    %c0_i32 = arith.constant 0 : i32
    %c0_i32_0 = arith.constant 0 : i32
    return %c0_i32, %arg1 : i32, i32
  }
  func.func @transform_3(%arg0: i32, %arg1: i32) -> (i32, i32) {
    %c0_i32 = arith.constant 0 : i32
    %c0_i32_0 = arith.constant 0 : i32
    return %c0_i32, %arg1 : i32, i32
  }
  func.func @transform_4(%arg0: i32, %arg1: i32) -> (i32, i32) {
    %c0_i32 = arith.constant 0 : i32
    %c0_i32_0 = arith.constant 0 : i32
    return %arg1, %c0_i32 : i32, i32
  }
  func.func @transform_5(%arg0: i32, %arg1: i32) -> (i32, i32) {
    %c0_i32 = arith.constant 0 : i32
    %c0_i32_0 = arith.constant 0 : i32
    return %arg0, %c0_i32 : i32, i32
  }
}

module attributes {stable_mosaic.version = 11 : i64} {
  func.func @_rms_matmul_kernel(%arg0: i32, %arg1: i32, %arg2: memref<16x64xf32, #tpu.memory_space<vmem>>, %arg3: memref<1x64xf32, #tpu.memory_space<vmem>>, %arg4: memref<64x256xbf16, #tpu.memory_space<vmem>>, %arg5: memref<16x256xf32, #tpu.memory_space<vmem>>) attributes {dimension_semantics = [#tpu.dimension_semantics<parallel>, #tpu.dimension_semantics<parallel>], iteration_bounds = array<i64: 1, 1>, scalar_prefetch = 0 : i64, scratch_operands = 0 : i64, tpu.core_type = #tpu.core_type<tc>, window_params = [{transform_indices = @transform_0, window_bounds = array<i64: 16, 64>}, {pipeline_mode = #tpu.pipeline_mode<synchronous>, transform_indices = @transform_1, window_bounds = array<i64: 1, 64>}, {transform_indices = @transform_2, window_bounds = array<i64: 64, 256>}, {transform_indices = @transform_3, window_bounds = array<i64: 16, 256>}]} {
    %c0 = arith.constant 0 : index
    %c0_0 = arith.constant 0 : index
    %0 = vector.load %arg2[%c0, %c0_0] : memref<16x64xf32, #tpu.memory_space<vmem>>, vector<16x64xf32>
    %1 = arith.mulf %0, %0 : vector<16x64xf32>
    %cst = arith.constant dense<0.000000e+00> : vector<16xf32>
    %2 = vector.multi_reduction <add>, %1, %cst [1] : vector<16x64xf32> to vector<16xf32>
    %3 = vector.shape_cast %2 : vector<16xf32> to vector<16x1xf32>
    %cst_1 = arith.constant 6.400000e+01 : f32
    %4 = vector.broadcast %cst_1 : f32 to vector<16x1xf32>
    %5 = arith.divf %3, %4 : vector<16x1xf32>
    %cst_2 = arith.constant 9.99999974E-6 : f32
    %6 = vector.broadcast %cst_2 : f32 to vector<16x1xf32>
    %7 = arith.addf %5, %6 : vector<16x1xf32>
    %8 = math.rsqrt %7 : vector<16x1xf32>
    %9 = vector.broadcast %8 : vector<16x1xf32> to vector<16x64xf32>
    %10 = arith.mulf %0, %9 : vector<16x64xf32>
    %c0_3 = arith.constant 0 : index
    %c0_4 = arith.constant 0 : index
    %11 = vector.load %arg3[%c0_3, %c0_4] : memref<1x64xf32, #tpu.memory_space<vmem>>, vector<1x64xf32>
    %12 = vector.broadcast %11 : vector<1x64xf32> to vector<16x64xf32>
    %13 = arith.mulf %10, %12 : vector<16x64xf32>
    %14 = arith.truncf %13 : vector<16x64xf32> to vector<16x64xbf16>
    %c0_5 = arith.constant 0 : index
    %c0_6 = arith.constant 0 : index
    %15 = vector.load %arg4[%c0_5, %c0_6] : memref<64x256xbf16, #tpu.memory_space<vmem>>, vector<64x256xbf16>
    %cst_7 = arith.constant dense<0.000000e+00> : vector<16x256xf32>
    %16 = tpu.matmul %14, %15, %cst_7 {dimension_numbers = #tpu.dot_dimension_numbers<[1], [0], [0], [1], [0, 0, 1, 1], [], []>} : vector<16x64xbf16>, vector<64x256xbf16>, vector<16x256xf32> -> vector<16x256xf32>
    %c0_8 = arith.constant 0 : index
    %c0_9 = arith.constant 0 : index
    %17 = vector.load %arg5[%c0_8, %c0_9] : memref<16x256xf32, #tpu.memory_space<vmem>>, vector<16x256xf32>
    tpu.vector_store %arg5[%c0_8, %c0_9], %16 {strides = array<i32>} : memref<16x256xf32, #tpu.memory_space<vmem>>, vector<16x256xf32>,
    return
  }
  func.func @transform_0(%arg0: i32, %arg1: i32) -> (i32, i32) {
    %c0_i32 = arith.constant 0 : i32
    %c0_i32_0 = arith.constant 0 : i32
    return %arg0, %c0_i32 : i32, i32
  }
  func.func @transform_1(%arg0: i32, %arg1: i32) -> (i32, i32) {
    %c0_i32 = arith.constant 0 : i32
    %c0_i32_0 = arith.constant 0 : i32
    %c0_i32_1 = arith.constant 0 : i32
    return %c0_i32, %c0_i32_0 : i32, i32
  }
  func.func @transform_2(%arg0: i32, %arg1: i32) -> (i32, i32) {
    %c0_i32 = arith.constant 0 : i32
    %c0_i32_0 = arith.constant 0 : i32
    return %c0_i32, %arg1 : i32, i32
  }
  func.func @transform_3(%arg0: i32, %arg1: i32) -> (i32, i32) {
    %c0_i32 = arith.constant 0 : i32
    return %arg0, %arg1 : i32, i32
  }
}

</mosaic_0001>

<llo_original>
// kernel: _lambda_.9
$region0: #{_lambda_.9}
  #allocation0 [shape = 'u32[]', space=smem, size = 0x4, offset = 0x4, fixed_abs, tag = 'smem constant byte address 0x4 - core index']
  #allocation1 [shape = 'u32[144,128]{1,0:T(1,128)}', space=vmem, size = 0x12000, scoped, tag = 'internal scratch']
  %s0 = inlined_call_operand.hbm [shape: f32[16,64], index: 0, kind: input, shape index: {}]
  %s1 = inlined_call_operand.hbm [shape: f32[1,64], index: 1, kind: input, shape index: {}]
  %s2 = inlined_call_operand.hbm [shape: bf16[64,192], index: 2, kind: input, shape index: {}]
  %s3 = inlined_call_operand.hbm [shape: f32[16,192], index: 3, kind: output, shape index: {}]
  %s4 = sld [smem:[#allocation0]]
  $region34: #{_lambda_.9} parent=0
    _
  %s6 = ssub.s32 1, %s4
  %s7 = scalar_select 0, %s6, %s4
  $region1: #{_lambda_.9} parent=0
    #allocation2 [shape = 'u8[8192]{0}', space=vmem, size = 0x2000, scoped, tag = 'input window, operand 0, single buffered']
    #allocation3 [shape = 's32[1]{0}', space=sflag, size = 0x4, scoped, tag = 'scoped memory for _lambda_.9']
    #allocation4 [shape = 's32[1]{0}', space=sflag, size = 0x4, scoped, tag = 'scoped memory for _lambda_.9']
    #allocation5 [shape = 'u8[512]{0}', space=vmem, size = 0x400, scoped, tag = 'input window, operand 1, single buffered']
    #allocation6 [shape = 's32[1]{0}', space=sflag, size = 0x4, scoped, tag = 'scoped memory for _lambda_.9']
    #allocation7 [shape = 'u8[32768]{0}', space=vmem, size = 0x8000, scoped, tag = 'input window, operand 2, single buffered']
    #allocation8 [shape = 'u8[16384]{0}', space=vmem, size = 0x4000, scoped, tag = 'output window, operand 0, single buffered']
    %8 = vsyncpa [#allocation3], 0
    %9 = vsyncpa [#allocation6], 0
    %10 = vsyncpa [#allocation4], 0
    // Predicated region
    $region2: #{_lambda_.9} parent=1 // pred_check
      _
    $region3: #{_lambda_.9} parent=1 // pred_check_branch
      %12 = sbr.rel (0) target = $region5
    $region4: #{_lambda_.9} parent=1 // pred_region
      %s14 = ssub.s32 256, 256
      %15 = vsyncadd [#allocation3], %s14
      %s16 = sshll.u32 [#allocation2], 4
      %s17 = int_to_ptr.vmem [resolvable:$true] %s16
      %22 = dma.hbm_to_vmem [thread:$0]  %s0, 256, %s17, [#allocation3], 128, 128, 8
    $region5: #{_lambda_.9} parent=1 // pred_fallthru
      _
    // Predicated region
    $region6: #{_lambda_.9} parent=1 // pred_check
      _
    $region7: #{_lambda_.9} parent=1 // pred_check_branch
      %24 = sbr.rel (0) target = $region9
    $region8: #{_lambda_.9} parent=1 // pred_region
      %s26 = ssub.s32 16, 16
      %27 = vsyncadd [#allocation6], %s26
      %s29 = sshll.u32 [#allocation5], 4
      %s30 = int_to_ptr.vmem [resolvable:$true] %s29
      %32 = dma.hbm_to_vmem [thread:$0]  %s1, 16, %s30, [#allocation6]
    $region9: #{_lambda_.9} parent=1 // pred_fallthru
      _
    // Predicated region
    $region10: #{_lambda_.9} parent=1 // pred_check
      _
    $region11: #{_lambda_.9} parent=1 // pred_check_branch
      %34 = sbr.rel (0) target = $region13
    $region12: #{_lambda_.9} parent=1 // pred_region
      %s36 = ssub.s32 1024, 1024
      %37 = vsyncadd [#allocation6], %s36
      %s38 = sshll.u32 [#allocation7], 4
      %s39 = int_to_ptr.vmem [resolvable:$true] %s38
      %44 = dma.hbm_to_vmem [thread:$0]  %s2, 1024, %s39, [#allocation6], 128, 128, 8
    $region13: #{_lambda_.9} parent=1 // pred_fallthru
      _
    // Predicated region
    $region14: #{_lambda_.9} parent=1 // pred_check
      _
    $region15: #{_lambda_.9} parent=1 // pred_check_branch
      %46 = sbr.rel (0) target = $region17
    $region16: #{_lambda_.9} parent=1 // pred_region
      %47 = dma.done [#allocation3], 256
    $region17: #{_lambda_.9} parent=1 // pred_fallthru
      _
    // Predicated region
    $region18: #{_lambda_.9} parent=1 // pred_check
      _
    $region19: #{_lambda_.9} parent=1 // pred_check_branch
      %49 = sbr.rel (0) target = $region21
    $region20: #{_lambda_.9} parent=1 // pred_region
      %50 = dma.done [#allocation6], 16
    $region21: #{_lambda_.9} parent=1 // pred_fallthru
      _
    // Predicated region
    $region22: #{_lambda_.9} parent=1 // pred_check
      _
    $region23: #{_lambda_.9} parent=1 // pred_check_branch
      %52 = sbr.rel (0) target = $region25
    $region24: #{_lambda_.9} parent=1 // pred_region
      %53 = dma.done [#allocation6], 1024
    $region25: #{_lambda_.9} parent=1 // pred_fallthru
      _
    %v55 = vld [vmem:[#allocation2] sm:$0xff]
    %v56 = vld [vmem:[#allocation2 + $0x8] sm:$0xff]
    %v57 = vmul.f32 %v55, %v55
    %v58 = vmul.f32 %v56, %v56
    %vm59 = vcmask 523264
    %v60 = vsel %vm59, %v57, 0.0
    %61 = vadd.xlane.f32.xlu0 %v60
    %v62 = vpop.xlane.xlu0 %61
    %v63 = vsel %vm59, %v58, 0.0
    %64 = vadd.xlane.f32.xlu0 %v63
    %v65 = vpop.xlane.xlu0 %64
    %v66 = vrcp.pop 64.0
    %v67 = vmul.f32 %v62, %v66
    %v68 = vmul.f32 %v65, %v66
    %v69 = vadd.f32 %v67, 1e-05
    %v70 = vadd.f32 %v68, 1e-05
    %v71 = vrsqrt.pop %v69
    %v72 = vrsqrt.pop %v70
    %v73 = vmul.f32 %v55, %v71
    %v74 = vmul.f32 %v56, %v72
    %v75 = vld [vmem:[#allocation5] sm:$0x1]
    %v77 = vlaneseq
    %v78 = vshrl.u32 %v77, 7
    %v79 = vsub.s32 0, %v78
    %v80 = vrot.slane %v75, %v79
    %v82 = vmul.f32 %v73, %v80
    %v83 = vmul.f32 %v74, %v80
    %v84 = vpack.c.bf16 %v83, %v82
    %v85 = vld [vmem:[#allocation7] sm:$0xff]
    %v86 = vld [vmem:[#allocation7 + $0x8] sm:$0xff]
    %v87 = vld [vmem:[#allocation7 + $0x10] sm:$0xff]
    %v88 = vld [vmem:[#allocation7 + $0x18] sm:$0xff]
    %v89 = vld [vmem:[#allocation7 + $0x20] sm:$0xff]
    %v90 = vld [vmem:[#allocation7 + $0x28] sm:$0xff]
    %v91 = vld [vmem:[#allocation7 + $0x30] sm:$0xff]
    %v92 = vld [vmem:[#allocation7 + $0x38] sm:$0xff]
    %v101 = vunpack.c.l.b16 %v85
    %v102 = vunpack.c.h.b16 %v85
    %v103 = vunpack.c.l.b16 %v86
    %v104 = vunpack.c.h.b16 %v86
    %v105 = vunpack.c.l.b16 %v87
    %v106 = vunpack.c.h.b16 %v87
    %v107 = vunpack.c.l.b16 %v88
    %v108 = vunpack.c.h.b16 %v88
    %v109 = vunpack.c.l.b16 %v89
    %v110 = vunpack.c.h.b16 %v89
    %v111 = vunpack.c.l.b16 %v90
    %v112 = vunpack.c.h.b16 %v90
    %v113 = vunpack.c.l.b16 %v91
    %v114 = vunpack.c.h.b16 %v91
    %v115 = vunpack.c.l.b16 %v92
    %v116 = vunpack.c.h.b16 %v92
    %v117 = vpack.c.b16 %v103, %v101
    %v118 = vpack.c.b16 %v104, %v102
    %v119 = vpack.c.b16 %v107, %v105
    %v120 = vpack.c.b16 %v108, %v106
    %v121 = vpack.c.b16 %v111, %v109
    %v122 = vpack.c.b16 %v112, %v110
    %v123 = vpack.c.b16 %v115, %v113
    %v124 = vpack.c.b16 %v116, %v114
    %v134 = vsel %vm59, %v84, 0
    %136 = vmatprep.subr.bf16.mxu0 %v118
    %137 = vmatpush1.bf16.msra.mxu0 %v117
    %138 = vmatprep.subr.bf16.mxu0 %v120
    %139 = vmatpush1.bf16.msra.mxu0 %v119
    %140 = vmatprep.subr.bf16.mxu0 %v122
    %141 = vmatpush1.bf16.msra.mxu0 %v121
    %142 = vmatprep.subr.bf16.mxu0 %v124
    %143 = vmatpush1.bf16.msra.mxu0 %v123
    %144 = vmatprep.subr.bf16.mxu0 0
    %145 = vmatpush1.bf16.msra.mxu0 0
    %146 = vmatprep.subr.bf16.mxu0 0
    %147 = vmatpush1.bf16.msra.mxu0 0
    %148 = vmatprep.subr.bf16.mxu0 0
    %149 = vmatpush1.bf16.msra.mxu0 0
    %150 = vmatprep.subr.bf16.mxu0 0
    %151 = vmatpush1.bf16.msra.mxu0 0
    %152 = vmatprep.subr.bf16.mxu0 0
    %153 = vmatpush1.bf16.msra.mxu0 0
    %154 = vmatprep.subr.bf16.mxu0 0
    %155 = vmatpush1.bf16.msra.mxu0 0
    %156 = vmatprep.subr.bf16.mxu0 0
    %157 = vmatpush1.bf16.msra.mxu0 0
    %158 = vmatprep.subr.bf16.mxu0 0
    %159 = vmatpush1.bf16.msra.mxu0 0
    %160 = vmatprep.subr.bf16.mxu0 0
    %161 = vmatpush1.bf16.msra.mxu0 0
    %162 = vmatprep.subr.bf16.mxu0 0
    %163 = vmatpush1.bf16.msra.mxu0 0
    %164 = vmatprep.subr.bf16.mxu0 0
    %165 = vmatpush1.bf16.msra.mxu0 0
    %166 = vmatprep.subr.bf16.mxu0 0
    %167 = vmatpush1.bf16.msra.mxu0 0
    %168 = vmatprep.mubr.bf16.mxu0 0
    %169 = vmatmul.mubr.bf16.gmra.mrb[0].mxu0 %v134
    %v170 = vpop.f32.mrb[0].mxu0
    %v171 = vadd.f32 0.0, %v170
    %v172 = vpop.f32.mrb[0].mxu0
    %v173 = vadd.f32 0.0, %v172
    %v174 = vpop.f32.mrb[0].mxu0
    %v175 = vadd.f32 0.0, %v174
    %v176 = vpop.f32.mrb[0].mxu0
    %v177 = vadd.f32 0.0, %v176
    %178 = vdwg.mxu0
    %179 = vst [vmem:[#allocation8] sm:$0xff] %v171
    %180 = vst.msk [vmem:[#allocation8 + $0x8] sm:$0xff] %vm59, %v173
    %181 = vst [vmem:[#allocation8 + $0x10] sm:$0xff] %v175
    %182 = vst.msk [vmem:[#allocation8 + $0x18] sm:$0xff] %vm59, %v177
    // Predicated region
    $region26: #{_lambda_.9} parent=1 // pred_check
      _
    $region27: #{_lambda_.9} parent=1 // pred_check_branch
      %184 = sbr.rel (0) target = $region29
    $region28: #{_lambda_.9} parent=1 // pred_region
      %s186 = ssub.s32 512, 512
      %187 = vsyncadd [#allocation4], %s186
      %s188 = sshll.u32 [#allocation8], 4
      %s189 = int_to_ptr.vmem [resolvable:$true] %s188
      %194 = dma.vmem_to_hbm [thread:$0]  %s189, 512, %s3, [#allocation4], 256, 256, 16
    $region29: #{_lambda_.9} parent=1 // pred_fallthru
      _
    // Predicated region
    $region30: #{_lambda_.9} parent=1 // pred_check
      _
    $region31: #{_lambda_.9} parent=1 // pred_check_branch
      %196 = sbr.rel (0) target = $region33
    $region32: #{_lambda_.9} parent=1 // pred_region
      %197 = dma.done [#allocation4], 512
    $region33: #{_lambda_.9} parent=1 // pred_fallthru
      _
    %198 = vsyncpa [#allocation3], 1
    %199 = vsyncpa [#allocation6], 1
    %200 = vsyncpa [#allocation4], 1

// kernel: _lambda_.11
$region0: #{_lambda_.11}
  #allocation0 [shape = 'u32[]', space=smem, size = 0x4, offset = 0x4, fixed_abs, tag = 'smem constant byte address 0x4 - core index']
  #allocation1 [shape = 'u32[144,128]{1,0:T(1,128)}', space=vmem, size = 0x12000, scoped, tag = 'internal scratch']
  #allocation2 [shape = 'f32[16,64]{1,0:T(8,128)}', space=vmem, size = 0x2000, scoped, tag = 'scratch operand']
  %s0 = inlined_call_operand.hbm [shape: f32[16,64], index: 0, kind: input, shape index: {}]
  %s1 = inlined_call_operand.hbm [shape: bf16[64,64], index: 1, kind: input, shape index: {}]
  %s2 = inlined_call_operand.hbm [shape: f32[16,64], index: 2, kind: output, shape index: {}]
  %s3 = sld [smem:[#allocation0]]
  $region34: #{_lambda_.11} parent=0
    _
  %s5 = ssub.s32 1, %s3
  %s6 = scalar_select 0, %s5, %s3
  $region1: #{_lambda_.11} parent=0
    #allocation3 [shape = 'u8[8192]{0}', space=vmem, size = 0x2000, scoped, tag = 'input window, operand 0, single buffered']
    #allocation4 [shape = 's32[1]{0}', space=sflag, size = 0x4, scoped, tag = 'scoped memory for _lambda_.11']
    #allocation5 [shape = 's32[1]{0}', space=sflag, size = 0x4, scoped, tag = 'scoped memory for _lambda_.11']
    #allocation6 [shape = 'u8[16384]{0}', space=vmem, size = 0x4000, scoped, tag = 'input window, operand 1, single buffered']
    #allocation7 [shape = 's32[1]{0}', space=sflag, size = 0x4, scoped, tag = 'scoped memory for _lambda_.11']
    #allocation8 [shape = 'u8[8192]{0}', space=vmem, size = 0x2000, scoped, tag = 'output window, operand 0, single buffered']
    %7 = vsyncpa [#allocation4], 0
    %8 = vsyncpa [#allocation7], 0
    %9 = vsyncpa [#allocation5], 0
    // Predicated region
    $region2: #{_lambda_.11} parent=1 // pred_check
      _
    $region3: #{_lambda_.11} parent=1 // pred_check_branch
      %11 = sbr.rel (0) target = $region5
    $region4: #{_lambda_.11} parent=1 // pred_region
      %s13 = ssub.s32 256, 256
      %14 = vsyncadd [#allocation4], %s13
      %s15 = sshll.u32 [#allocation3], 4
      %s16 = int_to_ptr.vmem [resolvable:$true] %s15
      %21 = dma.hbm_to_vmem [thread:$0]  %s0, 256, %s16, [#allocation4], 128, 128, 8
    $region5: #{_lambda_.11} parent=1 // pred_fallthru
      _
    // Predicated region
    $region6: #{_lambda_.11} parent=1 // pred_check
      _
    $region7: #{_lambda_.11} parent=1 // pred_check_branch
      %23 = sbr.rel (0) target = $region9
    $region8: #{_lambda_.11} parent=1 // pred_region
      %s25 = ssub.s32 512, 512
      %26 = vsyncadd [#allocation7], %s25
      %s27 = sshll.u32 [#allocation6], 4
      %s28 = int_to_ptr.vmem [resolvable:$true] %s27
      %33 = dma.hbm_to_vmem [thread:$0]  %s1, 512, %s28, [#allocation7], 64, 64, 4
    $region9: #{_lambda_.11} parent=1 // pred_fallthru
      _
    // Predicated region
    $region10: #{_lambda_.11} parent=1 // pred_check
      _
    $region11: #{_lambda_.11} parent=1 // pred_check_branch
      %35 = sbr.rel (0) target = $region13
    $region12: #{_lambda_.11} parent=1 // pred_region
      %36 = dma.done [#allocation4], 256
    $region13: #{_lambda_.11} parent=1 // pred_fallthru
      _
    // Predicated region
    $region14: #{_lambda_.11} parent=1 // pred_check
      _
    $region15: #{_lambda_.11} parent=1 // pred_check_branch
      %38 = sbr.rel (0) target = $region17
    $region16: #{_lambda_.11} parent=1 // pred_region
      %39 = dma.done [#allocation7], 512
    $region17: #{_lambda_.11} parent=1 // pred_fallthru
      _
    %p41 = scmp.eq.s32.totalorder 0, 0
    // Predicated region
    $region18: #{_lambda_.11} parent=1 // pred_check
      %p42 = pneg %p41
    $region19: #{_lambda_.11} parent=1 // pred_check_branch
      %44 = sbr.rel (%p42) target = $region21
    $region20: #{_lambda_.11} parent=1 // pred_region
      %vm45 = vcmask 523264
      %46 = vst.msk [vmem:[#allocation2] sm:$0xff] %vm45, 0.0
      %47 = vst.msk [vmem:[#allocation2 + $0x8] sm:$0xff] %vm45, 0.0
    $region21: #{_lambda_.11} parent=1 // pred_fallthru
      _
    %v48 = vld [vmem:[#allocation2] sm:$0xff]
    %v49 = vld [vmem:[#allocation2 + $0x8] sm:$0xff]
    %v50 = vld [vmem:[#allocation3] sm:$0xff]
    %v51 = vld [vmem:[#allocation3 + $0x8] sm:$0xff]
    %v52 = vpack.c.bf16 %v51, %v50
    %v53 = vld [vmem:[#allocation6] sm:$0xf]
    %v54 = vld [vmem:[#allocation6 + $0x4] sm:$0xf]
    %v55 = vld [vmem:[#allocation6 + $0x8] sm:$0xf]
    %v56 = vld [vmem:[#allocation6 + $0xc] sm:$0xf]
    %v57 = vld [vmem:[#allocation6 + $0x10] sm:$0xf]
    %v58 = vld [vmem:[#allocation6 + $0x14] sm:$0xf]
    %v59 = vld [vmem:[#allocation6 + $0x18] sm:$0xf]
    %v60 = vld [vmem:[#allocation6 + $0x1c] sm:$0xf]
    %v69 = vunpack.c.l.b16 %v53
    %v70 = vunpack.c.l.b16 %v54
    %v71 = vunpack.c.l.b16 %v55
    %v72 = vunpack.c.l.b16 %v56
    %v73 = vunpack.c.l.b16 %v57
    %v74 = vunpack.c.l.b16 %v58
    %v75 = vunpack.c.l.b16 %v59
    %v76 = vunpack.c.l.b16 %v60
    %v77 = vpack.c.b16 %v70, %v69
    %v78 = vpack.c.b16 %v72, %v71
    %v79 = vpack.c.b16 %v74, %v73
    %v80 = vpack.c.b16 %v76, %v75
    %vm85 = vcmask 523264
    %v87 = vsel %vm85, %v52, 0
    %89 = vmatprep.subr.bf16.mxu0 0
    %90 = vmatpush1.bf16.msra.mxu0 %v77
    %91 = vmatprep.subr.bf16.mxu0 0
    %92 = vmatpush1.bf16.msra.mxu0 %v78
    %93 = vmatprep.subr.bf16.mxu0 0
    %94 = vmatpush1.bf16.msra.mxu0 %v79
    %95 = vmatprep.subr.bf16.mxu0 0
    %96 = vmatpush1.bf16.msra.mxu0 %v80
    %97 = vmatprep.subr.bf16.mxu0 0
    %98 = vmatpush1.bf16.msra.mxu0 0
    %99 = vmatprep.subr.bf16.mxu0 0
    %100 = vmatpush1.bf16.msra.mxu0 0
    %101 = vmatprep.subr.bf16.mxu0 0
    %102 = vmatpush1.bf16.msra.mxu0 0
    %103 = vmatprep.subr.bf16.mxu0 0
    %104 = vmatpush1.bf16.msra.mxu0 0
    %105 = vmatprep.subr.bf16.mxu0 0
    %106 = vmatpush1.bf16.msra.mxu0 0
    %107 = vmatprep.subr.bf16.mxu0 0
    %108 = vmatpush1.bf16.msra.mxu0 0
    %109 = vmatprep.subr.bf16.mxu0 0
    %110 = vmatpush1.bf16.msra.mxu0 0
    %111 = vmatprep.subr.bf16.mxu0 0
    %112 = vmatpush1.bf16.msra.mxu0 0
    %113 = vmatprep.subr.bf16.mxu0 0
    %114 = vmatpush1.bf16.msra.mxu0 0
    %115 = vmatprep.subr.bf16.mxu0 0
    %116 = vmatpush1.bf16.msra.mxu0 0
    %117 = vmatprep.subr.bf16.mxu0 0
    %118 = vmatpush1.bf16.msra.mxu0 0
    %119 = vmatprep.subr.bf16.mxu0 0
    %120 = vmatpush1.bf16.msra.mxu0 0
    %121 = vmatprep.mubr.bf16.mxu0 0
    %122 = vmatmul.mubr.bf16.gmra.mrb[0].mxu0 %v87
    %v123 = vpop.f32.mrb[0].mxu0
    %v124 = vadd.f32 0.0, %v123
    %v125 = vpop.f32.mrb[0].mxu0
    %v126 = vpop.f32.mrb[0].mxu0
    %v127 = vadd.f32 0.0, %v126
    %v128 = vpop.f32.mrb[0].mxu0
    %129 = vdwg.mxu0
    %v130 = vadd.f32 %v48, %v124
    %v131 = vadd.f32 %v49, %v127
    %132 = vst.msk [vmem:[#allocation2] sm:$0xff] %vm85, %v130
    %133 = vst.msk [vmem:[#allocation2 + $0x8] sm:$0xff] %vm85, %v131
    // Predicated region
    $region22: #{_lambda_.11} parent=1 // pred_check
      %p134 = pneg %p41
    $region23: #{_lambda_.11} parent=1 // pred_check_branch
      %136 = sbr.rel (%p134) target = $region25
    $region24: #{_lambda_.11} parent=1 // pred_region
      %v137 = vld [vmem:[#allocation2] sm:$0xff]
      %v138 = vld [vmem:[#allocation2 + $0x8] sm:$0xff]
      %139 = vst.msk [vmem:[#allocation8] sm:$0xff] %vm85, %v137
      %140 = vst.msk [vmem:[#allocation8 + $0x8] sm:$0xff] %vm85, %v138
    $region25: #{_lambda_.11} parent=1 // pred_fallthru
      _
    // Predicated region
    $region26: #{_lambda_.11} parent=1 // pred_check
      _
    $region27: #{_lambda_.11} parent=1 // pred_check_branch
      %142 = sbr.rel (0) target = $region29
    $region28: #{_lambda_.11} parent=1 // pred_region
      %s144 = ssub.s32 256, 256
      %145 = vsyncadd [#allocation5], %s144
      %s146 = sshll.u32 [#allocation8], 4
      %s147 = int_to_ptr.vmem [resolvable:$true] %s146
      %152 = dma.vmem_to_hbm [thread:$0]  %s147, 256, %s2, [#allocation5], 128, 128, 8
    $region29: #{_lambda_.11} parent=1 // pred_fallthru
      _
    // Predicated region
    $region30: #{_lambda_.11} parent=1 // pred_check
      _
    $region31: #{_lambda_.11} parent=1 // pred_check_branch
      %154 = sbr.rel (0) target = $region33
    $region32: #{_lambda_.11} parent=1 // pred_region
      %155 = dma.done [#allocation5], 256
    $region33: #{_lambda_.11} parent=1 // pred_fallthru
      _
    %156 = vsyncpa [#allocation4], 1
    %157 = vsyncpa [#allocation7], 1
    %158 = vsyncpa [#allocation5], 1

// kernel: _lambda_.10
$region0: #{_lambda_.10}
  #allocation0 [shape = 'u32[]', space=smem, size = 0x4, offset = 0x4, fixed_abs, tag = 'smem constant byte address 0x4 - core index']
  #allocation1 [shape = 'u32[144,128]{1,0:T(1,128)}', space=vmem, size = 0x12000, scoped, tag = 'internal scratch']
  #allocation2 [shape = 'f32[4,8,1]{2,1,0:T(8,128)}', space=vmem, size = 0x4000, scoped, tag = 'scratch operand']
  #allocation3 [shape = 'f32[4,8,1]{2,1,0:T(8,128)}', space=vmem, size = 0x4000, scoped, tag = 'scratch operand']
  #allocation4 [shape = 'f32[8,64]{1,0:T(8,128)}', space=vmem, size = 0x1000, scoped, tag = 'scratch operand']
  %s0 = inlined_call_operand.hbm [shape: f32[2,8,64], index: 0, kind: input, shape index: {}]
  %s1 = inlined_call_operand.hbm [shape: f32[2,8,64], index: 1, kind: input, shape index: {}]
  %s2 = inlined_call_operand.hbm [shape: f32[2,8,64], index: 2, kind: input, shape index: {}]
  %s3 = inlined_call_operand.hbm [shape: f32[2,8,64], index: 3, kind: output, shape index: {}]
  %s4 = sld [smem:[#allocation0]]
  $region69: #{_lambda_.10} parent=0
    _
  %s6 = ssub.s32 1, %s4
  %s7 = scalar_select 0, %s6, %s4
  $region1: #{_lambda_.10} parent=0
    #allocation5 [shape = 'u8[8192]{0}', space=vmem, size = 0x2000, scoped, tag = 'input window, operand 0']
    #allocation6 [shape = 's32[2]{0}', space=sflag, size = 0x8, scoped, tag = 'scoped memory for _lambda_.10']
    #allocation7 [shape = 's32[2]{0}', space=sflag, size = 0x8, scoped, tag = 'scoped memory for _lambda_.10']
    #allocation8 [shape = 'u8[8192]{0}', space=vmem, size = 0x2000, scoped, tag = 'input window, operand 1']
    #allocation9 [shape = 's32[2]{0}', space=sflag, size = 0x8, scoped, tag = 'scoped memory for _lambda_.10']
    #allocation10 [shape = 'u8[8192]{0}', space=vmem, size = 0x2000, scoped, tag = 'input window, operand 2']
    #allocation11 [shape = 'u8[8192]{0}', space=vmem, size = 0x2000, scoped, tag = 'output window, operand 0']
    %8 = vsyncpa [#allocation6], 0
    %s9 = scalar_lea.sflag [#allocation6], 1
    %10 = vsyncpa %s9, 0
    %11 = vsyncpa [#allocation9], 0
    %s12 = scalar_lea.sflag [#allocation9], 1
    %13 = vsyncpa %s12, 0
    %14 = vsyncpa [#allocation7], 0
    %s15 = scalar_lea.sflag [#allocation7], 1
    %16 = vsyncpa %s15, 0
    loop: start=0, step=1, limit=4
    $region2: #{_lambda_.10} parent=1 // loop_pre_header
      _
    $region3: #{_lambda_.10} parent=1 // loop_header
      %s18 = sphi 0, %s22
      %p19 = scmp.ge.s32.totalorder %s18, 4
      %s25 = sphi 0, %s44
      %s26 = sphi 0, %s40
      %s27 = sphi 0, %s36
      %s28 = sphi 0, %s25
      %s29 = sphi 0, %s26
      %s30 = sphi 0, %s27
      %s31 = sphi 0, %s28
      %s32 = sphi 0, %s29
      %s33 = sphi 0, %s30
      %s49 = sphi 0, %s51
      %s52 = sphi 0, %s49
      %s53 = sphi 0, %s52
      %s69 = sphi 0, %s53
      %s77 = sphi 0, %s79
      %s80 = sphi 0, %s77
      %s81 = sphi 0, %s80
      %s97 = sphi 0, %s81
      %s105 = sphi 0, %s107
      %s108 = sphi 0, %s105
      %s109 = sphi 0, %s108
      %s125 = sphi 0, %s109
      %s133 = sphi 0, %s135
      %s136 = sphi 0, %s133
      %s137 = sphi 0, %s136
      %s153 = sphi 0, %s137
    $region4: #{_lambda_.10} parent=1 // loop_header_branch
      %21 = sbr.rel (%p19) target = $region8
    $region5: #{_lambda_.10} parent=1 // loop_body
      %s23 = ssub.s32 %s18, 1
      %s24 = ssub.s32 %s18, 2
      %s34 = sadd.s32 1, %s27
      %p35 = scmp.ge.s32.totalorder %s34, 1
      %s36 = scalar_select %p35, 0, %s34
      %s37 = sadd.s32 1, %s26
      %s38 = scalar_select %p35, %s37, %s26
      %p39 = scmp.ge.s32.totalorder %s38, 1
      %s40 = scalar_select %p39, 0, %s38
      %s41 = sadd.s32 1, %s25
      %s42 = scalar_select %p39, %s41, %s25
      %p43 = scmp.ge.s32.totalorder %s42, 2
      %s44 = scalar_select %p43, 0, %s42
      %s45 = ssub.s32 %s25, %s44
      %s46 = ssub.s32 %s26, %s40
      %s47 = sor.u32 %s45, %s46
      %p48 = scmp.eq.s32.totalorder %s47, 0
      %s50 = sadd.s32 %s49, 1
      %s51 = scalar_select %p48, %s49, %s50
      %p54 = pneg %p48
      %p55 = scmp.eq.s32.totalorder %s18, 1
      %p56 = por %p54, %p55
      %p57 = scmp.ne.s32.totalorder %s49, %s52
      %p58 = scmp.eq.s32.totalorder %s18, 0
      %p59 = por %p57, %p58
      %p60 = scmp.ne.s32.totalorder %s49, %s52
      %p61 = scmp.eq.s32.totalorder %s23, 1
      %p62 = por %p60, %p61
      %p63 = scmp.ne.s32.totalorder %s52, %s53
      %p64 = scmp.eq.s32.totalorder %s23, 0
      %p65 = por %p63, %p64
      %p66 = scmp.ne.s32.totalorder %s52, %s53
      %p67 = scmp.eq.s32.totalorder %s24, 1
      %p68 = por %p66, %p67
      %p70 = scmp.ne.s32.totalorder %s53, %s69
      %p71 = scmp.eq.s32.totalorder %s24, 0
      %p72 = por %p70, %p71
      %s73 = ssub.s32 %s25, %s44
      %s74 = ssub.s32 %s27, %s36
      %s75 = sor.u32 %s73, %s74
      %p76 = scmp.eq.s32.totalorder %s75, 0
      %s78 = sadd.s32 %s77, 1
      %s79 = scalar_select %p76, %s77, %s78
      %p82 = pneg %p76
      %p83 = scmp.eq.s32.totalorder %s18, 1
      %p84 = por %p82, %p83
      %p85 = scmp.ne.s32.totalorder %s77, %s80
      %p86 = scmp.eq.s32.totalorder %s18, 0
      %p87 = por %p85, %p86
      %p88 = scmp.ne.s32.totalorder %s77, %s80
      %p89 = scmp.eq.s32.totalorder %s23, 1
      %p90 = por %p88, %p89
      %p91 = scmp.ne.s32.totalorder %s80, %s81
      %p92 = scmp.eq.s32.totalorder %s23, 0
      %p93 = por %p91, %p92
      %p94 = scmp.ne.s32.totalorder %s80, %s81
      %p95 = scmp.eq.s32.totalorder %s24, 1
      %p96 = por %p94, %p95
      %p98 = scmp.ne.s32.totalorder %s81, %s97
      %p99 = scmp.eq.s32.totalorder %s24, 0
      %p100 = por %p98, %p99
      %s101 = ssub.s32 %s25, %s44
      %s102 = ssub.s32 %s27, %s36
      %s103 = sor.u32 %s101, %s102
      %p104 = scmp.eq.s32.totalorder %s103, 0
      %s106 = sadd.s32 %s105, 1
      %s107 = scalar_select %p104, %s105, %s106
      %p110 = pneg %p104
      %p111 = scmp.eq.s32.totalorder %s18, 1
      %p112 = por %p110, %p111
      %p113 = scmp.ne.s32.totalorder %s105, %s108
      %p114 = scmp.eq.s32.totalorder %s18, 0
      %p115 = por %p113, %p114
      %p116 = scmp.ne.s32.totalorder %s105, %s108
      %p117 = scmp.eq.s32.totalorder %s23, 1
      %p118 = por %p116, %p117
      %p119 = scmp.ne.s32.totalorder %s108, %s109
      %p120 = scmp.eq.s32.totalorder %s23, 0
      %p121 = por %p119, %p120
      %p122 = scmp.ne.s32.totalorder %s108, %s109
      %p123 = scmp.eq.s32.totalorder %s24, 1
      %p124 = por %p122, %p123
      %p126 = scmp.ne.s32.totalorder %s109, %s125
      %p127 = scmp.eq.s32.totalorder %s24, 0
      %p128 = por %p126, %p127
      %s129 = ssub.s32 %s25, %s44
      %s130 = ssub.s32 %s26, %s40
      %s131 = sor.u32 %s129, %s130
      %p132 = scmp.eq.s32.totalorder %s131, 0
      %s134 = sadd.s32 %s133, 1
      %s135 = scalar_select %p132, %s133, %s134
      %p138 = pneg %p132
      %p139 = scmp.eq.s32.totalorder %s18, 1
      %p140 = por %p138, %p139
      %p141 = scmp.ne.s32.totalorder %s133, %s136
      %p142 = scmp.eq.s32.totalorder %s18, 0
      %p143 = por %p141, %p142
      %p144 = scmp.ne.s32.totalorder %s133, %s136
      %p145 = scmp.eq.s32.totalorder %s23, 1
      %p146 = por %p144, %p145
      %p147 = scmp.ne.s32.totalorder %s136, %s137
      %p148 = scmp.eq.s32.totalorder %s23, 0
      %p149 = por %p147, %p148
      %p150 = scmp.ne.s32.totalorder %s136, %s137
      %p151 = scmp.eq.s32.totalorder %s24, 1
      %p152 = por %p150, %p151
      %p154 = scmp.ne.s32.totalorder %s137, %s153
      %p155 = scmp.eq.s32.totalorder %s24, 0
      %p156 = por %p154, %p155
      %p157 = scmp.le.s32.totalorder 1, %s18
      %p158 = scmp.lt.s32.totalorder %s18, 3
      %p159 = pnand %p157, %p158
      %p160 = pneg %p159
      // Predicated region
      $region9: #{_lambda_.10} parent=5 // pred_check
        _
      $region10: #{_lambda_.10} parent=5 // pred_check_branch
        %162 = sbr.rel (%p159) target = $region12
      $region11: #{_lambda_.10} parent=5 // pred_region
        %s163 = ssub.s32 %s18, 1
      $region12: #{_lambda_.10} parent=5 // pred_fallthru
        _
      %p164 = scmp.lt.s32.totalorder %s18, 2
      // Predicated region
      $region13: #{_lambda_.10} parent=5 // pred_check
        %p165 = pneg %p164
      $region14: #{_lambda_.10} parent=5 // pred_check_branch
        %167 = sbr.rel (%p165) target = $region16
      $region15: #{_lambda_.10} parent=5 // pred_region
        // Predicated region
        $region17: #{_lambda_.10} parent=15 // pred_check
          %p168 = pneg %p59
        $region18: #{_lambda_.10} parent=15 // pred_check_branch
          %170 = sbr.rel (%p168) target = $region20
        $region19: #{_lambda_.10} parent=15 // pred_region
          %s171 = sand.u32 %s49, 1
          %s172 = scalar_lea.sflag [#allocation6], %s171
          %s173 = sand.u32 %s49, 1
          %s174 = smul.addr %s173, 8
          %s175 = scalar_lea.vmem [#allocation5], %s174
          %s177 = ssub.s32 128, 128
          %178 = vsyncadd %s172, %s177
          %s179 = sadd.s32 %s26, %s25
          %s180 = smul.addr %s179, 128
          %s181 = scalar_lea.hbm %s0, %s180
          %s183 = sshll.u32 %s175, 4
          %s184 = int_to_ptr.vmem [resolvable:$true] %s183
          %186 = dma.hbm_to_vmem [thread:$0]  %s181, 128, %s184, %s172
        $region20: #{_lambda_.10} parent=15 // pred_fallthru
          _
        // Predicated region
        $region21: #{_lambda_.10} parent=15 // pred_check
          %p187 = pneg %p87
        $region22: #{_lambda_.10} parent=15 // pred_check_branch
          %189 = sbr.rel (%p187) target = $region24
        $region23: #{_lambda_.10} parent=15 // pred_region
          %s190 = sand.u32 %s18, 1
          %s191 = scalar_lea.sflag [#allocation9], %s190
          %s192 = sand.u32 %s77, 1
          %s193 = smul.addr %s192, 8
          %s194 = scalar_lea.vmem [#allocation8], %s193
          %s196 = ssub.s32 128, 128
          %197 = vsyncadd %s191, %s196
          %s198 = sadd.s32 %s27, %s25
          %s199 = smul.addr %s198, 128
          %s200 = scalar_lea.hbm %s1, %s199
          %s202 = sshll.u32 %s194, 4
          %s203 = int_to_ptr.vmem [resolvable:$true] %s202
          %205 = dma.hbm_to_vmem [thread:$0]  %s200, 128, %s203, %s191
        $region24: #{_lambda_.10} parent=15 // pred_fallthru
          _
        // Predicated region
        $region25: #{_lambda_.10} parent=15 // pred_check
          %p206 = pneg %p115
        $region26: #{_lambda_.10} parent=15 // pred_check_branch
          %208 = sbr.rel (%p206) target = $region28
        $region27: #{_lambda_.10} parent=15 // pred_region
          %s209 = sand.u32 %s18, 1
          %s210 = scalar_lea.sflag [#allocation9], %s209
          %s211 = sand.u32 %s105, 1
          %s212 = smul.addr %s211, 8
          %s213 = scalar_lea.vmem [#allocation10], %s212
          %s215 = ssub.s32 128, 128
          %216 = vsyncadd %s210, %s215
          %s217 = sadd.s32 %s27, %s25
          %s218 = smul.addr %s217, 128
          %s219 = scalar_lea.hbm %s2, %s218
          %s221 = sshll.u32 %s213, 4
          %s222 = int_to_ptr.vmem [resolvable:$true] %s221
          %224 = dma.hbm_to_vmem [thread:$0]  %s219, 128, %s222, %s210
        $region28: #{_lambda_.10} parent=15 // pred_fallthru
          _
      $region16: #{_lambda_.10} parent=5 // pred_fallthru
        _
      %p225 = scmp.le.s32.totalorder 1, %s18
      %p226 = scmp.lt.s32.totalorder %s18, 3
      %p227 = pnand %p225, %p226
      %p228 = pneg %p227
      // Predicated region
      $region29: #{_lambda_.10} parent=5 // pred_check
        _
      $region30: #{_lambda_.10} parent=5 // pred_check_branch
        %230 = sbr.rel (%p227) target = $region32
      $region31: #{_lambda_.10} parent=5 // pred_region
        %s231 = ssub.s32 %s18, 1
        %s232 = sand.u32 %s52, 1
        %s233 = scalar_lea.sflag [#allocation6], %s232
        %s234 = sand.u32 %s52, 1
        %s235 = smul.addr %s234, 8
        %s236 = scalar_lea.vmem [#allocation5], %s235
        // Predicated region
        $region33: #{_lambda_.10} parent=31 // pred_check
          %p237 = pneg %p65
        $region34: #{_lambda_.10} parent=31 // pred_check_branch
          %239 = sbr.rel (%p237) target = $region36
        $region35: #{_lambda_.10} parent=31 // pred_region
          %240 = dma.done %s233, 128
        $region36: #{_lambda_.10} parent=31 // pred_fallthru
          _
        %s241 = sand.u32 %s23, 1
        %s242 = scalar_lea.sflag [#allocation9], %s241
        %s243 = sand.u32 %s80, 1
        %s244 = smul.addr %s243, 8
        %s245 = scalar_lea.vmem [#allocation8], %s244
        // Predicated region
        $region37: #{_lambda_.10} parent=31 // pred_check
          %p246 = pneg %p93
        $region38: #{_lambda_.10} parent=31 // pred_check_branch
          %248 = sbr.rel (%p246) target = $region40
        $region39: #{_lambda_.10} parent=31 // pred_region
          %249 = dma.done %s242, 128
        $region40: #{_lambda_.10} parent=31 // pred_fallthru
          _
        %s250 = sand.u32 %s23, 1
        %s251 = scalar_lea.sflag [#allocation9], %s250
        %s252 = sand.u32 %s108, 1
        %s253 = smul.addr %s252, 8
        %s254 = scalar_lea.vmem [#allocation10], %s253
        // Predicated region
        $region41: #{_lambda_.10} parent=31 // pred_check
          %p255 = pneg %p121
        $region42: #{_lambda_.10} parent=31 // pred_check_branch
          %257 = sbr.rel (%p255) target = $region44
        $region43: #{_lambda_.10} parent=31 // pred_region
          %258 = dma.done %s251, 128
        $region44: #{_lambda_.10} parent=31 // pred_fallthru
          _
        %s259 = sand.u32 %s52, 1
        %s260 = scalar_lea.sflag [#allocation6], %s259
        %s261 = sand.u32 %s52, 1
        %s262 = smul.addr %s261, 8
        %s263 = scalar_lea.vmem [#allocation5], %s262
        %p264 = pneg %p65
        %p265 = pneg %p62
        %s266 = sand.u32 %s23, 1
        %s267 = scalar_lea.sflag [#allocation9], %s266
        %s268 = sand.u32 %s80, 1
        %s269 = smul.addr %s268, 8
        %s270 = scalar_lea.vmem [#allocation8], %s269
        %p271 = pneg %p93
        %p272 = pneg %p90
        %s273 = sand.u32 %s23, 1
        %s274 = scalar_lea.sflag [#allocation9], %s273
        %s275 = sand.u32 %s108, 1
        %s276 = smul.addr %s275, 8
        %s277 = scalar_lea.vmem [#allocation10], %s276
        %p278 = pneg %p121
        %p279 = pneg %p118
        %p280 = pneg %p149
        %p281 = pneg %p146
        %s282 = sand.u32 %s136, 1
        %s283 = scalar_lea.sflag [#allocation7], %s282
        %s284 = sand.u32 %s136, 1
        %s285 = smul.addr %s284, 8
        %s286 = scalar_lea.vmem [#allocation11], %s285
        %p288 = scmp.eq.s32.totalorder %s30, 0
        // Predicated region
        $region45: #{_lambda_.10} parent=31 // pred_check
          %p289 = pneg %p288
        $region46: #{_lambda_.10} parent=31 // pred_check_branch
          %291 = sbr.rel (%p289) target = $region48
        $region47: #{_lambda_.10} parent=31 // pred_region
          %vm292 = vcmask 7168
          %293 = vst.msk [vmem:[#allocation2] sm:$0xff] %vm292, -1e+30
          %294 = vst.msk [vmem:[#allocation2 + $0x8] sm:$0xff] %vm292, -1e+30
          %295 = vst.msk [vmem:[#allocation2 + $0x10] sm:$0xff] %vm292, -1e+30
          %296 = vst.msk [vmem:[#allocation2 + $0x18] sm:$0xff] %vm292, -1e+30
          %297 = vst.msk [vmem:[#allocation3] sm:$0xff] %vm292, 0.0
          %298 = vst.msk [vmem:[#allocation3 + $0x8] sm:$0xff] %vm292, 0.0
          %299 = vst.msk [vmem:[#allocation3 + $0x10] sm:$0xff] %vm292, 0.0
          %300 = vst.msk [vmem:[#allocation3 + $0x18] sm:$0xff] %vm292, 0.0
          %vm301 = vcmask 523264
          %302 = vst.msk [vmem:[#allocation4] sm:$0xff] %vm301, 0.0
        $region48: #{_lambda_.10} parent=31 // pred_fallthru
          _
        %s303 = smul.u32 %s29, 8
        %s304 = smul.u32 %s30, 8
        %s305 = sadd.s32 %s303, 7
        %p306 = scmp.le.s32.totalorder %s304, %s305
        // Predicated region
        $region49: #{_lambda_.10} parent=31 // pred_check
          %p307 = pneg %p306
        $region50: #{_lambda_.10} parent=31 // pred_check_branch
          %309 = sbr.rel (%p307) target = $region52
        $region51: #{_lambda_.10} parent=31 // pred_region
          %v310 = vld [vmem:[%s236] sm:$0xff]
          %v311 = vmul.f32 %v310, 0.25
          %v312 = vld [vmem:[%s245] sm:$0xff]
          %v313 = vld [vmem:[%s254] sm:$0xff]
          %v314 = vlaneseq
          %v315 = vshrl.u32 %v314, 7
          %v316 = vstv %s303
          %v317 = vadd.s32 %v316, %v315
          %v318 = vlaneseq
          %v319 = vand.u32 %v318, 127
          %v320 = vstv %s304
          %v321 = vadd.s32 %v320, %v319
          %vm322 = vcmp.le.s32.totalorder %v321, %v317
          %v323 = vpack.c.bf16 %v311, %v311
          %v324 = vpack.c.bf16 %v312, %v312
          %vm325 = vcmask 130048
          %v327 = vsel %vm325, %v323, 0
          %v330 = vsel %vm325, %v324, 0
          %332 = vmatprep.subr.bf16.mxu0 0
          %333 = vmatpush1.bf16.xpose.msra.mxu0 %v330
          %334 = vmatprep.subr.bf16.mxu0 0
          %335 = vmatpush1.bf16.xpose.msra.mxu0 0
          %336 = vmatprep.subr.bf16.mxu0 0
          %337 = vmatpush1.bf16.xpose.msra.mxu0 0
          %338 = vmatprep.subr.bf16.mxu0 0
          %339 = vmatpush1.bf16.xpose.msra.mxu0 0
          %340 = vmatprep.subr.bf16.mxu0 0
          %341 = vmatpush1.bf16.xpose.msra.mxu0 0
          %342 = vmatprep.subr.bf16.mxu0 0
          %343 = vmatpush1.bf16.xpose.msra.mxu0 0
          %344 = vmatprep.subr.bf16.mxu0 0
          %345 = vmatpush1.bf16.xpose.msra.mxu0 0
          %346 = vmatprep.subr.bf16.mxu0 0
          %347 = vmatpush1.bf16.xpose.msra.mxu0 0
          %348 = vmatprep.subr.bf16.mxu0 0
          %349 = vmatpush1.bf16.xpose.msra.mxu0 0
          %350 = vmatprep.subr.bf16.mxu0 0
          %351 = vmatpush1.bf16.xpose.msra.mxu0 0
          %352 = vmatprep.subr.bf16.mxu0 0
          %353 = vmatpush1.bf16.xpose.msra.mxu0 0
          %354 = vmatprep.subr.bf16.mxu0 0
          %355 = vmatpush1.bf16.xpose.msra.mxu0 0
          %356 = vmatprep.subr.bf16.mxu0 0
          %357 = vmatpush1.bf16.xpose.msra.mxu0 0
          %358 = vmatprep.subr.bf16.mxu0 0
          %359 = vmatpush1.bf16.xpose.msra.mxu0 0
          %360 = vmatprep.subr.bf16.mxu0 0
          %361 = vmatpush1.bf16.xpose.msra.mxu0 0
          %362 = vmatprep.subr.bf16.mxu0 0
          %363 = vmatpush1.bf16.xpose.msra.mxu0 0
          %364 = vmatprep.mubr.bf16.mxu0 0
          %365 = vmatmul.mubr.bf16.gmra.mrb[0].mxu0 %v327
          %v366 = vpop.f32.mrb[0].mxu0
          %v367 = vadd.f32 0.0, %v366
          %v368 = vpop.f32.mrb[0].mxu0
          %v369 = vpop.f32.mrb[0].mxu0
          %v370 = vpop.f32.mrb[0].mxu0
          %371 = vdwg.mxu0
          %v372 = vsel %vm322, %v367, -1e+30
          %v373 = vld [vmem:[#allocation2] sm:$0xff]
          %vm374 = vcmask 64512
          %v375 = vsel %vm374, %v372, -inf
          %376 = vmax.xlane.f32.xlu0 %v375
          %v377 = vpop.xlane.xlu0 %376
          %v378 = vmax.f32 %v373, %v377
          %v379 = vsub.f32 %v373, %v378
          %v380 = vmul.f32 %v379, 1.442695
          %v381 = vpow.pop %v380
          %383 = vset.pattern.permute.xlu0 0
          %384 = vperm.xlu0 %383, %v378
          %v385 = vpop.permute.xlu0 %384
          %v387 = vsub.f32 %v372, %v385
          %v388 = vmul.f32 %v387, 1.442695
          %v389 = vpow.pop %v388
          %v390 = vld [vmem:[#allocation3] sm:$0xff]
          %v391 = vmul.f32 %v381, %v390
          %v392 = vsel %vm374, %v389, 0.0
          %393 = vadd.xlane.f32.xlu0 %v392
          %v394 = vpop.xlane.xlu0 %393
          %v395 = vadd.f32 %v391, %v394
          %vm396 = vcmask 7168
          %397 = vst.msk [vmem:[#allocation3] sm:$0xff] %vm396, %v395
          %v398 = vld [vmem:[#allocation4] sm:$0xff]
          %400 = vset.pattern.permute.xlu0 0
          %401 = vperm.xlu0 %400, %v381
          %v402 = vpop.permute.xlu0 %401
          %v404 = vmul.f32 %v402, %v398
          %v405 = vpack.c.bf16 %v389, %v389
          %v406 = vpack.c.bf16 %v313, %v313
          %v408 = vsel %vm374, %v405, 0
          %vm410 = vcmask 1043456
          %v412 = vsel %vm410, %v406, 0
          %414 = vmatprep.subr.bf16.mxu0 0
          %415 = vmatpush1.bf16.msra.mxu0 %v412
          %416 = vmatprep.subr.bf16.mxu0 0
          %417 = vmatpush1.bf16.msra.mxu0 0
          %418 = vmatprep.subr.bf16.mxu0 0
          %419 = vmatpush1.bf16.msra.mxu0 0
          %420 = vmatprep.subr.bf16.mxu0 0
          %421 = vmatpush1.bf16.msra.mxu0 0
          %422 = vmatprep.subr.bf16.mxu0 0
          %423 = vmatpush1.bf16.msra.mxu0 0
          %424 = vmatprep.subr.bf16.mxu0 0
          %425 = vmatpush1.bf16.msra.mxu0 0
          %426 = vmatprep.subr.bf16.mxu0 0
          %427 = vmatpush1.bf16.msra.mxu0 0
          %428 = vmatprep.subr.bf16.mxu0 0
          %429 = vmatpush1.bf16.msra.mxu0 0
          %430 = vmatprep.subr.bf16.mxu0 0
          %431 = vmatpush1.bf16.msra.mxu0 0
          %432 = vmatprep.subr.bf16.mxu0 0
          %433 = vmatpush1.bf16.msra.mxu0 0
          %434 = vmatprep.subr.bf16.mxu0 0
          %435 = vmatpush1.bf16.msra.mxu0 0
          %436 = vmatprep.subr.bf16.mxu0 0
          %437 = vmatpush1.bf16.msra.mxu0 0
          %438 = vmatprep.subr.bf16.mxu0 0
          %439 = vmatpush1.bf16.msra.mxu0 0
          %440 = vmatprep.subr.bf16.mxu0 0
          %441 = vmatpush1.bf16.msra.mxu0 0
          %442 = vmatprep.subr.bf16.mxu0 0
          %443 = vmatpush1.bf16.msra.mxu0 0
          %444 = vmatprep.subr.bf16.mxu0 0
          %445 = vmatpush1.bf16.msra.mxu0 0
          %446 = vmatprep.mubr.bf16.mxu0 0
          %447 = vmatmul.mubr.bf16.gmra.mrb[0].mxu0 %v408
          %v448 = vpop.f32.mrb[0].mxu0
          %v449 = vadd.f32 0.0, %v448
          %v450 = vpop.f32.mrb[0].mxu0
          %v451 = vpop.f32.mrb[0].mxu0
          %v452 = vpop.f32.mrb[0].mxu0
          %453 = vdwg.mxu0
          %v454 = vadd.f32 %v404, %v449
          %455 = vst.msk [vmem:[#allocation4] sm:$0xff] %vm325, %v454
          %456 = vst.msk [vmem:[#allocation2] sm:$0xff] %vm396, %v378
          %458 = vrot.lane.b32.xlu0 %v323, 112
          %v459 = vpop.permute.xlu0 %458
          %461 = vrot.lane.b32.xlu0 %v324, 112
          %v462 = vpop.permute.xlu0 %461
          %v464 = vsel %vm325, %v459, 0
          %v467 = vsel %vm325, %v462, 0
          %469 = vmatprep.subr.bf16.mxu0 0
          %470 = vmatpush1.bf16.xpose.msra.mxu0 %v467
          %471 = vmatprep.subr.bf16.mxu0 0
          %472 = vmatpush1.bf16.xpose.msra.mxu0 0
          %473 = vmatprep.subr.bf16.mxu0 0
          %474 = vmatpush1.bf16.xpose.msra.mxu0 0
          %475 = vmatprep.subr.bf16.mxu0 0
          %476 = vmatpush1.bf16.xpose.msra.mxu0 0
          %477 = vmatprep.subr.bf16.mxu0 0
          %478 = vmatpush1.bf16.xpose.msra.mxu0 0
          %479 = vmatprep.subr.bf16.mxu0 0
          %480 = vmatpush1.bf16.xpose.msra.mxu0 0
          %481 = vmatprep.subr.bf16.mxu0 0
          %482 = vmatpush1.bf16.xpose.msra.mxu0 0
          %483 = vmatprep.subr.bf16.mxu0 0
          %484 = vmatpush1.bf16.xpose.msra.mxu0 0
          %485 = vmatprep.subr.bf16.mxu0 0
          %486 = vmatpush1.bf16.xpose.msra.mxu0 0
          %487 = vmatprep.subr.bf16.mxu0 0
          %488 = vmatpush1.bf16.xpose.msra.mxu0 0
          %489 = vmatprep.subr.bf16.mxu0 0
          %490 = vmatpush1.bf16.xpose.msra.mxu0 0
          %491 = vmatprep.subr.bf16.mxu0 0
          %492 = vmatpush1.bf16.xpose.msra.mxu0 0
          %493 = vmatprep.subr.bf16.mxu0 0
          %494 = vmatpush1.bf16.xpose.msra.mxu0 0
          %495 = vmatprep.subr.bf16.mxu0 0
          %496 = vmatpush1.bf16.xpose.msra.mxu0 0
          %497 = vmatprep.subr.bf16.mxu0 0
          %498 = vmatpush1.bf16.xpose.msra.mxu0 0
          %499 = vmatprep.subr.bf16.mxu0 0
          %500 = vmatpush1.bf16.xpose.msra.mxu0 0
          %501 = vmatprep.mubr.bf16.mxu0 0
          %502 = vmatmul.mubr.bf16.gmra.mrb[0].mxu0 %v464
          %v503 = vpop.f32.mrb[0].mxu0
          %v504 = vadd.f32 0.0, %v503
          %v505 = vpop.f32.mrb[0].mxu0
          %v506 = vpop.f32.mrb[0].mxu0
          %v507 = vpop.f32.mrb[0].mxu0
          %508 = vdwg.mxu0
          %v509 = vsel %vm322, %v504, -1e+30
          %s510 = scalar_lea.vmem [#allocation2], 8
          %v511 = vld [vmem:[%s510] sm:$0xff]
          %v512 = vsel %vm374, %v509, -inf
          %513 = vmax.xlane.f32.xlu0 %v512
          %v514 = vpop.xlane.xlu0 %513
          %v515 = vmax.f32 %v511, %v514
          %v516 = vsub.f32 %v511, %v515
          %v517 = vmul.f32 %v516, 1.442695
          %v518 = vpow.pop %v517
          %520 = vset.pattern.permute.xlu0 0
          %521 = vperm.xlu0 %520, %v515
          %v522 = vpop.permute.xlu0 %521
          %v524 = vsub.f32 %v509, %v522
          %v525 = vmul.f32 %v524, 1.442695
          %v526 = vpow.pop %v525
          %s527 = scalar_lea.vmem [#allocation3], 8
          %v528 = vld [vmem:[%s527] sm:$0xff]
          %v529 = vmul.f32 %v518, %v528
          %v530 = vsel %vm374, %v526, 0.0
          %531 = vadd.xlane.f32.xlu0 %v530
          %v532 = vpop.xlane.xlu0 %531
          %v533 = vadd.f32 %v529, %v532
          %534 = vst.msk [vmem:[%s527] sm:$0xff] %vm396, %v533
          %v535 = vld [vmem:[#allocation4] sm:$0xff]
          %537 = vset.pattern.permute.xlu0 0
          %538 = vperm.xlu0 %537, %v518
          %v539 = vpop.permute.xlu0 %538
          %v541 = vmul.f32 %v539, %v535
          %v542 = vpack.c.bf16 %v526, %v526
          %544 = vrot.lane.b32.xlu0 %v406, 112
          %v545 = vpop.permute.xlu0 %544
          %v547 = vsel %vm374, %v542, 0
          %v550 = vsel %vm410, %v545, 0
          %552 = vmatprep.subr.bf16.mxu0 0
          %553 = vmatpush1.bf16.msra.mxu0 %v550
          %554 = vmatprep.subr.bf16.mxu0 0
          %555 = vmatpush1.bf16.msra.mxu0 0
          %556 = vmatprep.subr.bf16.mxu0 0
          %557 = vmatpush1.bf16.msra.mxu0 0
          %558 = vmatprep.subr.bf16.mxu0 0
          %559 = vmatpush1.bf16.msra.mxu0 0
          %560 = vmatprep.subr.bf16.mxu0 0
          %561 = vmatpush1.bf16.msra.mxu0 0
          %562 = vmatprep.subr.bf16.mxu0 0
          %563 = vmatpush1.bf16.msra.mxu0 0
          %564 = vmatprep.subr.bf16.mxu0 0
          %565 = vmatpush1.bf16.msra.mxu0 0
          %566 = vmatprep.subr.bf16.mxu0 0
          %567 = vmatpush1.bf16.msra.mxu0 0
          %568 = vmatprep.subr.bf16.mxu0 0
          %569 = vmatpush1.bf16.msra.mxu0 0
          %570 = vmatprep.subr.bf16.mxu0 0
          %571 = vmatpush1.bf16.msra.mxu0 0
          %572 = vmatprep.subr.bf16.mxu0 0
          %573 = vmatpush1.bf16.msra.mxu0 0
          %574 = vmatprep.subr.bf16.mxu0 0
          %575 = vmatpush1.bf16.msra.mxu0 0
          %576 = vmatprep.subr.bf16.mxu0 0
          %577 = vmatpush1.bf16.msra.mxu0 0
          %578 = vmatprep.subr.bf16.mxu0 0
          %579 = vmatpush1.bf16.msra.mxu0 0
          %580 = vmatprep.subr.bf16.mxu0 0
          %581 = vmatpush1.bf16.msra.mxu0 0
          %582 = vmatprep.subr.bf16.mxu0 0
          %583 = vmatpush1.bf16.msra.mxu0 0
          %584 = vmatprep.mubr.bf16.mxu0 0
          %585 = vmatmul.mubr.bf16.gmra.mrb[0].mxu0 %v547
          %v586 = vpop.f32.mrb[0].mxu0
          %v587 = vadd.f32 0.0, %v586
          %v588 = vpop.f32.mrb[0].mxu0
          %v589 = vpop.f32.mrb[0].mxu0
          %v590 = vpop.f32.mrb[0].mxu0
          %591 = vdwg.mxu0
          %593 = vrot.lane.b32.xlu0 %v587, 16
          %v594 = vpop.permute.xlu0 %593
          %v596 = vadd.f32 %v541, %v594
          %vm597 = vcmask 261248
          %598 = vst.msk [vmem:[#allocation4] sm:$0xff] %vm597, %v596
          %599 = vst.msk [vmem:[%s510] sm:$0xff] %vm396, %v515
          %600 = vrot.lane.b32.xlu0 %v323, 96
          %v601 = vpop.permute.xlu0 %600
          %602 = vrot.lane.b32.xlu0 %v324, 96
          %v603 = vpop.permute.xlu0 %602
          %v605 = vsel %vm325, %v601, 0
          %v608 = vsel %vm325, %v603, 0
          %610 = vmatprep.subr.bf16.mxu0 0
          %611 = vmatpush1.bf16.xpose.msra.mxu0 %v608
          %612 = vmatprep.subr.bf16.mxu0 0
          %613 = vmatpush1.bf16.xpose.msra.mxu0 0
          %614 = vmatprep.subr.bf16.mxu0 0
          %615 = vmatpush1.bf16.xpose.msra.mxu0 0
          %616 = vmatprep.subr.bf16.mxu0 0
          %617 = vmatpush1.bf16.xpose.msra.mxu0 0
          %618 = vmatprep.subr.bf16.mxu0 0
          %619 = vmatpush1.bf16.xpose.msra.mxu0 0
          %620 = vmatprep.subr.bf16.mxu0 0
          %621 = vmatpush1.bf16.xpose.msra.mxu0 0
          %622 = vmatprep.subr.bf16.mxu0 0
          %623 = vmatpush1.bf16.xpose.msra.mxu0 0
          %624 = vmatprep.subr.bf16.mxu0 0
          %625 = vmatpush1.bf16.xpose.msra.mxu0 0
          %626 = vmatprep.subr.bf16.mxu0 0
          %627 = vmatpush1.bf16.xpose.msra.mxu0 0
          %628 = vmatprep.subr.bf16.mxu0 0
          %629 = vmatpush1.bf16.xpose.msra.mxu0 0
          %630 = vmatprep.subr.bf16.mxu0 0
          %631 = vmatpush1.bf16.xpose.msra.mxu0 0
          %632 = vmatprep.subr.bf16.mxu0 0
          %633 = vmatpush1.bf16.xpose.msra.mxu0 0
          %634 = vmatprep.subr.bf16.mxu0 0
          %635 = vmatpush1.bf16.xpose.msra.mxu0 0
          %636 = vmatprep.subr.bf16.mxu0 0
          %637 = vmatpush1.bf16.xpose.msra.mxu0 0
          %638 = vmatprep.subr.bf16.mxu0 0
          %639 = vmatpush1.bf16.xpose.msra.mxu0 0
          %640 = vmatprep.subr.bf16.mxu0 0
          %641 = vmatpush1.bf16.xpose.msra.mxu0 0
          %642 = vmatprep.mubr.bf16.mxu0 0
          %643 = vmatmul.mubr.bf16.gmra.mrb[0].mxu0 %v605
          %v644 = vpop.f32.mrb[0].mxu0
          %v645 = vadd.f32 0.0, %v644
          %v646 = vpop.f32.mrb[0].mxu0
          %v647 = vpop.f32.mrb[0].mxu0
          %v648 = vpop.f32.mrb[0].mxu0
          %649 = vdwg.mxu0
          %v650 = vsel %vm322, %v645, -1e+30
          %s651 = scalar_lea.vmem [#allocation2], 16
          %v652 = vld [vmem:[%s651] sm:$0xff]
          %v653 = vsel %vm374, %v650, -inf
          %654 = vmax.xlane.f32.xlu0 %v653
          %v655 = vpop.xlane.xlu0 %654
          %v656 = vmax.f32 %v652, %v655
          %v657 = vsub.f32 %v652, %v656
          %v658 = vmul.f32 %v657, 1.442695
          %v659 = vpow.pop %v658
          %661 = vset.pattern.permute.xlu0 0
          %662 = vperm.xlu0 %661, %v656
          %v663 = vpop.permute.xlu0 %662
          %v665 = vsub.f32 %v650, %v663
          %v666 = vmul.f32 %v665, 1.442695
          %v667 = vpow.pop %v666
          %s668 = scalar_lea.vmem [#allocation3], 16
          %v669 = vld [vmem:[%s668] sm:$0xff]
          %v670 = vmul.f32 %v659, %v669
          %v671 = vsel %vm374, %v667, 0.0
          %672 = vadd.xlane.f32.xlu0 %v671
          %v673 = vpop.xlane.xlu0 %672
          %v674 = vadd.f32 %v670, %v673
          %675 = vst.msk [vmem:[%s668] sm:$0xff] %vm396, %v674
          %v676 = vld [vmem:[#allocation4] sm:$0xff]
          %678 = vset.pattern.permute.xlu0 0
          %679 = vperm.xlu0 %678, %v659
          %v680 = vpop.permute.xlu0 %679
          %v682 = vmul.f32 %v680, %v676
          %v683 = vpack.c.bf16 %v667, %v667
          %684 = vrot.lane.b32.xlu0 %v406, 96
          %v685 = vpop.permute.xlu0 %684
          %v687 = vsel %vm374, %v683, 0
          %v690 = vsel %vm410, %v685, 0
          %692 = vmatprep.subr.bf16.mxu0 0
          %693 = vmatpush1.bf16.msra.mxu0 %v690
          %694 = vmatprep.subr.bf16.mxu0 0
          %695 = vmatpush1.bf16.msra.mxu0 0
          %696 = vmatprep.subr.bf16.mxu0 0
          %697 = vmatpush1.bf16.msra.mxu0 0
          %698 = vmatprep.subr.bf16.mxu0 0
          %699 = vmatpush1.bf16.msra.mxu0 0
          %700 = vmatprep.subr.bf16.mxu0 0
          %701 = vmatpush1.bf16.msra.mxu0 0
          %702 = vmatprep.subr.bf16.mxu0 0
          %703 = vmatpush1.bf16.msra.mxu0 0
          %704 = vmatprep.subr.bf16.mxu0 0
          %705 = vmatpush1.bf16.msra.mxu0 0
          %706 = vmatprep.subr.bf16.mxu0 0
          %707 = vmatpush1.bf16.msra.mxu0 0
          %708 = vmatprep.subr.bf16.mxu0 0
          %709 = vmatpush1.bf16.msra.mxu0 0
          %710 = vmatprep.subr.bf16.mxu0 0
          %711 = vmatpush1.bf16.msra.mxu0 0
          %712 = vmatprep.subr.bf16.mxu0 0
          %713 = vmatpush1.bf16.msra.mxu0 0
          %714 = vmatprep.subr.bf16.mxu0 0
          %715 = vmatpush1.bf16.msra.mxu0 0
          %716 = vmatprep.subr.bf16.mxu0 0
          %717 = vmatpush1.bf16.msra.mxu0 0
          %718 = vmatprep.subr.bf16.mxu0 0
          %719 = vmatpush1.bf16.msra.mxu0 0
          %720 = vmatprep.subr.bf16.mxu0 0
          %721 = vmatpush1.bf16.msra.mxu0 0
          %722 = vmatprep.subr.bf16.mxu0 0
          %723 = vmatpush1.bf16.msra.mxu0 0
          %724 = vmatprep.mubr.bf16.mxu0 0
          %725 = vmatmul.mubr.bf16.gmra.mrb[0].mxu0 %v687
          %v726 = vpop.f32.mrb[0].mxu0
          %v727 = vadd.f32 0.0, %v726
          %v728 = vpop.f32.mrb[0].mxu0
          %v729 = vpop.f32.mrb[0].mxu0
          %v730 = vpop.f32.mrb[0].mxu0
          %731 = vdwg.mxu0
          %733 = vrot.lane.b32.xlu0 %v727, 32
          %v734 = vpop.permute.xlu0 %733
          %v736 = vadd.f32 %v682, %v734
          %vm737 = vcmask 392448
          %738 = vst.msk [vmem:[#allocation4] sm:$0xff] %vm737, %v736
          %739 = vst.msk [vmem:[%s651] sm:$0xff] %vm396, %v656
          %740 = vrot.lane.b32.xlu0 %v323, 80
          %v741 = vpop.permute.xlu0 %740
          %742 = vrot.lane.b32.xlu0 %v324, 80
          %v743 = vpop.permute.xlu0 %742
          %v745 = vsel %vm325, %v741, 0
          %v748 = vsel %vm325, %v743, 0
          %750 = vmatprep.subr.bf16.mxu0 0
          %751 = vmatpush1.bf16.xpose.msra.mxu0 %v748
          %752 = vmatprep.subr.bf16.mxu0 0
          %753 = vmatpush1.bf16.xpose.msra.mxu0 0
          %754 = vmatprep.subr.bf16.mxu0 0
          %755 = vmatpush1.bf16.xpose.msra.mxu0 0
          %756 = vmatprep.subr.bf16.mxu0 0
          %757 = vmatpush1.bf16.xpose.msra.mxu0 0
          %758 = vmatprep.subr.bf16.mxu0 0
          %759 = vmatpush1.bf16.xpose.msra.mxu0 0
          %760 = vmatprep.subr.bf16.mxu0 0
          %761 = vmatpush1.bf16.xpose.msra.mxu0 0
          %762 = vmatprep.subr.bf16.mxu0 0
          %763 = vmatpush1.bf16.xpose.msra.mxu0 0
          %764 = vmatprep.subr.bf16.mxu0 0
          %765 = vmatpush1.bf16.xpose.msra.mxu0 0
          %766 = vmatprep.subr.bf16.mxu0 0
          %767 = vmatpush1.bf16.xpose.msra.mxu0 0
          %768 = vmatprep.subr.bf16.mxu0 0
          %769 = vmatpush1.bf16.xpose.msra.mxu0 0
          %770 = vmatprep.subr.bf16.mxu0 0
          %771 = vmatpush1.bf16.xpose.msra.mxu0 0
          %772 = vmatprep.subr.bf16.mxu0 0
          %773 = vmatpush1.bf16.xpose.msra.mxu0 0
          %774 = vmatprep.subr.bf16.mxu0 0
          %775 = vmatpush1.bf16.xpose.msra.mxu0 0
          %776 = vmatprep.subr.bf16.mxu0 0
          %777 = vmatpush1.bf16.xpose.msra.mxu0 0
          %778 = vmatprep.subr.bf16.mxu0 0
          %779 = vmatpush1.bf16.xpose.msra.mxu0 0
          %780 = vmatprep.subr.bf16.mxu0 0
          %781 = vmatpush1.bf16.xpose.msra.mxu0 0
          %782 = vmatprep.mubr.bf16.mxu0 0
          %783 = vmatmul.mubr.bf16.gmra.mrb[0].mxu0 %v745
          %v784 = vpop.f32.mrb[0].mxu0
          %v785 = vadd.f32 0.0, %v784
          %v786 = vpop.f32.mrb[0].mxu0
          %v787 = vpop.f32.mrb[0].mxu0
          %v788 = vpop.f32.mrb[0].mxu0
          %789 = vdwg.mxu0
          %v790 = vsel %vm322, %v785, -1e+30
          %s791 = scalar_lea.vmem [#allocation2], 24
          %v792 = vld [vmem:[%s791] sm:$0xff]
          %v793 = vsel %vm374, %v790, -inf
          %794 = vmax.xlane.f32.xlu0 %v793
          %v795 = vpop.xlane.xlu0 %794
          %v796 = vmax.f32 %v792, %v795
          %v797 = vsub.f32 %v792, %v796
          %v798 = vmul.f32 %v797, 1.442695
          %v799 = vpow.pop %v798
          %801 = vset.pattern.permute.xlu0 0
          %802 = vperm.xlu0 %801, %v796
          %v803 = vpop.permute.xlu0 %802
          %v805 = vsub.f32 %v790, %v803
          %v806 = vmul.f32 %v805, 1.442695
          %v807 = vpow.pop %v806
          %s808 = scalar_lea.vmem [#allocation3], 24
          %v809 = vld [vmem:[%s808] sm:$0xff]
          %v810 = vmul.f32 %v799, %v809
          %v811 = vsel %vm374, %v807, 0.0
          %812 = vadd.xlane.f32.xlu0 %v811
          %v813 = vpop.xlane.xlu0 %812
          %v814 = vadd.f32 %v810, %v813
          %815 = vst.msk [vmem:[%s808] sm:$0xff] %vm396, %v814
          %v816 = vld [vmem:[#allocation4] sm:$0xff]
          %818 = vset.pattern.permute.xlu0 0
          %819 = vperm.xlu0 %818, %v799
          %v820 = vpop.permute.xlu0 %819
          %v822 = vmul.f32 %v820, %v816
          %v823 = vpack.c.bf16 %v807, %v807
          %824 = vrot.lane.b32.xlu0 %v406, 80
          %v825 = vpop.permute.xlu0 %824
          %v827 = vsel %vm374, %v823, 0
          %v830 = vsel %vm410, %v825, 0
          %832 = vmatprep.subr.bf16.mxu0 0
          %833 = vmatpush1.bf16.msra.mxu0 %v830
          %834 = vmatprep.subr.bf16.mxu0 0
          %835 = vmatpush1.bf16.msra.mxu0 0
          %836 = vmatprep.subr.bf16.mxu0 0
          %837 = vmatpush1.bf16.msra.mxu0 0
          %838 = vmatprep.subr.bf16.mxu0 0
          %839 = vmatpush1.bf16.msra.mxu0 0
          %840 = vmatprep.subr.bf16.mxu0 0
          %841 = vmatpush1.bf16.msra.mxu0 0
          %842 = vmatprep.subr.bf16.mxu0 0
          %843 = vmatpush1.bf16.msra.mxu0 0
          %844 = vmatprep.subr.bf16.mxu0 0
          %845 = vmatpush1.bf16.msra.mxu0 0
          %846 = vmatprep.subr.bf16.mxu0 0
          %847 = vmatpush1.bf16.msra.mxu0 0
          %848 = vmatprep.subr.bf16.mxu0 0
          %849 = vmatpush1.bf16.msra.mxu0 0
          %850 = vmatprep.subr.bf16.mxu0 0
          %851 = vmatpush1.bf16.msra.mxu0 0
          %852 = vmatprep.subr.bf16.mxu0 0
          %853 = vmatpush1.bf16.msra.mxu0 0
          %854 = vmatprep.subr.bf16.mxu0 0
          %855 = vmatpush1.bf16.msra.mxu0 0
          %856 = vmatprep.subr.bf16.mxu0 0
          %857 = vmatpush1.bf16.msra.mxu0 0
          %858 = vmatprep.subr.bf16.mxu0 0
          %859 = vmatpush1.bf16.msra.mxu0 0
          %860 = vmatprep.subr.bf16.mxu0 0
          %861 = vmatpush1.bf16.msra.mxu0 0
          %862 = vmatprep.subr.bf16.mxu0 0
          %863 = vmatpush1.bf16.msra.mxu0 0
          %864 = vmatprep.mubr.bf16.mxu0 0
          %865 = vmatmul.mubr.bf16.gmra.mrb[0].mxu0 %v827
          %v866 = vpop.f32.mrb[0].mxu0
          %v867 = vadd.f32 0.0, %v866
          %v868 = vpop.f32.mrb[0].mxu0
          %v869 = vpop.f32.mrb[0].mxu0
          %v870 = vpop.f32.mrb[0].mxu0
          %871 = vdwg.mxu0
          %873 = vrot.lane.b32.xlu0 %v867, 48
          %v874 = vpop.permute.xlu0 %873
          %v876 = vadd.f32 %v822, %v874
          %vm877 = vcmask 523648
          %878 = vst.msk [vmem:[#allocation4] sm:$0xff] %vm877, %v876
          %879 = vst.msk [vmem:[%s791] sm:$0xff] %vm396, %v796
        $region52: #{_lambda_.10} parent=31 // pred_fallthru
          _
        // Predicated region
        $region53: #{_lambda_.10} parent=31 // pred_check
          %p880 = pneg %p288
        $region54: #{_lambda_.10} parent=31 // pred_check_branch
          %882 = sbr.rel (%p880) target = $region56
        $region55: #{_lambda_.10} parent=31 // pred_region
          %v883 = vld [vmem:[#allocation3] sm:$0xff]
          %v884 = vrcp.pop %v883
          %v885 = vld [vmem:[#allocation4] sm:$0xff]
          %887 = vset.pattern.permute.xlu0 0
          %888 = vperm.xlu0 %887, %v884
          %v889 = vpop.permute.xlu0 %888
          %v891 = vmul.f32 %v885, %v889
          %vm892 = vcmask 130048
          %893 = vst.msk [vmem:[%s286] sm:$0xff] %vm892, %v891
          %s894 = scalar_lea.vmem [#allocation3], 8
          %v895 = vld [vmem:[%s894] sm:$0xff]
          %v896 = vrcp.pop %v895
          %v897 = vld [vmem:[#allocation4] sm:$0xff]
          %899 = vset.pattern.permute.xlu0 0
          %900 = vperm.xlu0 %899, %v896
          %v901 = vpop.permute.xlu0 %900
          %v903 = vmul.f32 %v897, %v901
          %vm904 = vcmask 261248
          %905 = vst.msk [vmem:[%s286] sm:$0xff] %vm904, %v903
          %s906 = scalar_lea.vmem [#allocation3], 16
          %v907 = vld [vmem:[%s906] sm:$0xff]
          %v908 = vrcp.pop %v907
          %v909 = vld [vmem:[#allocation4] sm:$0xff]
          %911 = vset.pattern.permute.xlu0 0
          %912 = vperm.xlu0 %911, %v908
          %v913 = vpop.permute.xlu0 %912
          %v915 = vmul.f32 %v909, %v913
          %vm916 = vcmask 392448
          %917 = vst.msk [vmem:[%s286] sm:$0xff] %vm916, %v915
          %s918 = scalar_lea.vmem [#allocation3], 24
          %v919 = vld [vmem:[%s918] sm:$0xff]
          %v920 = vrcp.pop %v919
          %v921 = vld [vmem:[#allocation4] sm:$0xff]
          %923 = vset.pattern.permute.xlu0 0
          %924 = vperm.xlu0 %923, %v920
          %v925 = vpop.permute.xlu0 %924
          %v927 = vmul.f32 %v921, %v925
          %vm928 = vcmask 523648
          %929 = vst.msk [vmem:[%s286] sm:$0xff] %vm928, %v927
        $region56: #{_lambda_.10} parent=31 // pred_fallthru
          _
        %s930 = sand.u32 %s136, 1
        %s931 = scalar_lea.sflag [#allocation7], %s930
        %s932 = sand.u32 %s136, 1
        %s933 = smul.addr %s932, 8
        %s934 = scalar_lea.vmem [#allocation11], %s933
        // Predicated region
        $region57: #{_lambda_.10} parent=31 // pred_check
          %p935 = pneg %p146
        $region58: #{_lambda_.10} parent=31 // pred_check_branch
          %937 = sbr.rel (%p935) target = $region60
        $region59: #{_lambda_.10} parent=31 // pred_region
          %s939 = ssub.s32 128, 128
          %940 = vsyncadd %s931, %s939
          %s941 = sadd.s32 %s29, %s28
          %s942 = smul.addr %s941, 128
          %s943 = scalar_lea.hbm %s3, %s942
          %s945 = sshll.u32 %s934, 4
          %s946 = int_to_ptr.vmem [resolvable:$true] %s945
          %948 = dma.vmem_to_hbm [thread:$0]  %s946, 128, %s943, %s931
        $region60: #{_lambda_.10} parent=31 // pred_fallthru
          _
      $region32: #{_lambda_.10} parent=5 // pred_fallthru
        _
      %p949 = scmp.le.s32.totalorder 2, %s18
      // Predicated region
      $region61: #{_lambda_.10} parent=5 // pred_check
        %p950 = pneg %p949
      $region62: #{_lambda_.10} parent=5 // pred_check_branch
        %952 = sbr.rel (%p950) target = $region64
      $region63: #{_lambda_.10} parent=5 // pred_region
        %s953 = ssub.s32 %s18, 2
        // Predicated region
        $region65: #{_lambda_.10} parent=63 // pred_check
          %p954 = pneg %p152
        $region66: #{_lambda_.10} parent=63 // pred_check_branch
          %956 = sbr.rel (%p954) target = $region68
        $region67: #{_lambda_.10} parent=63 // pred_region
          %s957 = sand.u32 %s137, 1
          %s958 = scalar_lea.sflag [#allocation7], %s957
          %s959 = sand.u32 %s137, 1
          %s960 = smul.addr %s959, 8
          %s961 = scalar_lea.vmem [#allocation11], %s960
          %962 = dma.done %s958, 128
        $region68: #{_lambda_.10} parent=63 // pred_fallthru
          _
      $region64: #{_lambda_.10} parent=5 // pred_fallthru
        _
    $region6: #{_lambda_.10} parent=1 // loop_footer
      %s22 = sadd.s32 1, %s18
    $region7: #{_lambda_.10} parent=1 // loop_footer_branch
      %17 = sbr.rel target = $region3
    $region8: #{_lambda_.10} parent=1 // loop_exit
      _
    %963 = vsyncpa [#allocation6], 1
    %s964 = scalar_lea.sflag [#allocation6], 1
    %965 = vsyncpa %s964, 1
    %966 = vsyncpa [#allocation9], 1
    %s967 = scalar_lea.sflag [#allocation9], 1
    %968 = vsyncpa %s967, 1
    %969 = vsyncpa [#allocation7], 1
    %s970 = scalar_lea.sflag [#allocation7], 1
    %971 = vsyncpa %s970, 1

// kernel: _lambda_.12
$region0: #{_lambda_.12}
  #allocation0 [shape = 'u32[]', space=smem, size = 0x4, offset = 0x4, fixed_abs, tag = 'smem constant byte address 0x4 - core index']
  #allocation1 [shape = 'u32[144,128]{1,0:T(1,128)}', space=vmem, size = 0x12000, scoped, tag = 'internal scratch']
  #allocation2 [shape = 'bf16[16,64]{1,0:T(16,128)(2,1)}', space=vmem, size = 0x1000, scoped, tag = 'scratch operand']
  #allocation3 [shape = 'f32[16,64]{1,0:T(8,128)}', space=vmem, size = 0x2000, scoped, tag = 'scratch operand']
  %s0 = inlined_call_operand.hbm [shape: f32[16,64], index: 0, kind: input, shape index: {}]
  %s1 = inlined_call_operand.hbm [shape: f32[1,64], index: 1, kind: input, shape index: {}]
  %s2 = inlined_call_operand.hbm [shape: bf16[64,192], index: 2, kind: input, shape index: {}]
  %s3 = inlined_call_operand.hbm [shape: bf16[64,192], index: 3, kind: input, shape index: {}]
  %s4 = inlined_call_operand.hbm [shape: bf16[192,64], index: 4, kind: input, shape index: {}]
  %s5 = inlined_call_operand.hbm [shape: f32[16,64], index: 5, kind: output, shape index: {}]
  %s6 = sld [smem:[#allocation0]]
  $region58: #{_lambda_.12} parent=0
    _
  %s8 = ssub.s32 1, %s6
  %s9 = scalar_select 0, %s8, %s6
  $region1: #{_lambda_.12} parent=0
    #allocation4 [shape = 'u8[8192]{0}', space=vmem, size = 0x2000, scoped, tag = 'input window, operand 0, single buffered']
    #allocation5 [shape = 's32[1]{0}', space=sflag, size = 0x4, scoped, tag = 'scoped memory for _lambda_.12']
    #allocation6 [shape = 's32[1]{0}', space=sflag, size = 0x4, scoped, tag = 'scoped memory for _lambda_.12']
    #allocation7 [shape = 'u8[512]{0}', space=vmem, size = 0x400, scoped, tag = 'input window, operand 1, single buffered']
    #allocation8 [shape = 's32[1]{0}', space=sflag, size = 0x4, scoped, tag = 'scoped memory for _lambda_.12']
    #allocation9 [shape = 'u8[32768]{0}', space=vmem, size = 0x8000, scoped, tag = 'input window, operand 2, single buffered']
    #allocation10 [shape = 'u8[32768]{0}', space=vmem, size = 0x8000, scoped, tag = 'input window, operand 3, single buffered']
    #allocation11 [shape = 's32[1]{0}', space=sflag, size = 0x4, scoped, tag = 'scoped memory for _lambda_.12']
    #allocation12 [shape = 'u8[49152]{0}', space=vmem, size = 0xc000, scoped, tag = 'input window, operand 4, single buffered']
    #allocation13 [shape = 'u8[8192]{0}', space=vmem, size = 0x2000, scoped, tag = 'output window, operand 0, single buffered']
    %10 = vsyncpa [#allocation5], 0
    %11 = vsyncpa [#allocation8], 0
    %12 = vsyncpa [#allocation11], 0
    %13 = vsyncpa [#allocation6], 0
    // Predicated region
    $region2: #{_lambda_.12} parent=1 // pred_check
      _
    $region3: #{_lambda_.12} parent=1 // pred_check_branch
      %15 = sbr.rel (0) target = $region5
    $region4: #{_lambda_.12} parent=1 // pred_region
      %s17 = ssub.s32 256, 256
      %18 = vsyncadd [#allocation5], %s17
      %s19 = sshll.u32 [#allocation4], 4
      %s20 = int_to_ptr.vmem [resolvable:$true] %s19
      %25 = dma.hbm_to_vmem [thread:$0]  %s0, 256, %s20, [#allocation5], 128, 128, 8
    $region5: #{_lambda_.12} parent=1 // pred_fallthru
      _
    // Predicated region
    $region6: #{_lambda_.12} parent=1 // pred_check
      _
    $region7: #{_lambda_.12} parent=1 // pred_check_branch
      %27 = sbr.rel (0) target = $region9
    $region8: #{_lambda_.12} parent=1 // pred_region
      %s29 = ssub.s32 16, 16
      %30 = vsyncadd [#allocation8], %s29
      %s32 = sshll.u32 [#allocation7], 4
      %s33 = int_to_ptr.vmem [resolvable:$true] %s32
      %35 = dma.hbm_to_vmem [thread:$0]  %s1, 16, %s33, [#allocation8]
    $region9: #{_lambda_.12} parent=1 // pred_fallthru
      _
    // Predicated region
    $region10: #{_lambda_.12} parent=1 // pred_check
      _
    $region11: #{_lambda_.12} parent=1 // pred_check_branch
      %37 = sbr.rel (0) target = $region13
    $region12: #{_lambda_.12} parent=1 // pred_region
      %s39 = ssub.s32 1024, 1024
      %40 = vsyncadd [#allocation8], %s39
      %s41 = sshll.u32 [#allocation9], 4
      %s42 = int_to_ptr.vmem [resolvable:$true] %s41
      %47 = dma.hbm_to_vmem [thread:$0]  %s2, 1024, %s42, [#allocation8], 128, 128, 8
    $region13: #{_lambda_.12} parent=1 // pred_fallthru
      _
    // Predicated region
    $region14: #{_lambda_.12} parent=1 // pred_check
      _
    $region15: #{_lambda_.12} parent=1 // pred_check_branch
      %49 = sbr.rel (0) target = $region17
    $region16: #{_lambda_.12} parent=1 // pred_region
      %s51 = ssub.s32 1024, 1024
      %52 = vsyncadd [#allocation11], %s51
      %s53 = sshll.u32 [#allocation10], 4
      %s54 = int_to_ptr.vmem [resolvable:$true] %s53
      %59 = dma.hbm_to_vmem [thread:$0]  %s3, 1024, %s54, [#allocation11], 128, 128, 8
    $region17: #{_lambda_.12} parent=1 // pred_fallthru
      _
    // Predicated region
    $region18: #{_lambda_.12} parent=1 // pred_check
      _
    $region19: #{_lambda_.12} parent=1 // pred_check_branch
      %61 = sbr.rel (0) target = $region21
    $region20: #{_lambda_.12} parent=1 // pred_region
      %s63 = ssub.s32 1536, 1536
      %64 = vsyncadd [#allocation11], %s63
      %s65 = sshll.u32 [#allocation12], 4
      %s66 = int_to_ptr.vmem [resolvable:$true] %s65
      %71 = dma.hbm_to_vmem [thread:$0]  %s4, 1536, %s66, [#allocation11], 64, 64, 4
    $region21: #{_lambda_.12} parent=1 // pred_fallthru
      _
    // Predicated region
    $region22: #{_lambda_.12} parent=1 // pred_check
      _
    $region23: #{_lambda_.12} parent=1 // pred_check_branch
      %73 = sbr.rel (0) target = $region25
    $region24: #{_lambda_.12} parent=1 // pred_region
      %74 = dma.done [#allocation5], 256
    $region25: #{_lambda_.12} parent=1 // pred_fallthru
      _
    // Predicated region
    $region26: #{_lambda_.12} parent=1 // pred_check
      _
    $region27: #{_lambda_.12} parent=1 // pred_check_branch
      %76 = sbr.rel (0) target = $region29
    $region28: #{_lambda_.12} parent=1 // pred_region
      %77 = dma.done [#allocation8], 16
    $region29: #{_lambda_.12} parent=1 // pred_fallthru
      _
    // Predicated region
    $region30: #{_lambda_.12} parent=1 // pred_check
      _
    $region31: #{_lambda_.12} parent=1 // pred_check_branch
      %79 = sbr.rel (0) target = $region33
    $region32: #{_lambda_.12} parent=1 // pred_region
      %80 = dma.done [#allocation8], 1024
    $region33: #{_lambda_.12} parent=1 // pred_fallthru
      _
    // Predicated region
    $region34: #{_lambda_.12} parent=1 // pred_check
      _
    $region35: #{_lambda_.12} parent=1 // pred_check_branch
      %82 = sbr.rel (0) target = $region37
    $region36: #{_lambda_.12} parent=1 // pred_region
      %83 = dma.done [#allocation11], 1024
    $region37: #{_lambda_.12} parent=1 // pred_fallthru
      _
    // Predicated region
    $region38: #{_lambda_.12} parent=1 // pred_check
      _
    $region39: #{_lambda_.12} parent=1 // pred_check_branch
      %85 = sbr.rel (0) target = $region41
    $region40: #{_lambda_.12} parent=1 // pred_region
      %86 = dma.done [#allocation11], 1536
    $region41: #{_lambda_.12} parent=1 // pred_fallthru
      _
    %p88 = scmp.eq.s32.totalorder 0, 0
    // Predicated region
    $region42: #{_lambda_.12} parent=1 // pred_check
      %p89 = pneg %p88
    $region43: #{_lambda_.12} parent=1 // pred_check_branch
      %91 = sbr.rel (%p89) target = $region45
    $region44: #{_lambda_.12} parent=1 // pred_region
      %v92 = vld [vmem:[#allocation4] sm:$0xff]
      %v93 = vld [vmem:[#allocation4 + $0x8] sm:$0xff]
      %v94 = vmul.f32 %v92, %v92
      %v95 = vmul.f32 %v93, %v93
      %vm96 = vcmask 523264
      %v97 = vsel %vm96, %v94, 0.0
      %98 = vadd.xlane.f32.xlu0 %v97
      %v99 = vpop.xlane.xlu0 %98
      %v100 = vsel %vm96, %v95, 0.0
      %101 = vadd.xlane.f32.xlu0 %v100
      %v102 = vpop.xlane.xlu0 %101
      %v103 = vrcp.pop 64.0
      %v104 = vmul.f32 %v99, %v103
      %v105 = vmul.f32 %v102, %v103
      %v106 = vadd.f32 %v104, 1e-05
      %v107 = vadd.f32 %v105, 1e-05
      %v108 = vrsqrt.pop %v106
      %v109 = vrsqrt.pop %v107
      %v110 = vmul.f32 %v92, %v108
      %v111 = vmul.f32 %v93, %v109
      %v112 = vld [vmem:[#allocation7] sm:$0x1]
      %v114 = vlaneseq
      %v115 = vshrl.u32 %v114, 7
      %v116 = vsub.s32 0, %v115
      %v117 = vrot.slane %v112, %v116
      %v119 = vmul.f32 %v110, %v117
      %v120 = vmul.f32 %v111, %v117
      %v121 = vpack.c.bf16 %v120, %v119
      %122 = vst.msk [vmem:[#allocation2] sm:$0xff] %vm96, %v121
      %123 = vst.msk [vmem:[#allocation3] sm:$0xff] %vm96, 0.0
      %124 = vst.msk [vmem:[#allocation3 + $0x8] sm:$0xff] %vm96, 0.0
    $region45: #{_lambda_.12} parent=1 // pred_fallthru
      _
    %v125 = vld [vmem:[#allocation2] sm:$0xff]
    %v126 = vld [vmem:[#allocation9] sm:$0xff]
    %v127 = vld [vmem:[#allocation9 + $0x8] sm:$0xff]
    %v128 = vld [vmem:[#allocation9 + $0x10] sm:$0xff]
    %v129 = vld [vmem:[#allocation9 + $0x18] sm:$0xff]
    %v130 = vld [vmem:[#allocation9 + $0x20] sm:$0xff]
    %v131 = vld [vmem:[#allocation9 + $0x28] sm:$0xff]
    %v132 = vld [vmem:[#allocation9 + $0x30] sm:$0xff]
    %v133 = vld [vmem:[#allocation9 + $0x38] sm:$0xff]
    %v142 = vunpack.c.l.b16 %v126
    %v143 = vunpack.c.h.b16 %v126
    %v144 = vunpack.c.l.b16 %v127
    %v145 = vunpack.c.h.b16 %v127
    %v146 = vunpack.c.l.b16 %v128
    %v147 = vunpack.c.h.b16 %v128
    %v148 = vunpack.c.l.b16 %v129
    %v149 = vunpack.c.h.b16 %v129
    %v150 = vunpack.c.l.b16 %v130
    %v151 = vunpack.c.h.b16 %v130
    %v152 = vunpack.c.l.b16 %v131
    %v153 = vunpack.c.h.b16 %v131
    %v154 = vunpack.c.l.b16 %v132
    %v155 = vunpack.c.h.b16 %v132
    %v156 = vunpack.c.l.b16 %v133
    %v157 = vunpack.c.h.b16 %v133
    %v158 = vpack.c.b16 %v144, %v142
    %v159 = vpack.c.b16 %v145, %v143
    %v160 = vpack.c.b16 %v148, %v146
    %v161 = vpack.c.b16 %v149, %v147
    %v162 = vpack.c.b16 %v152, %v150
    %v163 = vpack.c.b16 %v153, %v151
    %v164 = vpack.c.b16 %v156, %v154
    %v165 = vpack.c.b16 %v157, %v155
    %vm174 = vcmask 523264
    %v176 = vsel %vm174, %v125, 0
    %178 = vmatprep.subr.bf16.mxu0 %v159
    %179 = vmatpush1.bf16.msra.mxu0 %v158
    %180 = vmatprep.subr.bf16.mxu0 %v161
    %181 = vmatpush1.bf16.msra.mxu0 %v160
    %182 = vmatprep.subr.bf16.mxu0 %v163
    %183 = vmatpush1.bf16.msra.mxu0 %v162
    %184 = vmatprep.subr.bf16.mxu0 %v165
    %185 = vmatpush1.bf16.msra.mxu0 %v164
    %186 = vmatprep.subr.bf16.mxu0 0
    %187 = vmatpush1.bf16.msra.mxu0 0
    %188 = vmatprep.subr.bf16.mxu0 0
    %189 = vmatpush1.bf16.msra.mxu0 0
    %190 = vmatprep.subr.bf16.mxu0 0
    %191 = vmatpush1.bf16.msra.mxu0 0
    %192 = vmatprep.subr.bf16.mxu0 0
    %193 = vmatpush1.bf16.msra.mxu0 0
    %194 = vmatprep.subr.bf16.mxu0 0
    %195 = vmatpush1.bf16.msra.mxu0 0
    %196 = vmatprep.subr.bf16.mxu0 0
    %197 = vmatpush1.bf16.msra.mxu0 0
    %198 = vmatprep.subr.bf16.mxu0 0
    %199 = vmatpush1.bf16.msra.mxu0 0
    %200 = vmatprep.subr.bf16.mxu0 0
    %201 = vmatpush1.bf16.msra.mxu0 0
    %202 = vmatprep.subr.bf16.mxu0 0
    %203 = vmatpush1.bf16.msra.mxu0 0
    %204 = vmatprep.subr.bf16.mxu0 0
    %205 = vmatpush1.bf16.msra.mxu0 0
    %206 = vmatprep.subr.bf16.mxu0 0
    %207 = vmatpush1.bf16.msra.mxu0 0
    %208 = vmatprep.subr.bf16.mxu0 0
    %209 = vmatpush1.bf16.msra.mxu0 0
    %210 = vmatprep.mubr.bf16.mxu0 0
    %211 = vmatmul.mubr.bf16.gmra.mrb[0].mxu0 %v176
    %v212 = vpop.f32.mrb[0].mxu0
    %v213 = vadd.f32 0.0, %v212
    %v214 = vpop.f32.mrb[0].mxu0
    %v215 = vadd.f32 0.0, %v214
    %v216 = vpop.f32.mrb[0].mxu0
    %v217 = vadd.f32 0.0, %v216
    %v218 = vpop.f32.mrb[0].mxu0
    %v219 = vadd.f32 0.0, %v218
    %220 = vdwg.mxu0
    %v221 = vld [vmem:[#allocation10] sm:$0xff]
    %v222 = vld [vmem:[#allocation10 + $0x8] sm:$0xff]
    %v223 = vld [vmem:[#allocation10 + $0x10] sm:$0xff]
    %v224 = vld [vmem:[#allocation10 + $0x18] sm:$0xff]
    %v225 = vld [vmem:[#allocation10 + $0x20] sm:$0xff]
    %v226 = vld [vmem:[#allocation10 + $0x28] sm:$0xff]
    %v227 = vld [vmem:[#allocation10 + $0x30] sm:$0xff]
    %v228 = vld [vmem:[#allocation10 + $0x38] sm:$0xff]
    %v237 = vunpack.c.l.b16 %v221
    %v238 = vunpack.c.h.b16 %v221
    %v239 = vunpack.c.l.b16 %v222
    %v240 = vunpack.c.h.b16 %v222
    %v241 = vunpack.c.l.b16 %v223
    %v242 = vunpack.c.h.b16 %v223
    %v243 = vunpack.c.l.b16 %v224
    %v244 = vunpack.c.h.b16 %v224
    %v245 = vunpack.c.l.b16 %v225
    %v246 = vunpack.c.h.b16 %v225
    %v247 = vunpack.c.l.b16 %v226
    %v248 = vunpack.c.h.b16 %v226
    %v249 = vunpack.c.l.b16 %v227
    %v250 = vunpack.c.h.b16 %v227
    %v251 = vunpack.c.l.b16 %v228
    %v252 = vunpack.c.h.b16 %v228
    %v253 = vpack.c.b16 %v239, %v237
    %v254 = vpack.c.b16 %v240, %v238
    %v255 = vpack.c.b16 %v243, %v241
    %v256 = vpack.c.b16 %v244, %v242
    %v257 = vpack.c.b16 %v247, %v245
    %v258 = vpack.c.b16 %v248, %v246
    %v259 = vpack.c.b16 %v251, %v249
    %v260 = vpack.c.b16 %v252, %v250
    %269 = vmatprep.subr.bf16.mxu0 %v254
    %270 = vmatpush1.bf16.msra.mxu0 %v253
    %271 = vmatprep.subr.bf16.mxu0 %v256
    %272 = vmatpush1.bf16.msra.mxu0 %v255
    %273 = vmatprep.subr.bf16.mxu0 %v258
    %274 = vmatpush1.bf16.msra.mxu0 %v257
    %275 = vmatprep.subr.bf16.mxu0 %v260
    %276 = vmatpush1.bf16.msra.mxu0 %v259
    %277 = vmatprep.subr.bf16.mxu0 0
    %278 = vmatpush1.bf16.msra.mxu0 0
    %279 = vmatprep.subr.bf16.mxu0 0
    %280 = vmatpush1.bf16.msra.mxu0 0
    %281 = vmatprep.subr.bf16.mxu0 0
    %282 = vmatpush1.bf16.msra.mxu0 0
    %283 = vmatprep.subr.bf16.mxu0 0
    %284 = vmatpush1.bf16.msra.mxu0 0
    %285 = vmatprep.subr.bf16.mxu0 0
    %286 = vmatpush1.bf16.msra.mxu0 0
    %287 = vmatprep.subr.bf16.mxu0 0
    %288 = vmatpush1.bf16.msra.mxu0 0
    %289 = vmatprep.subr.bf16.mxu0 0
    %290 = vmatpush1.bf16.msra.mxu0 0
    %291 = vmatprep.subr.bf16.mxu0 0
    %292 = vmatpush1.bf16.msra.mxu0 0
    %293 = vmatprep.subr.bf16.mxu0 0
    %294 = vmatpush1.bf16.msra.mxu0 0
    %295 = vmatprep.subr.bf16.mxu0 0
    %296 = vmatpush1.bf16.msra.mxu0 0
    %297 = vmatprep.subr.bf16.mxu0 0
    %298 = vmatpush1.bf16.msra.mxu0 0
    %299 = vmatprep.subr.bf16.mxu0 0
    %300 = vmatpush1.bf16.msra.mxu0 0
    %301 = vmatprep.mubr.bf16.mxu0 0
    %302 = vmatmul.mubr.bf16.gmra.mrb[0].mxu0 %v176
    %v303 = vpop.f32.mrb[0].mxu0
    %v304 = vadd.f32 0.0, %v303
    %v305 = vpop.f32.mrb[0].mxu0
    %v306 = vadd.f32 0.0, %v305
    %v307 = vpop.f32.mrb[0].mxu0
    %v308 = vadd.f32 0.0, %v307
    %v309 = vpop.f32.mrb[0].mxu0
    %v310 = vadd.f32 0.0, %v309
    %311 = vdwg.mxu0
    %v312 = vxor.u32 %v213, 2147483648
    %v313 = vxor.u32 %v215, 2147483648
    %v314 = vxor.u32 %v217, 2147483648
    %v315 = vxor.u32 %v219, 2147483648
    %v316 = vmul.f32 %v312, 1.442695
    %v317 = vpow.pop %v316
    %v318 = vmul.f32 %v313, 1.442695
    %v319 = vpow.pop %v318
    %v320 = vmul.f32 %v314, 1.442695
    %v321 = vpow.pop %v320
    %v322 = vmul.f32 %v315, 1.442695
    %v323 = vpow.pop %v322
    %v324 = vadd.f32 %v317, 1.0
    %v325 = vadd.f32 %v319, 1.0
    %v326 = vadd.f32 %v321, 1.0
    %v327 = vadd.f32 %v323, 1.0
    %v328 = vrcp.pop %v324
    %v329 = vmul.f32 1.0, %v328
    %v330 = vrcp.pop %v325
    %v331 = vmul.f32 1.0, %v330
    %v332 = vrcp.pop %v326
    %v333 = vmul.f32 1.0, %v332
    %v334 = vrcp.pop %v327
    %v335 = vmul.f32 1.0, %v334
    %v336 = vmul.f32 %v213, %v329
    %v337 = vmul.f32 %v215, %v331
    %v338 = vmul.f32 %v217, %v333
    %v339 = vmul.f32 %v219, %v335
    %v340 = vmul.f32 %v336, %v304
    %v341 = vmul.f32 %v337, %v306
    %v342 = vmul.f32 %v338, %v308
    %v343 = vmul.f32 %v339, %v310
    %v344 = vld [vmem:[#allocation3] sm:$0xff]
    %v345 = vld [vmem:[#allocation3 + $0x8] sm:$0xff]
    %v346 = vpack.c.bf16 %v342, %v340
    %v347 = vpack.c.bf16 %v343, %v341
    %v348 = vld [vmem:[#allocation12] sm:$0xf]
    %v349 = vld [vmem:[#allocation12 + $0x4] sm:$0xf]
    %v350 = vld [vmem:[#allocation12 + $0x8] sm:$0xf]
    %v351 = vld [vmem:[#allocation12 + $0xc] sm:$0xf]
    %v352 = vld [vmem:[#allocation12 + $0x10] sm:$0xf]
    %v353 = vld [vmem:[#allocation12 + $0x14] sm:$0xf]
    %v354 = vld [vmem:[#allocation12 + $0x18] sm:$0xf]
    %v355 = vld [vmem:[#allocation12 + $0x1c] sm:$0xf]
    %v356 = vld [vmem:[#allocation12 + $0x20] sm:$0xf]
    %v357 = vld [vmem:[#allocation12 + $0x24] sm:$0xf]
    %v358 = vld [vmem:[#allocation12 + $0x28] sm:$0xf]
    %v359 = vld [vmem:[#allocation12 + $0x2c] sm:$0xf]
    %v360 = vld [vmem:[#allocation12 + $0x30] sm:$0xf]
    %v361 = vld [vmem:[#allocation12 + $0x34] sm:$0xf]
    %v362 = vld [vmem:[#allocation12 + $0x38] sm:$0xf]
    %v363 = vld [vmem:[#allocation12 + $0x3c] sm:$0xf]
    %v364 = vld [vmem:[#allocation12 + $0x40] sm:$0xf]
    %v365 = vld [vmem:[#allocation12 + $0x44] sm:$0xf]
    %v366 = vld [vmem:[#allocation12 + $0x48] sm:$0xf]
    %v367 = vld [vmem:[#allocation12 + $0x4c] sm:$0xf]
    %v368 = vld [vmem:[#allocation12 + $0x50] sm:$0xf]
    %v369 = vld [vmem:[#allocation12 + $0x54] sm:$0xf]
    %v370 = vld [vmem:[#allocation12 + $0x58] sm:$0xf]
    %v371 = vld [vmem:[#allocation12 + $0x5c] sm:$0xf]
    %v396 = vunpack.c.l.b16 %v348
    %v397 = vunpack.c.l.b16 %v349
    %v398 = vunpack.c.l.b16 %v350
    %v399 = vunpack.c.l.b16 %v351
    %v400 = vunpack.c.l.b16 %v352
    %v401 = vunpack.c.l.b16 %v353
    %v402 = vunpack.c.l.b16 %v354
    %v403 = vunpack.c.l.b16 %v355
    %v404 = vunpack.c.l.b16 %v356
    %v405 = vunpack.c.l.b16 %v357
    %v406 = vunpack.c.l.b16 %v358
    %v407 = vunpack.c.l.b16 %v359
    %v408 = vunpack.c.l.b16 %v360
    %v409 = vunpack.c.l.b16 %v361
    %v410 = vunpack.c.l.b16 %v362
    %v411 = vunpack.c.l.b16 %v363
    %v412 = vunpack.c.l.b16 %v364
    %v413 = vunpack.c.l.b16 %v365
    %v414 = vunpack.c.l.b16 %v366
    %v415 = vunpack.c.l.b16 %v367
    %v416 = vunpack.c.l.b16 %v368
    %v417 = vunpack.c.l.b16 %v369
    %v418 = vunpack.c.l.b16 %v370
    %v419 = vunpack.c.l.b16 %v371
    %v420 = vpack.c.b16 %v397, %v396
    %v421 = vpack.c.b16 %v399, %v398
    %v422 = vpack.c.b16 %v401, %v400
    %v423 = vpack.c.b16 %v403, %v402
    %v424 = vpack.c.b16 %v405, %v404
    %v425 = vpack.c.b16 %v407, %v406
    %v426 = vpack.c.b16 %v409, %v408
    %v427 = vpack.c.b16 %v411, %v410
    %v428 = vpack.c.b16 %v413, %v412
    %v429 = vpack.c.b16 %v415, %v414
    %v430 = vpack.c.b16 %v417, %v416
    %v431 = vpack.c.b16 %v419, %v418
    %v445 = vsel %vm174, %v347, 0
    %447 = vmatprep.subr.bf16.mxu0 0
    %448 = vmatpush1.bf16.msra.mxu0 %v420
    %449 = vmatprep.subr.bf16.mxu0 0
    %450 = vmatpush1.bf16.msra.mxu0 %v421
    %451 = vmatprep.subr.bf16.mxu0 0
    %452 = vmatpush1.bf16.msra.mxu0 %v422
    %453 = vmatprep.subr.bf16.mxu0 0
    %454 = vmatpush1.bf16.msra.mxu0 %v423
    %455 = vmatprep.subr.bf16.mxu0 0
    %456 = vmatpush1.bf16.msra.mxu0 %v424
    %457 = vmatprep.subr.bf16.mxu0 0
    %458 = vmatpush1.bf16.msra.mxu0 %v425
    %459 = vmatprep.subr.bf16.mxu0 0
    %460 = vmatpush1.bf16.msra.mxu0 %v426
    %461 = vmatprep.subr.bf16.mxu0 0
    %462 = vmatpush1.bf16.msra.mxu0 %v427
    %463 = vmatprep.subr.bf16.mxu0 0
    %464 = vmatpush1.bf16.msra.mxu0 %v428
    %465 = vmatprep.subr.bf16.mxu0 0
    %466 = vmatpush1.bf16.msra.mxu0 %v429
    %467 = vmatprep.subr.bf16.mxu0 0
    %468 = vmatpush1.bf16.msra.mxu0 %v430
    %469 = vmatprep.subr.bf16.mxu0 0
    %470 = vmatpush1.bf16.msra.mxu0 %v431
    %471 = vmatprep.subr.bf16.mxu0 0
    %472 = vmatpush1.bf16.msra.mxu0 0
    %473 = vmatprep.subr.bf16.mxu0 0
    %474 = vmatpush1.bf16.msra.mxu0 0
    %475 = vmatprep.subr.bf16.mxu0 0
    %476 = vmatpush1.bf16.msra.mxu0 0
    %477 = vmatprep.subr.bf16.mxu0 0
    %478 = vmatpush1.bf16.msra.mxu0 0
    %479 = vmatprep.mubr.bf16.mxu0 %v445
    %480 = vmatmul.mubr.bf16.gmra.mrb[0].mxu0 %v346
    %v481 = vpop.f32.mrb[0].mxu0
    %v482 = vadd.f32 0.0, %v481
    %v483 = vpop.f32.mrb[0].mxu0
    %v484 = vpop.f32.mrb[0].mxu0
    %v485 = vadd.f32 0.0, %v484
    %v486 = vpop.f32.mrb[0].mxu0
    %487 = vdwg.mxu0
    %v488 = vadd.f32 %v344, %v482
    %v489 = vadd.f32 %v345, %v485
    %490 = vst.msk [vmem:[#allocation3] sm:$0xff] %vm174, %v488
    %491 = vst.msk [vmem:[#allocation3 + $0x8] sm:$0xff] %vm174, %v489
    // Predicated region
    $region46: #{_lambda_.12} parent=1 // pred_check
      %p492 = pneg %p88
    $region47: #{_lambda_.12} parent=1 // pred_check_branch
      %494 = sbr.rel (%p492) target = $region49
    $region48: #{_lambda_.12} parent=1 // pred_region
      %v495 = vld [vmem:[#allocation3] sm:$0xff]
      %v496 = vld [vmem:[#allocation3 + $0x8] sm:$0xff]
      %497 = vst.msk [vmem:[#allocation13] sm:$0xff] %vm174, %v495
      %498 = vst.msk [vmem:[#allocation13 + $0x8] sm:$0xff] %vm174, %v496
    $region49: #{_lambda_.12} parent=1 // pred_fallthru
      _
    // Predicated region
    $region50: #{_lambda_.12} parent=1 // pred_check
      _
    $region51: #{_lambda_.12} parent=1 // pred_check_branch
      %500 = sbr.rel (0) target = $region53
    $region52: #{_lambda_.12} parent=1 // pred_region
      %s502 = ssub.s32 256, 256
      %503 = vsyncadd [#allocation6], %s502
      %s504 = sshll.u32 [#allocation13], 4
      %s505 = int_to_ptr.vmem [resolvable:$true] %s504
      %510 = dma.vmem_to_hbm [thread:$0]  %s505, 256, %s5, [#allocation6], 128, 128, 8
    $region53: #{_lambda_.12} parent=1 // pred_fallthru
      _
    // Predicated region
    $region54: #{_lambda_.12} parent=1 // pred_check
      _
    $region55: #{_lambda_.12} parent=1 // pred_check_branch
      %512 = sbr.rel (0) target = $region57
    $region56: #{_lambda_.12} parent=1 // pred_region
      %513 = dma.done [#allocation6], 256
    $region57: #{_lambda_.12} parent=1 // pred_fallthru
      _
    %514 = vsyncpa [#allocation5], 1
    %515 = vsyncpa [#allocation8], 1
    %516 = vsyncpa [#allocation11], 1
    %517 = vsyncpa [#allocation6], 1

// kernel: _lambda_.17
$region0: #{_lambda_.17}
  #allocation0 [shape = 'u32[]', space=smem, size = 0x4, offset = 0x4, fixed_abs, tag = 'smem constant byte address 0x4 - core index']
  #allocation1 [shape = 'u32[144,128]{1,0:T(1,128)}', space=vmem, size = 0x12000, scoped, tag = 'internal scratch']
  %s0 = inlined_call_operand.hbm [shape: f32[16,64], index: 0, kind: input, shape index: {}]
  %s1 = inlined_call_operand.hbm [shape: f32[1,64], index: 1, kind: input, shape index: {}]
  %s2 = inlined_call_operand.hbm [shape: bf16[64,256], index: 2, kind: input, shape index: {}]
  %s3 = inlined_call_operand.hbm [shape: f32[16,256], index: 3, kind: output, shape index: {}]
  %s4 = sld [smem:[#allocation0]]
  $region34: #{_lambda_.17} parent=0
    _
  %s6 = ssub.s32 1, %s4
  %s7 = scalar_select 0, %s6, %s4
  $region1: #{_lambda_.17} parent=0
    #allocation2 [shape = 'u8[8192]{0}', space=vmem, size = 0x2000, scoped, tag = 'input window, operand 0, single buffered']
    #allocation3 [shape = 's32[1]{0}', space=sflag, size = 0x4, scoped, tag = 'scoped memory for _lambda_.17']
    #allocation4 [shape = 's32[1]{0}', space=sflag, size = 0x4, scoped, tag = 'scoped memory for _lambda_.17']
    #allocation5 [shape = 'u8[512]{0}', space=vmem, size = 0x400, scoped, tag = 'input window, operand 1, single buffered']
    #allocation6 [shape = 's32[1]{0}', space=sflag, size = 0x4, scoped, tag = 'scoped memory for _lambda_.17']
    #allocation7 [shape = 'u8[32768]{0}', space=vmem, size = 0x8000, scoped, tag = 'input window, operand 2, single buffered']
    #allocation8 [shape = 'u8[16384]{0}', space=vmem, size = 0x4000, scoped, tag = 'output window, operand 0, single buffered']
    %8 = vsyncpa [#allocation3], 0
    %9 = vsyncpa [#allocation6], 0
    %10 = vsyncpa [#allocation4], 0
    // Predicated region
    $region2: #{_lambda_.17} parent=1 // pred_check
      _
    $region3: #{_lambda_.17} parent=1 // pred_check_branch
      %12 = sbr.rel (0) target = $region5
    $region4: #{_lambda_.17} parent=1 // pred_region
      %s14 = ssub.s32 256, 256
      %15 = vsyncadd [#allocation3], %s14
      %s16 = sshll.u32 [#allocation2], 4
      %s17 = int_to_ptr.vmem [resolvable:$true] %s16
      %22 = dma.hbm_to_vmem [thread:$0]  %s0, 256, %s17, [#allocation3], 128, 128, 8
    $region5: #{_lambda_.17} parent=1 // pred_fallthru
      _
    // Predicated region
    $region6: #{_lambda_.17} parent=1 // pred_check
      _
    $region7: #{_lambda_.17} parent=1 // pred_check_branch
      %24 = sbr.rel (0) target = $region9
    $region8: #{_lambda_.17} parent=1 // pred_region
      %s26 = ssub.s32 16, 16
      %27 = vsyncadd [#allocation6], %s26
      %s29 = sshll.u32 [#allocation5], 4
      %s30 = int_to_ptr.vmem [resolvable:$true] %s29
      %32 = dma.hbm_to_vmem [thread:$0]  %s1, 16, %s30, [#allocation6]
    $region9: #{_lambda_.17} parent=1 // pred_fallthru
      _
    // Predicated region
    $region10: #{_lambda_.17} parent=1 // pred_check
      _
    $region11: #{_lambda_.17} parent=1 // pred_check_branch
      %34 = sbr.rel (0) target = $region13
    $region12: #{_lambda_.17} parent=1 // pred_region
      %s36 = ssub.s32 1024, 1024
      %37 = vsyncadd [#allocation6], %s36
      %s38 = sshll.u32 [#allocation7], 4
      %s39 = int_to_ptr.vmem [resolvable:$true] %s38
      %44 = dma.hbm_to_vmem [thread:$0]  %s2, 1024, %s39, [#allocation6], 128, 128, 8
    $region13: #{_lambda_.17} parent=1 // pred_fallthru
      _
    // Predicated region
    $region14: #{_lambda_.17} parent=1 // pred_check
      _
    $region15: #{_lambda_.17} parent=1 // pred_check_branch
      %46 = sbr.rel (0) target = $region17
    $region16: #{_lambda_.17} parent=1 // pred_region
      %47 = dma.done [#allocation3], 256
    $region17: #{_lambda_.17} parent=1 // pred_fallthru
      _
    // Predicated region
    $region18: #{_lambda_.17} parent=1 // pred_check
      _
    $region19: #{_lambda_.17} parent=1 // pred_check_branch
      %49 = sbr.rel (0) target = $region21
    $region20: #{_lambda_.17} parent=1 // pred_region
      %50 = dma.done [#allocation6], 16
    $region21: #{_lambda_.17} parent=1 // pred_fallthru
      _
    // Predicated region
    $region22: #{_lambda_.17} parent=1 // pred_check
      _
    $region23: #{_lambda_.17} parent=1 // pred_check_branch
      %52 = sbr.rel (0) target = $region25
    $region24: #{_lambda_.17} parent=1 // pred_region
      %53 = dma.done [#allocation6], 1024
    $region25: #{_lambda_.17} parent=1 // pred_fallthru
      _
    %v55 = vld [vmem:[#allocation2] sm:$0xff]
    %v56 = vld [vmem:[#allocation2 + $0x8] sm:$0xff]
    %v57 = vmul.f32 %v55, %v55
    %v58 = vmul.f32 %v56, %v56
    %vm59 = vcmask 523264
    %v60 = vsel %vm59, %v57, 0.0
    %61 = vadd.xlane.f32.xlu0 %v60
    %v62 = vpop.xlane.xlu0 %61
    %v63 = vsel %vm59, %v58, 0.0
    %64 = vadd.xlane.f32.xlu0 %v63
    %v65 = vpop.xlane.xlu0 %64
    %v66 = vrcp.pop 64.0
    %v67 = vmul.f32 %v62, %v66
    %v68 = vmul.f32 %v65, %v66
    %v69 = vadd.f32 %v67, 1e-05
    %v70 = vadd.f32 %v68, 1e-05
    %v71 = vrsqrt.pop %v69
    %v72 = vrsqrt.pop %v70
    %v73 = vmul.f32 %v55, %v71
    %v74 = vmul.f32 %v56, %v72
    %v75 = vld [vmem:[#allocation5] sm:$0x1]
    %v77 = vlaneseq
    %v78 = vshrl.u32 %v77, 7
    %v79 = vsub.s32 0, %v78
    %v80 = vrot.slane %v75, %v79
    %v82 = vmul.f32 %v73, %v80
    %v83 = vmul.f32 %v74, %v80
    %v84 = vpack.c.bf16 %v83, %v82
    %v85 = vld [vmem:[#allocation7] sm:$0xff]
    %v86 = vld [vmem:[#allocation7 + $0x8] sm:$0xff]
    %v87 = vld [vmem:[#allocation7 + $0x10] sm:$0xff]
    %v88 = vld [vmem:[#allocation7 + $0x18] sm:$0xff]
    %v89 = vld [vmem:[#allocation7 + $0x20] sm:$0xff]
    %v90 = vld [vmem:[#allocation7 + $0x28] sm:$0xff]
    %v91 = vld [vmem:[#allocation7 + $0x30] sm:$0xff]
    %v92 = vld [vmem:[#allocation7 + $0x38] sm:$0xff]
    %v101 = vunpack.c.l.b16 %v85
    %v102 = vunpack.c.h.b16 %v85
    %v103 = vunpack.c.l.b16 %v86
    %v104 = vunpack.c.h.b16 %v86
    %v105 = vunpack.c.l.b16 %v87
    %v106 = vunpack.c.h.b16 %v87
    %v107 = vunpack.c.l.b16 %v88
    %v108 = vunpack.c.h.b16 %v88
    %v109 = vunpack.c.l.b16 %v89
    %v110 = vunpack.c.h.b16 %v89
    %v111 = vunpack.c.l.b16 %v90
    %v112 = vunpack.c.h.b16 %v90
    %v113 = vunpack.c.l.b16 %v91
    %v114 = vunpack.c.h.b16 %v91
    %v115 = vunpack.c.l.b16 %v92
    %v116 = vunpack.c.h.b16 %v92
    %v117 = vpack.c.b16 %v103, %v101
    %v118 = vpack.c.b16 %v104, %v102
    %v119 = vpack.c.b16 %v107, %v105
    %v120 = vpack.c.b16 %v108, %v106
    %v121 = vpack.c.b16 %v111, %v109
    %v122 = vpack.c.b16 %v112, %v110
    %v123 = vpack.c.b16 %v115, %v113
    %v124 = vpack.c.b16 %v116, %v114
    %v134 = vsel %vm59, %v84, 0
    %136 = vmatprep.subr.bf16.mxu0 %v118
    %137 = vmatpush1.bf16.msra.mxu0 %v117
    %138 = vmatprep.subr.bf16.mxu0 %v120
    %139 = vmatpush1.bf16.msra.mxu0 %v119
    %140 = vmatprep.subr.bf16.mxu0 %v122
    %141 = vmatpush1.bf16.msra.mxu0 %v121
    %142 = vmatprep.subr.bf16.mxu0 %v124
    %143 = vmatpush1.bf16.msra.mxu0 %v123
    %144 = vmatprep.subr.bf16.mxu0 0
    %145 = vmatpush1.bf16.msra.mxu0 0
    %146 = vmatprep.subr.bf16.mxu0 0
    %147 = vmatpush1.bf16.msra.mxu0 0
    %148 = vmatprep.subr.bf16.mxu0 0
    %149 = vmatpush1.bf16.msra.mxu0 0
    %150 = vmatprep.subr.bf16.mxu0 0
    %151 = vmatpush1.bf16.msra.mxu0 0
    %152 = vmatprep.subr.bf16.mxu0 0
    %153 = vmatpush1.bf16.msra.mxu0 0
    %154 = vmatprep.subr.bf16.mxu0 0
    %155 = vmatpush1.bf16.msra.mxu0 0
    %156 = vmatprep.subr.bf16.mxu0 0
    %157 = vmatpush1.bf16.msra.mxu0 0
    %158 = vmatprep.subr.bf16.mxu0 0
    %159 = vmatpush1.bf16.msra.mxu0 0
    %160 = vmatprep.subr.bf16.mxu0 0
    %161 = vmatpush1.bf16.msra.mxu0 0
    %162 = vmatprep.subr.bf16.mxu0 0
    %163 = vmatpush1.bf16.msra.mxu0 0
    %164 = vmatprep.subr.bf16.mxu0 0
    %165 = vmatpush1.bf16.msra.mxu0 0
    %166 = vmatprep.subr.bf16.mxu0 0
    %167 = vmatpush1.bf16.msra.mxu0 0
    %168 = vmatprep.mubr.bf16.mxu0 0
    %169 = vmatmul.mubr.bf16.gmra.mrb[0].mxu0 %v134
    %v170 = vpop.f32.mrb[0].mxu0
    %v171 = vadd.f32 0.0, %v170
    %v172 = vpop.f32.mrb[0].mxu0
    %v173 = vadd.f32 0.0, %v172
    %v174 = vpop.f32.mrb[0].mxu0
    %v175 = vadd.f32 0.0, %v174
    %v176 = vpop.f32.mrb[0].mxu0
    %v177 = vadd.f32 0.0, %v176
    %178 = vdwg.mxu0
    %179 = vst [vmem:[#allocation8] sm:$0xff] %v171
    %180 = vst [vmem:[#allocation8 + $0x8] sm:$0xff] %v173
    %181 = vst [vmem:[#allocation8 + $0x10] sm:$0xff] %v175
    %182 = vst [vmem:[#allocation8 + $0x18] sm:$0xff] %v177
    // Predicated region
    $region26: #{_lambda_.17} parent=1 // pred_check
      _
    $region27: #{_lambda_.17} parent=1 // pred_check_branch
      %184 = sbr.rel (0) target = $region29
    $region28: #{_lambda_.17} parent=1 // pred_region
      %s186 = ssub.s32 512, 512
      %187 = vsyncadd [#allocation4], %s186
      %s188 = sshll.u32 [#allocation8], 4
      %s189 = int_to_ptr.vmem [resolvable:$true] %s188
      %194 = dma.vmem_to_hbm [thread:$0]  %s189, 512, %s3, [#allocation4], 256, 256, 16
    $region29: #{_lambda_.17} parent=1 // pred_fallthru
      _
    // Predicated region
    $region30: #{_lambda_.17} parent=1 // pred_check
      _
    $region31: #{_lambda_.17} parent=1 // pred_check_branch
      %196 = sbr.rel (0) target = $region33
    $region32: #{_lambda_.17} parent=1 // pred_region
      %197 = dma.done [#allocation4], 512
    $region33: #{_lambda_.17} parent=1 // pred_fallthru
      _
    %198 = vsyncpa [#allocation3], 1
    %199 = vsyncpa [#allocation6], 1
    %200 = vsyncpa [#allocation4], 1

</llo_original>
